<compile_context>
chip_gen: v7x
topology: tpu7x:2x2x1
jax: 0.10.0
libtpu: 0.0.40
codegen_flags: <defaults>
</compile_context>

<pallas_src>
import math

import jax
import jax.numpy as jnp
from jax.experimental import pallas as pl
from jax.experimental.pallas import tpu as pltpu

VOCAB = 100
MAX_POS = 16
HIDDEN = 32
N_HEADS = 4
D_HEAD = HIDDEN // N_HEADS
FFN = 64
N_LAYERS = 2
NUM_LABELS = 5
CLF_PAD = 128            # lane-dense classifier output width; sliced outside the kernel
LN_EPS = 1e-12
MASK_NEG = -1e9

POS_OFF = ((VOCAB + 7) // 8) * 8        # position rows start 8-aligned in the table
EMB_ROWS = POS_OFF + MAX_POS            # 104 + 16 = 120
W_IN_COLS = 3 * HIDDEN + HIDDEN + FFN   # [Q|K|V|Wo|W1] = 192


# ----------------------------- kernel helpers -----------------------------

def _layer_norm(v, g, b, eps=LN_EPS):
    mu = jnp.mean(v, axis=-1, keepdims=True)
    var = jnp.mean(jnp.square(v - mu), axis=-1, keepdims=True)
    return (v - mu) * jax.lax.rsqrt(var + eps) * g + b


def _gelu(x):
    # TODO(synk): HF DistilBERT uses exact erf-GELU; tanh approximation used here
    # (erf has no clean Mosaic lowering; numerics differ only slightly).
    return jax.nn.gelu(x, approximate=True)


def _split_heads(x2, batch, seq):
    """(B*S, H) -> (N_HEADS*B, S, D_HEAD); leading index n = head*B + b."""
    parts = [x2[:, hd * D_HEAD:(hd + 1) * D_HEAD] for hd in range(N_HEADS)]
    return jnp.concatenate(parts, axis=0).reshape(N_HEADS * batch, seq, D_HEAD)


def _encoder_layer(h2, mask_bias, batch, seq, w_all, w2, vw_l, vh_l):
    """One DistilBERT TransformerBlock on 2-D activations h2: (B*S, H).

    w_all : (H, 3H+H+FFN) bf16  = [Q*scale | K | V | Wo | W1]
    w2    : (FFN, H)       bf16
    vw_l  : (2, 3H) f32  rows = [b_qkv, b1 (padded)]
    vh_l  : (6, H)  f32  rows = [bo, ln1_g, ln1_b, b2, ln2_g, ln2_b]
    """
    bs, hidden = h2.shape
    h3 = 3 * hidden

    b_qkv = vw_l[0:1, :]
    b1 = vw_l[1:2, 0:FFN]
    bo = vh_l[0:1, :]
    ln1_g = vh_l[1:2, :]
    ln1_b = vh_l[2:3, :]
    b2 = vh_l[3:4, :]
    ln2_g = vh_l[4:5, :]
    ln2_b = vh_l[5:6, :]

    w_qkv = w_all[:, 0:h3]                         # (H, 3H)
    wo = w_all[:, h3:h3 + hidden]                  # (H, H)
    w1 = w_all[:, h3 + hidden:h3 + hidden + FFN]   # (H, FFN)

    # Fused Q|K|V projection: one bf16 MXU push, f32 accumulation.
    # 1/sqrt(d_head) is pre-folded into the Q columns/bias at init time.
    qkv = jnp.dot(h2.astype(jnp.bfloat16), w_qkv,
                  preferred_element_type=jnp.float32) + b_qkv          # (B*S, 3H)

    # Head-major relayout, then ONE batched einsum pair + ONE softmax for all
    # heads (single batch dim n = head*B lowers fine in Mosaic).
    qf = _split_heads(qkv[:, 0:hidden], batch, seq)
    kf = _split_heads(qkv[:, hidden:2 * hidden], batch, seq)
    vf = _split_heads(qkv[:, 2 * hidden:3 * hidden], batch, seq)

    sc = jnp.einsum('nqd,nkd->nqk',
                    qf.astype(jnp.bfloat16), kf.astype(jnp.bfloat16),
                    preferred_element_type=jnp.float32)                # (NH*B, S, S)
    sc = sc + mask_bias
    sc = sc - jnp.max(sc, axis=-1, keepdims=True)
    p = jnp.exp(sc)
    p = p * pl.reciprocal(jnp.sum(p, axis=-1, keepdims=True), approx=True)
    ctx = jnp.einsum('nqk,nkd->nqd',
                     p.astype(jnp.bfloat16), vf.astype(jnp.bfloat16),
                     preferred_element_type=jnp.float32)               # (NH*B, S, DH)

    # Output projection accumulated per head (no head concat / lane relayout).
    def ctx_head(hd):
        return ctx[hd * batch:(hd + 1) * batch].reshape(bs, D_HEAD).astype(jnp.bfloat16)

    attn = jnp.dot(ctx_head(0), wo[0:D_HEAD, :], preferred_element_type=jnp.float32)
    for hd in range(1, N_HEADS):
        attn = attn + jnp.dot(ctx_head(hd), wo[hd * D_HEAD:(hd + 1) * D_HEAD, :],
                              preferred_element_type=jnp.float32)
    attn = attn + bo

    sa = _layer_norm(h2 + attn, ln1_g, ln1_b)

    ff = _gelu(jnp.dot(sa.astype(jnp.bfloat16), w1,
                       preferred_element_type=jnp.float32) + b1)
    ff = jnp.dot(ff.astype(jnp.bfloat16), w2,
                 preferred_element_type=jnp.float32) + b2
    return _layer_norm(sa + ff, ln2_g, ln2_b)


# ----------------------------- fused kernel --------------------------------

def _make_fused_kernel(batch, seq):
    bs = batch * seq

    def kernel(ids_ref, mask_ref, emb_ref, w_in_ref, w_out_ref,
               vw_ref, vh_ref, clf_ref, out_ref):
        vh = vh_ref[...]            # (2 + 6L, H)
        vw = vw_ref[...]            # (2L, 3H)
        emb = emb_ref[...]          # (EMB_ROWS, H)

        # --- embeddings: in-kernel gather via one-hot matmul (fine for the
        #     tiny synthetic vocab), broadcast position add, embedding LN.
        #     Activations stay (B*S, H) (lane-dense) throughout. ---
        # TODO(synk): one-hot gather scales linearly with vocab; switch to
        # SMEM-indexed row reads / DMA gather for a real-sized vocabulary.
        ids = ids_ref[...]                                            # (B*S, 1) int32
        rows_iota = jax.lax.broadcasted_iota(jnp.int32, (bs, EMB_ROWS), 1)
        onehot = (rows_iota == ids).astype(jnp.float32)               # (B*S, EMB_ROWS)
        we = jnp.dot(onehot, emb, preferred_element_type=jnp.float32)  # (B*S, H)
        pos = emb[POS_OFF:POS_OFF + seq, :]                           # (S, H)
        h2 = (we.reshape(batch, seq, HIDDEN) + pos[None, :, :]).reshape(bs, HIDDEN)
        h2 = _layer_norm(h2, vh[0:1, :], vh[1:2, :])

        # --- additive attention-mask bias, computed ONCE for all layers/heads,
        #     laid out for the flattened (head*B) attention batch. ---
        mask_bias = jnp.where(mask_ref[...] == 0, MASK_NEG, 0.0)      # (B, S) f32
        mask_bias = jnp.broadcast_to(
            mask_bias[None, :, None, :], (N_HEADS, batch, 1, seq)
        ).reshape(N_HEADS * batch, 1, seq)

        # --- transformer layers (N_LAYERS is static: fully unrolled) ---
        for li in range(N_LAYERS):
            h2 = _encoder_layer(
                h2, mask_bias, batch, seq,
                w_in_ref[li], w_out_ref[li],
                vw[2 * li:2 * li + 2, :],
                vh[2 + 6 * li:2 + 6 * li + 6, :])

        # --- CLS token -> classifier (Dropout(0.3) is identity at inference).
        #     Output padded to 128 lanes for an unmasked, lane-dense store. ---
        cls = h2.reshape(batch, seq, HIDDEN)[:, 0:1, :].reshape(batch, HIDDEN)
        clf = clf_ref[...]                                            # (H+1, CLF_PAD)
        out_ref[...] = (jnp.dot(cls, clf[0:HIDDEN, :],
                                preferred_element_type=jnp.float32)
                        + clf[HIDDEN:HIDDEN + 1, :])

    return kernel


# ------------------------------ parameters ---------------------------------

def init_params(key):
    keys = iter(jax.random.split(key, 64))

    def dense(fan_in, fan_out):
        return 0.02 * jax.random.normal(next(keys), (fan_in, fan_out), jnp.float32)

    scale = 1.0 / math.sqrt(D_HEAD)

    # Embedding table: word rows [0:VOCAB], zero pad, position rows at POS_OFF.
    word_emb = 0.02 * jax.random.normal(next(keys), (VOCAB, HIDDEN), jnp.float32)
    pos_emb = 0.02 * jax.random.normal(next(keys), (MAX_POS, HIDDEN), jnp.float32)
    emb_table = (jnp.zeros((EMB_ROWS, HIDDEN), jnp.float32)
                 .at[0:VOCAB].set(word_emb)
                 .at[POS_OFF:POS_OFF + MAX_POS].set(pos_emb))

    w_in_layers, w_out_layers, vw_rows = [], [], []
    vh_rows = [jnp.ones((HIDDEN,), jnp.float32),      # embedding LN gamma
               jnp.zeros((HIDDEN,), jnp.float32)]     # embedding LN beta

    for _ in range(N_LAYERS):
        wq, wk, wv = dense(HIDDEN, HIDDEN), dense(HIDDEN, HIDDEN), dense(HIDDEN, HIDDEN)
        bq = jnp.zeros((HIDDEN,), jnp.float32)
        bk = jnp.zeros((HIDDEN,), jnp.float32)
        bv = jnp.zeros((HIDDEN,), jnp.float32)
        wo, bo = dense(HIDDEN, HIDDEN), jnp.zeros((HIDDEN,), jnp.float32)
        w1, b1 = dense(HIDDEN, FFN), jnp.zeros((FFN,), jnp.float32)
        w2, b2 = dense(FFN, HIDDEN), jnp.zeros((HIDDEN,), jnp.float32)
        ln1_g, ln1_b = jnp.ones((HIDDEN,), jnp.float32), jnp.zeros((HIDDEN,), jnp.float32)
        ln2_g, ln2_b = jnp.ones((HIDDEN,), jnp.float32), jnp.zeros((HIDDEN,), jnp.float32)

        # [Q*scale | K | V | Wo | W1] along the output axis (all share input dim H);
        # 1/sqrt(d_head) folded into the Q half once at init.
        w_in_layers.append(jnp.concatenate([wq * scale, wk, wv, wo, w1], axis=1))
        w_out_layers.append(w2)

        b_qkv = jnp.concatenate([bq * scale, bk, bv], axis=0)             # (3H,)
        b1_pad = jnp.zeros((3 * HIDDEN,), jnp.float32).at[:FFN].set(b1)   # (3H,)
        vw_rows += [b_qkv, b1_pad]
        vh_rows += [bo, ln1_g, ln1_b, b2, ln2_g, ln2_b]

    clf_w = dense(HIDDEN, NUM_LABELS)
    clf_b = jnp.zeros((NUM_LABELS,), jnp.float32)
    clf = (jnp.zeros((HIDDEN + 1, CLF_PAD), jnp.float32)
           .at[0:HIDDEN, 0:NUM_LABELS].set(clf_w)
           .at[HIDDEN, 0:NUM_LABELS].set(clf_b))

    return {
        'emb_table': emb_table,                                    # (120, H) f32
        'w_in': jnp.stack(w_in_layers).astype(jnp.bfloat16),       # (L, H, 192) bf16
        'w_out': jnp.stack(w_out_layers).astype(jnp.bfloat16),     # (L, FFN, H) bf16
        'vec_wide': jnp.stack(vw_rows),                            # (2L, 3H) f32
        'vec_h': jnp.stack(vh_rows),                               # (2+6L, H) f32
        'clf': clf,                                                # (H+1, 128) f32
    }


# ------------------------------ forward pass --------------------------------

@jax.jit
def bert_for_multilabel_forward(params, input_ids, attention_mask):
    batch, seq = input_ids.shape
    assert seq <= MAX_POS, "sequence length exceeds learned position embeddings"

    args = (
        input_ids.reshape(batch * seq, 1).astype(jnp.int32),
        attention_mask.astype(jnp.int32),
        params['emb_table'], params['w_in'], params['w_out'],
        params['vec_wide'], params['vec_h'], params['clf'],
    )

    # Single fused, grid-free kernel launch: 8 whole-array VMEM inputs
    # (~50 KiB resident, fine on v5e/v6e and v7x's 64 MiB VMEM).
    logits_pad = pl.pallas_call(
        _make_fused_kernel(batch, seq),
        out_shape=jax.ShapeDtypeStruct((batch, CLF_PAD), jnp.float32),
        in_specs=[pl.BlockSpec(memory_space=pltpu.MemorySpace.VMEM)] * len(args),
        out_specs=pl.BlockSpec(memory_space=pltpu.MemorySpace.VMEM),
    )(*args)
    return logits_pad[:, :NUM_LABELS]


# ---------------------------------- main ------------------------------------

if __name__ == "__main__":
    key = jax.random.PRNGKey(0)
    k_param, k_ids = jax.random.split(key)

    params = init_params(k_param)

    B, S = 2, 8
    input_ids = jax.random.randint(k_ids, (B, S), 0, VOCAB, dtype=jnp.int32)
    attention_mask = jnp.ones((B, S), jnp.int32).at[1, 6:].set(0)  # pad tail of row 1

    logits = bert_for_multilabel_forward(params, input_ids, attention_mask)
    logits = jax.block_until_ready(logits)
    assert logits.shape == (B, NUM_LABELS) and logits.dtype == jnp.float32
    assert bool(jnp.all(jnp.isfinite(logits)))
    print("KERNEL_OK")
</pallas_src>

<mosaic_0001>
module attributes {stable_mosaic.version = 11 : i64} {
  func.func @kernel(%arg0: memref<16x1xi32, #tpu.memory_space<vmem>>, %arg1: memref<2x8xi32, #tpu.memory_space<vmem>>, %arg2: memref<120x32xf32, #tpu.memory_space<vmem>>, %arg3: memref<2x32x192xbf16, #tpu.memory_space<vmem>>, %arg4: memref<2x64x32xbf16, #tpu.memory_space<vmem>>, %arg5: memref<4x96xf32, #tpu.memory_space<vmem>>, %arg6: memref<14x32xf32, #tpu.memory_space<vmem>>, %arg7: memref<33x128xf32, #tpu.memory_space<vmem>>, %arg8: memref<2x128xf32, #tpu.memory_space<vmem>>) attributes {dimension_semantics = [], scalar_prefetch = 0 : i64, scratch_operands = 0 : i64, tpu.core_type = #tpu.core_type<tc>} {
    %c0 = arith.constant 0 : index
    %c0_0 = arith.constant 0 : index
    %0 = vector.load %arg6[%c0, %c0_0] : memref<14x32xf32, #tpu.memory_space<vmem>>, vector<14x32xf32>
    %c0_1 = arith.constant 0 : index
    %c0_2 = arith.constant 0 : index
    %1 = vector.load %arg5[%c0_1, %c0_2] : memref<4x96xf32, #tpu.memory_space<vmem>>, vector<4x96xf32>
    %c0_3 = arith.constant 0 : index
    %c0_4 = arith.constant 0 : index
    %2 = vector.load %arg2[%c0_3, %c0_4] : memref<120x32xf32, #tpu.memory_space<vmem>>, vector<120x32xf32>
    %c0_5 = arith.constant 0 : index
    %c0_6 = arith.constant 0 : index
    %3 = vector.load %arg0[%c0_5, %c0_6] : memref<16x1xi32, #tpu.memory_space<vmem>>, vector<16x1xi32>
    %4 = tpu.iota {dimensions = array<i32: 1>} : vector<16x120xi32>
    %5 = vector.broadcast %3 : vector<16x1xi32> to vector<16x120xi32>
    %6 = arith.cmpi eq, %4, %5 : vector<16x120xi32>
    %7 = arith.extui %6 : vector<16x120xi1> to vector<16x120xi32>
    %8 = arith.sitofp %7 : vector<16x120xi32> to vector<16x120xf32>
    %cst = arith.constant dense<0.000000e+00> : vector<16x32xf32>
    %9 = tpu.matmul %8, %2, %cst {dimension_numbers = #tpu.dot_dimension_numbers<[1], [0], [0], [1], [0, 0, 1, 1], [], []>} : vector<16x120xf32>, vector<120x32xf32>, vector<16x32xf32> -> vector<16x32xf32>
    %10 = vector.extract_strided_slice %2 {offsets = [104, 0], sizes = [8, 32], strides = [1, 1]} : vector<120x32xf32> to vector<8x32xf32>
    %11 = vector.shape_cast %9 : vector<16x32xf32> to vector<2x8x32xf32>
    %12 = vector.shape_cast %10 : vector<8x32xf32> to vector<1x8x32xf32>
    %13 = vector.broadcast %12 : vector<1x8x32xf32> to vector<2x8x32xf32>
    %14 = arith.addf %11, %13 : vector<2x8x32xf32>
    %15 = vector.shape_cast %14 : vector<2x8x32xf32> to vector<16x32xf32>
    %16 = vector.extract_strided_slice %0 {offsets = [0, 0], sizes = [1, 32], strides = [1, 1]} : vector<14x32xf32> to vector<1x32xf32>
    %17 = vector.extract_strided_slice %0 {offsets = [1, 0], sizes = [1, 32], strides = [1, 1]} : vector<14x32xf32> to vector<1x32xf32>
    %cst_7 = arith.constant dense<0.000000e+00> : vector<16xf32>
    %18 = vector.multi_reduction <add>, %15, %cst_7 [1] : vector<16x32xf32> to vector<16xf32>
    %19 = vector.shape_cast %18 : vector<16xf32> to vector<16x1xf32>
    %cst_8 = arith.constant 3.200000e+01 : f32
    %20 = vector.broadcast %cst_8 : f32 to vector<16x1xf32>
    %21 = arith.divf %19, %20 : vector<16x1xf32>
    %22 = vector.broadcast %21 : vector<16x1xf32> to vector<16x32xf32>
    %23 = arith.subf %15, %22 : vector<16x32xf32>
    %24 = arith.mulf %23, %23 : vector<16x32xf32>
    %cst_9 = arith.constant dense<0.000000e+00> : vector<16xf32>
    %25 = vector.multi_reduction <add>, %24, %cst_9 [1] : vector<16x32xf32> to vector<16xf32>
    %26 = vector.shape_cast %25 : vector<16xf32> to vector<16x1xf32>
    %cst_10 = arith.constant 3.200000e+01 : f32
    %27 = vector.broadcast %cst_10 : f32 to vector<16x1xf32>
    %28 = arith.divf %26, %27 : vector<16x1xf32>
    %29 = vector.broadcast %21 : vector<16x1xf32> to vector<16x32xf32>
    %30 = arith.subf %15, %29 : vector<16x32xf32>
    %cst_11 = arith.constant 9.99999996E-13 : f32
    %31 = vector.broadcast %cst_11 : f32 to vector<16x1xf32>
    %32 = arith.addf %28, %31 : vector<16x1xf32>
    %33 = math.rsqrt %32 : vector<16x1xf32>
    %34 = vector.broadcast %33 : vector<16x1xf32> to vector<16x32xf32>
    %35 = arith.mulf %30, %34 : vector<16x32xf32>
    %36 = vector.broadcast %16 : vector<1x32xf32> to vector<16x32xf32>
    %37 = arith.mulf %35, %36 : vector<16x32xf32>
    %38 = vector.broadcast %17 : vector<1x32xf32> to vector<16x32xf32>
    %39 = arith.addf %37, %38 : vector<16x32xf32>
    %c0_12 = arith.constant 0 : index
    %c0_13 = arith.constant 0 : index
    %40 = vector.load %arg1[%c0_12, %c0_13] : memref<2x8xi32, #tpu.memory_space<vmem>>, vector<2x8xi32>
    %c0_i32 = arith.constant 0 : i32
    %41 = vector.broadcast %c0_i32 : i32 to vector<2x8xi32>
    %42 = arith.cmpi eq, %40, %41 : vector<2x8xi32>
    %cst_14 = arith.constant -1.000000e+09 : f32
    %cst_15 = arith.constant 0.000000e+00 : f32
    %43 = vector.broadcast %cst_14 : f32 to vector<2x8xf32>
    %44 = vector.broadcast %cst_15 : f32 to vector<2x8xf32>
    %45 = arith.select %42, %43, %44 : vector<2x8xi1>, vector<2x8xf32>
    %46 = vector.shape_cast %45 : vector<2x8xf32> to vector<1x2x1x8xf32>
    %47 = vector.shape_cast %46 : vector<1x2x1x8xf32> to vector<1x2x1x8xf32>
    %48 = vector.broadcast %47 : vector<1x2x1x8xf32> to vector<4x2x1x8xf32>
    %49 = vector.shape_cast %48 : vector<4x2x1x8xf32> to vector<8x1x8xf32>
    %c0_16 = arith.constant 0 : index
    %c0_17 = arith.constant 0 : index
    %c0_18 = arith.constant 0 : index
    %50 = vector.load %arg3[%c0_16, %c0_17, %c0_18] : memref<2x32x192xbf16, #tpu.memory_space<vmem>>, vector<1x32x192xbf16>
    %51 = vector.shape_cast %50 : vector<1x32x192xbf16> to vector<32x192xbf16>
    %c0_19 = arith.constant 0 : index
    %c0_20 = arith.constant 0 : index
    %c0_21 = arith.constant 0 : index
    %52 = vector.load %arg4[%c0_19, %c0_20, %c0_21] : memref<2x64x32xbf16, #tpu.memory_space<vmem>>, vector<1x64x32xbf16>
    %53 = vector.shape_cast %52 : vector<1x64x32xbf16> to vector<64x32xbf16>
    %54 = vector.extract_strided_slice %1 {offsets = [0, 0], sizes = [2, 96], strides = [1, 1]} : vector<4x96xf32> to vector<2x96xf32>
    %55 = vector.extract_strided_slice %0 {offsets = [2, 0], sizes = [6, 32], strides = [1, 1]} : vector<14x32xf32> to vector<6x32xf32>
    %56 = vector.extract_strided_slice %54 {offsets = [0, 0], sizes = [1, 96], strides = [1, 1]} : vector<2x96xf32> to vector<1x96xf32>
    %57 = vector.extract_strided_slice %54 {offsets = [1, 0], sizes = [1, 64], strides = [1, 1]} : vector<2x96xf32> to vector<1x64xf32>
    %58 = vector.extract_strided_slice %55 {offsets = [0, 0], sizes = [1, 32], strides = [1, 1]} : vector<6x32xf32> to vector<1x32xf32>
    %59 = vector.extract_strided_slice %55 {offsets = [1, 0], sizes = [1, 32], strides = [1, 1]} : vector<6x32xf32> to vector<1x32xf32>
    %60 = vector.extract_strided_slice %55 {offsets = [2, 0], sizes = [1, 32], strides = [1, 1]} : vector<6x32xf32> to vector<1x32xf32>
    %61 = vector.extract_strided_slice %55 {offsets = [3, 0], sizes = [1, 32], strides = [1, 1]} : vector<6x32xf32> to vector<1x32xf32>
    %62 = vector.extract_strided_slice %55 {offsets = [4, 0], sizes = [1, 32], strides = [1, 1]} : vector<6x32xf32> to vector<1x32xf32>
    %63 = vector.extract_strided_slice %55 {offsets = [5, 0], sizes = [1, 32], strides = [1, 1]} : vector<6x32xf32> to vector<1x32xf32>
    %64 = vector.extract_strided_slice %51 {offsets = [0, 0], sizes = [32, 96], strides = [1, 1]} : vector<32x192xbf16> to vector<32x96xbf16>
    %65 = vector.extract_strided_slice %51 {offsets = [0, 96], sizes = [32, 32], strides = [1, 1]} : vector<32x192xbf16> to vector<32x32xbf16>
    %66 = vector.extract_strided_slice %51 {offsets = [0, 128], sizes = [32, 64], strides = [1, 1]} : vector<32x192xbf16> to vector<32x64xbf16>
    %67 = arith.truncf %39 : vector<16x32xf32> to vector<16x32xbf16>
    %cst_22 = arith.constant dense<0.000000e+00> : vector<16x96xf32>
    %68 = tpu.matmul %67, %64, %cst_22 {dimension_numbers = #tpu.dot_dimension_numbers<[1], [0], [0], [1], [0, 0, 1, 1], [], []>} : vector<16x32xbf16>, vector<32x96xbf16>, vector<16x96xf32> -> vector<16x96xf32>
    %69 = vector.broadcast %56 : vector<1x96xf32> to vector<16x96xf32>
    %70 = arith.addf %68, %69 : vector<16x96xf32>
    %71 = vector.extract_strided_slice %70 {offsets = [0, 0], sizes = [16, 32], strides = [1, 1]} : vector<16x96xf32> to vector<16x32xf32>
    %72 = vector.extract_strided_slice %71 {offsets = [0, 0], sizes = [16, 8], strides = [1, 1]} : vector<16x32xf32> to vector<16x8xf32>
    %73 = vector.extract_strided_slice %71 {offsets = [0, 8], sizes = [16, 8], strides = [1, 1]} : vector<16x32xf32> to vector<16x8xf32>
    %74 = vector.extract_strided_slice %71 {offsets = [0, 16], sizes = [16, 8], strides = [1, 1]} : vector<16x32xf32> to vector<16x8xf32>
    %75 = vector.extract_strided_slice %71 {offsets = [0, 24], sizes = [16, 8], strides = [1, 1]} : vector<16x32xf32> to vector<16x8xf32>
    %76 = tpu.concatenate %72, %73, %74, %75 in 0 : vector<16x8xf32>, vector<16x8xf32>, vector<16x8xf32>, vector<16x8xf32> -> vector<64x8xf32>
    %77 = vector.shape_cast %76 : vector<64x8xf32> to vector<8x8x8xf32>
    %78 = vector.extract_strided_slice %70 {offsets = [0, 32], sizes = [16, 32], strides = [1, 1]} : vector<16x96xf32> to vector<16x32xf32>
    %79 = vector.extract_strided_slice %78 {offsets = [0, 0], sizes = [16, 8], strides = [1, 1]} : vector<16x32xf32> to vector<16x8xf32>
    %80 = vector.extract_strided_slice %78 {offsets = [0, 8], sizes = [16, 8], strides = [1, 1]} : vector<16x32xf32> to vector<16x8xf32>
    %81 = vector.extract_strided_slice %78 {offsets = [0, 16], sizes = [16, 8], strides = [1, 1]} : vector<16x32xf32> to vector<16x8xf32>
    %82 = vector.extract_strided_slice %78 {offsets = [0, 24], sizes = [16, 8], strides = [1, 1]} : vector<16x32xf32> to vector<16x8xf32>
    %83 = tpu.concatenate %79, %80, %81, %82 in 0 : vector<16x8xf32>, vector<16x8xf32>, vector<16x8xf32>, vector<16x8xf32> -> vector<64x8xf32>
    %84 = vector.shape_cast %83 : vector<64x8xf32> to vector<8x8x8xf32>
    %85 = vector.extract_strided_slice %70 {offsets = [0, 64], sizes = [16, 32], strides = [1, 1]} : vector<16x96xf32> to vector<16x32xf32>
    %86 = vector.extract_strided_slice %85 {offsets = [0, 0], sizes = [16, 8], strides = [1, 1]} : vector<16x32xf32> to vector<16x8xf32>
    %87 = vector.extract_strided_slice %85 {offsets = [0, 8], sizes = [16, 8], strides = [1, 1]} : vector<16x32xf32> to vector<16x8xf32>
    %88 = vector.extract_strided_slice %85 {offsets = [0, 16], sizes = [16, 8], strides = [1, 1]} : vector<16x32xf32> to vector<16x8xf32>
    %89 = vector.extract_strided_slice %85 {offsets = [0, 24], sizes = [16, 8], strides = [1, 1]} : vector<16x32xf32> to vector<16x8xf32>
    %90 = tpu.concatenate %86, %87, %88, %89 in 0 : vector<16x8xf32>, vector<16x8xf32>, vector<16x8xf32>, vector<16x8xf32> -> vector<64x8xf32>
    %91 = vector.shape_cast %90 : vector<64x8xf32> to vector<8x8x8xf32>
    %92 = arith.truncf %77 : vector<8x8x8xf32> to vector<8x8x8xbf16>
    %93 = arith.truncf %84 : vector<8x8x8xf32> to vector<8x8x8xbf16>
    "tpu.trace_start"() <{level = 10 : i32, message = "nqd,nkd->nqk"}> : () -> ()
    %cst_23 = arith.constant dense<0.000000e+00> : vector<8x8x8xf32>
    %94 = tpu.matmul %92, %93, %cst_23 {dimension_numbers = #tpu.dot_dimension_numbers<[2], [2], [1], [1], [0, 0, 0, 1, 1, 1], [0], [0]>} : vector<8x8x8xbf16>, vector<8x8x8xbf16>, vector<8x8x8xf32> -> vector<8x8x8xf32>
    "tpu.trace_stop"() : () -> ()
    %95 = vector.broadcast %49 : vector<8x1x8xf32> to vector<8x8x8xf32>
    %96 = arith.addf %94, %95 : vector<8x8x8xf32>
    %cst_24 = arith.constant dense<0xFF800000> : vector<8x8xf32>
    %97 = vector.multi_reduction <maximumf>, %96, %cst_24 [2] : vector<8x8x8xf32> to vector<8x8xf32>
    %98 = vector.shape_cast %97 : vector<8x8xf32> to vector<8x8x1xf32>
    %99 = vector.broadcast %98 : vector<8x8x1xf32> to vector<8x8x8xf32>
    %100 = arith.subf %96, %99 : vector<8x8x8xf32>
    %101 = math.exp %100 : vector<8x8x8xf32>
    %cst_25 = arith.constant dense<0.000000e+00> : vector<8x8xf32>
    %102 = vector.multi_reduction <add>, %101, %cst_25 [2] : vector<8x8x8xf32> to vector<8x8xf32>
    %103 = vector.shape_cast %102 : vector<8x8xf32> to vector<8x8x1xf32>
    %104 = tpu.reciprocal %103 {approx = true} : vector<8x8x1xf32> -> vector<8x8x1xf32>
    %105 = vector.broadcast %104 : vector<8x8x1xf32> to vector<8x8x8xf32>
    %106 = arith.mulf %101, %105 : vector<8x8x8xf32>
    %107 = arith.truncf %106 : vector<8x8x8xf32> to vector<8x8x8xbf16>
    %108 = arith.truncf %91 : vector<8x8x8xf32> to vector<8x8x8xbf16>
    "tpu.trace_start"() <{level = 10 : i32, message = "nqk,nkd->nqd"}> : () -> ()
    %cst_26 = arith.constant dense<0.000000e+00> : vector<8x8x8xf32>
    %109 = tpu.matmul %107, %108, %cst_26 {dimension_numbers = #tpu.dot_dimension_numbers<[2], [1], [1], [2], [0, 0, 0, 1, 1, 2], [0], [0]>} : vector<8x8x8xbf16>, vector<8x8x8xbf16>, vector<8x8x8xf32> -> vector<8x8x8xf32>
    "tpu.trace_stop"() : () -> ()
    %110 = vector.extract_strided_slice %109 {offsets = [0, 0, 0], sizes = [2, 8, 8], strides = [1, 1, 1]} : vector<8x8x8xf32> to vector<2x8x8xf32>
    %111 = vector.shape_cast %110 : vector<2x8x8xf32> to vector<16x8xf32>
    %112 = arith.truncf %111 : vector<16x8xf32> to vector<16x8xbf16>
    %113 = vector.extract_strided_slice %65 {offsets = [0, 0], sizes = [8, 32], strides = [1, 1]} : vector<32x32xbf16> to vector<8x32xbf16>
    %cst_27 = arith.constant dense<0.000000e+00> : vector<16x32xf32>
    %114 = tpu.matmul %112, %113, %cst_27 {dimension_numbers = #tpu.dot_dimension_numbers<[1], [0], [0], [1], [0, 0, 1, 1], [], []>} : vector<16x8xbf16>, vector<8x32xbf16>, vector<16x32xf32> -> vector<16x32xf32>
    %115 = vector.extract_strided_slice %109 {offsets = [2, 0, 0], sizes = [2, 8, 8], strides = [1, 1, 1]} : vector<8x8x8xf32> to vector<2x8x8xf32>
    %116 = vector.shape_cast %115 : vector<2x8x8xf32> to vector<16x8xf32>
    %117 = arith.truncf %116 : vector<16x8xf32> to vector<16x8xbf16>
    %118 = vector.extract_strided_slice %65 {offsets = [8, 0], sizes = [8, 32], strides = [1, 1]} : vector<32x32xbf16> to vector<8x32xbf16>
    %cst_28 = arith.constant dense<0.000000e+00> : vector<16x32xf32>
    %119 = tpu.matmul %117, %118, %cst_28 {dimension_numbers = #tpu.dot_dimension_numbers<[1], [0], [0], [1], [0, 0, 1, 1], [], []>} : vector<16x8xbf16>, vector<8x32xbf16>, vector<16x32xf32> -> vector<16x32xf32>
    %120 = arith.addf %114, %119 : vector<16x32xf32>
    %121 = vector.extract_strided_slice %109 {offsets = [4, 0, 0], sizes = [2, 8, 8], strides = [1, 1, 1]} : vector<8x8x8xf32> to vector<2x8x8xf32>
    %122 = vector.shape_cast %121 : vector<2x8x8xf32> to vector<16x8xf32>
    %123 = arith.truncf %122 : vector<16x8xf32> to vector<16x8xbf16>
    %124 = vector.extract_strided_slice %65 {offsets = [16, 0], sizes = [8, 32], strides = [1, 1]} : vector<32x32xbf16> to vector<8x32xbf16>
    %cst_29 = arith.constant dense<0.000000e+00> : vector<16x32xf32>
    %125 = tpu.matmul %123, %124, %cst_29 {dimension_numbers = #tpu.dot_dimension_numbers<[1], [0], [0], [1], [0, 0, 1, 1], [], []>} : vector<16x8xbf16>, vector<8x32xbf16>, vector<16x32xf32> -> vector<16x32xf32>
    %126 = arith.addf %120, %125 : vector<16x32xf32>
    %127 = vector.extract_strided_slice %109 {offsets = [6, 0, 0], sizes = [2, 8, 8], strides = [1, 1, 1]} : vector<8x8x8xf32> to vector<2x8x8xf32>
    %128 = vector.shape_cast %127 : vector<2x8x8xf32> to vector<16x8xf32>
    %129 = arith.truncf %128 : vector<16x8xf32> to vector<16x8xbf16>
    %130 = vector.extract_strided_slice %65 {offsets = [24, 0], sizes = [8, 32], strides = [1, 1]} : vector<32x32xbf16> to vector<8x32xbf16>
    %cst_30 = arith.constant dense<0.000000e+00> : vector<16x32xf32>
    %131 = tpu.matmul %129, %130, %cst_30 {dimension_numbers = #tpu.dot_dimension_numbers<[1], [0], [0], [1], [0, 0, 1, 1], [], []>} : vector<16x8xbf16>, vector<8x32xbf16>, vector<16x32xf32> -> vector<16x32xf32>
    %132 = arith.addf %126, %131 : vector<16x32xf32>
    %133 = vector.broadcast %58 : vector<1x32xf32> to vector<16x32xf32>
    %134 = arith.addf %132, %133 : vector<16x32xf32>
    %135 = arith.addf %39, %134 : vector<16x32xf32>
    %cst_31 = arith.constant dense<0.000000e+00> : vector<16xf32>
    %136 = vector.multi_reduction <add>, %135, %cst_31 [1] : vector<16x32xf32> to vector<16xf32>
    %137 = vector.shape_cast %136 : vector<16xf32> to vector<16x1xf32>
    %cst_32 = arith.constant 3.200000e+01 : f32
    %138 = vector.broadcast %cst_32 : f32 to vector<16x1xf32>
    %139 = arith.divf %137, %138 : vector<16x1xf32>
    %140 = vector.broadcast %139 : vector<16x1xf32> to vector<16x32xf32>
    %141 = arith.subf %135, %140 : vector<16x32xf32>
    %142 = arith.mulf %141, %141 : vector<16x32xf32>
    %cst_33 = arith.constant dense<0.000000e+00> : vector<16xf32>
    %143 = vector.multi_reduction <add>, %142, %cst_33 [1] : vector<16x32xf32> to vector<16xf32>
    %144 = vector.shape_cast %143 : vector<16xf32> to vector<16x1xf32>
    %cst_34 = arith.constant 3.200000e+01 : f32
    %145 = vector.broadcast %cst_34 : f32 to vector<16x1xf32>
    %146 = arith.divf %144, %145 : vector<16x1xf32>
    %147 = vector.broadcast %139 : vector<16x1xf32> to vector<16x32xf32>
    %148 = arith.subf %135, %147 : vector<16x32xf32>
    %cst_35 = arith.constant 9.99999996E-13 : f32
    %149 = vector.broadcast %cst_35 : f32 to vector<16x1xf32>
    %150 = arith.addf %146, %149 : vector<16x1xf32>
    %151 = math.rsqrt %150 : vector<16x1xf32>
    %152 = vector.broadcast %151 : vector<16x1xf32> to vector<16x32xf32>
    %153 = arith.mulf %148, %152 : vector<16x32xf32>
    %154 = vector.broadcast %59 : vector<1x32xf32> to vector<16x32xf32>
    %155 = arith.mulf %153, %154 : vector<16x32xf32>
    %156 = vector.broadcast %60 : vector<1x32xf32> to vector<16x32xf32>
    %157 = arith.addf %155, %156 : vector<16x32xf32>
    %158 = arith.truncf %157 : vector<16x32xf32> to vector<16x32xbf16>
    %cst_36 = arith.constant dense<0.000000e+00> : vector<16x64xf32>
    %159 = tpu.matmul %158, %66, %cst_36 {dimension_numbers = #tpu.dot_dimension_numbers<[1], [0], [0], [1], [0, 0, 1, 1], [], []>} : vector<16x32xbf16>, vector<32x64xbf16>, vector<16x64xf32> -> vector<16x64xf32>
    %160 = vector.broadcast %57 : vector<1x64xf32> to vector<16x64xf32>
    %161 = arith.addf %159, %160 : vector<16x64xf32>
    %162 = arith.mulf %161, %161 : vector<16x64xf32>
    %163 = arith.mulf %161, %162 : vector<16x64xf32>
    %cst_37 = arith.constant 4.471500e-02 : f32
    %164 = vector.broadcast %cst_37 : f32 to vector<16x64xf32>
    %165 = arith.mulf %164, %163 : vector<16x64xf32>
    %166 = arith.addf %161, %165 : vector<16x64xf32>
    %cst_38 = arith.constant 0.797884583 : f32
    %167 = vector.broadcast %cst_38 : f32 to vector<16x64xf32>
    %168 = arith.mulf %167, %166 : vector<16x64xf32>
    %169 = math.tanh %168 : vector<16x64xf32>
    %cst_39 = arith.constant 1.000000e+00 : f32
    %170 = vector.broadcast %cst_39 : f32 to vector<16x64xf32>
    %171 = arith.addf %170, %169 : vector<16x64xf32>
    %cst_40 = arith.constant 5.000000e-01 : f32
    %172 = vector.broadcast %cst_40 : f32 to vector<16x64xf32>
    %173 = arith.mulf %172, %171 : vector<16x64xf32>
    %174 = arith.mulf %161, %173 : vector<16x64xf32>
    %175 = arith.truncf %174 : vector<16x64xf32> to vector<16x64xbf16>
    %cst_41 = arith.constant dense<0.000000e+00> : vector<16x32xf32>
    %176 = tpu.matmul %175, %53, %cst_41 {dimension_numbers = #tpu.dot_dimension_numbers<[1], [0], [0], [1], [0, 0, 1, 1], [], []>} : vector<16x64xbf16>, vector<64x32xbf16>, vector<16x32xf32> -> vector<16x32xf32>
    %177 = vector.broadcast %61 : vector<1x32xf32> to vector<16x32xf32>
    %178 = arith.addf %176, %177 : vector<16x32xf32>
    %179 = arith.addf %157, %178 : vector<16x32xf32>
    %cst_42 = arith.constant dense<0.000000e+00> : vector<16xf32>
    %180 = vector.multi_reduction <add>, %179, %cst_42 [1] : vector<16x32xf32> to vector<16xf32>
    %181 = vector.shape_cast %180 : vector<16xf32> to vector<16x1xf32>
    %cst_43 = arith.constant 3.200000e+01 : f32
    %182 = vector.broadcast %cst_43 : f32 to vector<16x1xf32>
    %183 = arith.divf %181, %182 : vector<16x1xf32>
    %184 = vector.broadcast %183 : vector<16x1xf32> to vector<16x32xf32>
    %185 = arith.subf %179, %184 : vector<16x32xf32>
    %186 = arith.mulf %185, %185 : vector<16x32xf32>
    %cst_44 = arith.constant dense<0.000000e+00> : vector<16xf32>
    %187 = vector.multi_reduction <add>, %186, %cst_44 [1] : vector<16x32xf32> to vector<16xf32>
    %188 = vector.shape_cast %187 : vector<16xf32> to vector<16x1xf32>
    %cst_45 = arith.constant 3.200000e+01 : f32
    %189 = vector.broadcast %cst_45 : f32 to vector<16x1xf32>
    %190 = arith.divf %188, %189 : vector<16x1xf32>
    %191 = vector.broadcast %183 : vector<16x1xf32> to vector<16x32xf32>
    %192 = arith.subf %179, %191 : vector<16x32xf32>
    %cst_46 = arith.constant 9.99999996E-13 : f32
    %193 = vector.broadcast %cst_46 : f32 to vector<16x1xf32>
    %194 = arith.addf %190, %193 : vector<16x1xf32>
    %195 = math.rsqrt %194 : vector<16x1xf32>
    %196 = vector.broadcast %195 : vector<16x1xf32> to vector<16x32xf32>
    %197 = arith.mulf %192, %196 : vector<16x32xf32>
    %198 = vector.broadcast %62 : vector<1x32xf32> to vector<16x32xf32>
    %199 = arith.mulf %197, %198 : vector<16x32xf32>
    %200 = vector.broadcast %63 : vector<1x32xf32> to vector<16x32xf32>
    %201 = arith.addf %199, %200 : vector<16x32xf32>
    %c1 = arith.constant 1 : index
    %c0_47 = arith.constant 0 : index
    %c0_48 = arith.constant 0 : index
    %202 = vector.load %arg3[%c1, %c0_47, %c0_48] : memref<2x32x192xbf16, #tpu.memory_space<vmem>>, vector<1x32x192xbf16>
    %203 = vector.shape_cast %202 : vector<1x32x192xbf16> to vector<32x192xbf16>
    %c1_49 = arith.constant 1 : index
    %c0_50 = arith.constant 0 : index
    %c0_51 = arith.constant 0 : index
    %204 = vector.load %arg4[%c1_49, %c0_50, %c0_51] : memref<2x64x32xbf16, #tpu.memory_space<vmem>>, vector<1x64x32xbf16>
    %205 = vector.shape_cast %204 : vector<1x64x32xbf16> to vector<64x32xbf16>
    %206 = vector.extract_strided_slice %1 {offsets = [2, 0], sizes = [2, 96], strides = [1, 1]} : vector<4x96xf32> to vector<2x96xf32>
    %207 = vector.extract_strided_slice %0 {offsets = [8, 0], sizes = [6, 32], strides = [1, 1]} : vector<14x32xf32> to vector<6x32xf32>
    %208 = vector.extract_strided_slice %206 {offsets = [0, 0], sizes = [1, 96], strides = [1, 1]} : vector<2x96xf32> to vector<1x96xf32>
    %209 = vector.extract_strided_slice %206 {offsets = [1, 0], sizes = [1, 64], strides = [1, 1]} : vector<2x96xf32> to vector<1x64xf32>
    %210 = vector.extract_strided_slice %207 {offsets = [0, 0], sizes = [1, 32], strides = [1, 1]} : vector<6x32xf32> to vector<1x32xf32>
    %211 = vector.extract_strided_slice %207 {offsets = [1, 0], sizes = [1, 32], strides = [1, 1]} : vector<6x32xf32> to vector<1x32xf32>
    %212 = vector.extract_strided_slice %207 {offsets = [2, 0], sizes = [1, 32], strides = [1, 1]} : vector<6x32xf32> to vector<1x32xf32>
    %213 = vector.extract_strided_slice %207 {offsets = [3, 0], sizes = [1, 32], strides = [1, 1]} : vector<6x32xf32> to vector<1x32xf32>
    %214 = vector.extract_strided_slice %207 {offsets = [4, 0], sizes = [1, 32], strides = [1, 1]} : vector<6x32xf32> to vector<1x32xf32>
    %215 = vector.extract_strided_slice %207 {offsets = [5, 0], sizes = [1, 32], strides = [1, 1]} : vector<6x32xf32> to vector<1x32xf32>
    %216 = vector.extract_strided_slice %203 {offsets = [0, 0], sizes = [32, 96], strides = [1, 1]} : vector<32x192xbf16> to vector<32x96xbf16>
    %217 = vector.extract_strided_slice %203 {offsets = [0, 96], sizes = [32, 32], strides = [1, 1]} : vector<32x192xbf16> to vector<32x32xbf16>
    %218 = vector.extract_strided_slice %203 {offsets = [0, 128], sizes = [32, 64], strides = [1, 1]} : vector<32x192xbf16> to vector<32x64xbf16>
    %219 = arith.truncf %201 : vector<16x32xf32> to vector<16x32xbf16>
    %cst_52 = arith.constant dense<0.000000e+00> : vector<16x96xf32>
    %220 = tpu.matmul %219, %216, %cst_52 {dimension_numbers = #tpu.dot_dimension_numbers<[1], [0], [0], [1], [0, 0, 1, 1], [], []>} : vector<16x32xbf16>, vector<32x96xbf16>, vector<16x96xf32> -> vector<16x96xf32>
    %221 = vector.broadcast %208 : vector<1x96xf32> to vector<16x96xf32>
    %222 = arith.addf %220, %221 : vector<16x96xf32>
    %223 = vector.extract_strided_slice %222 {offsets = [0, 0], sizes = [16, 32], strides = [1, 1]} : vector<16x96xf32> to vector<16x32xf32>
    %224 = vector.extract_strided_slice %223 {offsets = [0, 0], sizes = [16, 8], strides = [1, 1]} : vector<16x32xf32> to vector<16x8xf32>
    %225 = vector.extract_strided_slice %223 {offsets = [0, 8], sizes = [16, 8], strides = [1, 1]} : vector<16x32xf32> to vector<16x8xf32>
    %226 = vector.extract_strided_slice %223 {offsets = [0, 16], sizes = [16, 8], strides = [1, 1]} : vector<16x32xf32> to vector<16x8xf32>
    %227 = vector.extract_strided_slice %223 {offsets = [0, 24], sizes = [16, 8], strides = [1, 1]} : vector<16x32xf32> to vector<16x8xf32>
    %228 = tpu.concatenate %224, %225, %226, %227 in 0 : vector<16x8xf32>, vector<16x8xf32>, vector<16x8xf32>, vector<16x8xf32> -> vector<64x8xf32>
    %229 = vector.shape_cast %228 : vector<64x8xf32> to vector<8x8x8xf32>
    %230 = vector.extract_strided_slice %222 {offsets = [0, 32], sizes = [16, 32], strides = [1, 1]} : vector<16x96xf32> to vector<16x32xf32>
    %231 = vector.extract_strided_slice %230 {offsets = [0, 0], sizes = [16, 8], strides = [1, 1]} : vector<16x32xf32> to vector<16x8xf32>
    %232 = vector.extract_strided_slice %230 {offsets = [0, 8], sizes = [16, 8], strides = [1, 1]} : vector<16x32xf32> to vector<16x8xf32>
    %233 = vector.extract_strided_slice %230 {offsets = [0, 16], sizes = [16, 8], strides = [1, 1]} : vector<16x32xf32> to vector<16x8xf32>
    %234 = vector.extract_strided_slice %230 {offsets = [0, 24], sizes = [16, 8], strides = [1, 1]} : vector<16x32xf32> to vector<16x8xf32>
    %235 = tpu.concatenate %231, %232, %233, %234 in 0 : vector<16x8xf32>, vector<16x8xf32>, vector<16x8xf32>, vector<16x8xf32> -> vector<64x8xf32>
    %236 = vector.shape_cast %235 : vector<64x8xf32> to vector<8x8x8xf32>
    %237 = vector.extract_strided_slice %222 {offsets = [0, 64], sizes = [16, 32], strides = [1, 1]} : vector<16x96xf32> to vector<16x32xf32>
    %238 = vector.extract_strided_slice %237 {offsets = [0, 0], sizes = [16, 8], strides = [1, 1]} : vector<16x32xf32> to vector<16x8xf32>
    %239 = vector.extract_strided_slice %237 {offsets = [0, 8], sizes = [16, 8], strides = [1, 1]} : vector<16x32xf32> to vector<16x8xf32>
    %240 = vector.extract_strided_slice %237 {offsets = [0, 16], sizes = [16, 8], strides = [1, 1]} : vector<16x32xf32> to vector<16x8xf32>
    %241 = vector.extract_strided_slice %237 {offsets = [0, 24], sizes = [16, 8], strides = [1, 1]} : vector<16x32xf32> to vector<16x8xf32>
    %242 = tpu.concatenate %238, %239, %240, %241 in 0 : vector<16x8xf32>, vector<16x8xf32>, vector<16x8xf32>, vector<16x8xf32> -> vector<64x8xf32>
    %243 = vector.shape_cast %242 : vector<64x8xf32> to vector<8x8x8xf32>
    %244 = arith.truncf %229 : vector<8x8x8xf32> to vector<8x8x8xbf16>
    %245 = arith.truncf %236 : vector<8x8x8xf32> to vector<8x8x8xbf16>
    "tpu.trace_start"() <{level = 10 : i32, message = "nqd,nkd->nqk"}> : () -> ()
    %cst_53 = arith.constant dense<0.000000e+00> : vector<8x8x8xf32>
    %246 = tpu.matmul %244, %245, %cst_53 {dimension_numbers = #tpu.dot_dimension_numbers<[2], [2], [1], [1], [0, 0, 0, 1, 1, 1], [0], [0]>} : vector<8x8x8xbf16>, vector<8x8x8xbf16>, vector<8x8x8xf32> -> vector<8x8x8xf32>
    "tpu.trace_stop"() : () -> ()
    %247 = vector.broadcast %49 : vector<8x1x8xf32> to vector<8x8x8xf32>
    %248 = arith.addf %246, %247 : vector<8x8x8xf32>
    %cst_54 = arith.constant dense<0xFF800000> : vector<8x8xf32>
    %249 = vector.multi_reduction <maximumf>, %248, %cst_54 [2] : vector<8x8x8xf32> to vector<8x8xf32>
    %250 = vector.shape_cast %249 : vector<8x8xf32> to vector<8x8x1xf32>
    %251 = vector.broadcast %250 : vector<8x8x1xf32> to vector<8x8x8xf32>
    %252 = arith.subf %248, %251 : vector<8x8x8xf32>
    %253 = math.exp %252 : vector<8x8x8xf32>
    %cst_55 = arith.constant dense<0.000000e+00> : vector<8x8xf32>
    %254 = vector.multi_reduction <add>, %253, %cst_55 [2] : vector<8x8x8xf32> to vector<8x8xf32>
    %255 = vector.shape_cast %254 : vector<8x8xf32> to vector<8x8x1xf32>
    %256 = tpu.reciprocal %255 {approx = true} : vector<8x8x1xf32> -> vector<8x8x1xf32>
    %257 = vector.broadcast %256 : vector<8x8x1xf32> to vector<8x8x8xf32>
    %258 = arith.mulf %253, %257 : vector<8x8x8xf32>
    %259 = arith.truncf %258 : vector<8x8x8xf32> to vector<8x8x8xbf16>
    %260 = arith.truncf %243 : vector<8x8x8xf32> to vector<8x8x8xbf16>
    "tpu.trace_start"() <{level = 10 : i32, message = "nqk,nkd->nqd"}> : () -> ()
    %cst_56 = arith.constant dense<0.000000e+00> : vector<8x8x8xf32>
    %261 = tpu.matmul %259, %260, %cst_56 {dimension_numbers = #tpu.dot_dimension_numbers<[2], [1], [1], [2], [0, 0, 0, 1, 1, 2], [0], [0]>} : vector<8x8x8xbf16>, vector<8x8x8xbf16>, vector<8x8x8xf32> -> vector<8x8x8xf32>
    "tpu.trace_stop"() : () -> ()
    %262 = vector.extract_strided_slice %261 {offsets = [0, 0, 0], sizes = [2, 8, 8], strides = [1, 1, 1]} : vector<8x8x8xf32> to vector<2x8x8xf32>
    %263 = vector.shape_cast %262 : vector<2x8x8xf32> to vector<16x8xf32>
    %264 = arith.truncf %263 : vector<16x8xf32> to vector<16x8xbf16>
    %265 = vector.extract_strided_slice %217 {offsets = [0, 0], sizes = [8, 32], strides = [1, 1]} : vector<32x32xbf16> to vector<8x32xbf16>
    %cst_57 = arith.constant dense<0.000000e+00> : vector<16x32xf32>
    %266 = tpu.matmul %264, %265, %cst_57 {dimension_numbers = #tpu.dot_dimension_numbers<[1], [0], [0], [1], [0, 0, 1, 1], [], []>} : vector<16x8xbf16>, vector<8x32xbf16>, vector<16x32xf32> -> vector<16x32xf32>
    %267 = vector.extract_strided_slice %261 {offsets = [2, 0, 0], sizes = [2, 8, 8], strides = [1, 1, 1]} : vector<8x8x8xf32> to vector<2x8x8xf32>
    %268 = vector.shape_cast %267 : vector<2x8x8xf32> to vector<16x8xf32>
    %269 = arith.truncf %268 : vector<16x8xf32> to vector<16x8xbf16>
    %270 = vector.extract_strided_slice %217 {offsets = [8, 0], sizes = [8, 32], strides = [1, 1]} : vector<32x32xbf16> to vector<8x32xbf16>
    %cst_58 = arith.constant dense<0.000000e+00> : vector<16x32xf32>
    %271 = tpu.matmul %269, %270, %cst_58 {dimension_numbers = #tpu.dot_dimension_numbers<[1], [0], [0], [1], [0, 0, 1, 1], [], []>} : vector<16x8xbf16>, vector<8x32xbf16>, vector<16x32xf32> -> vector<16x32xf32>
    %272 = arith.addf %266, %271 : vector<16x32xf32>
    %273 = vector.extract_strided_slice %261 {offsets = [4, 0, 0], sizes = [2, 8, 8], strides = [1, 1, 1]} : vector<8x8x8xf32> to vector<2x8x8xf32>
    %274 = vector.shape_cast %273 : vector<2x8x8xf32> to vector<16x8xf32>
    %275 = arith.truncf %274 : vector<16x8xf32> to vector<16x8xbf16>
    %276 = vector.extract_strided_slice %217 {offsets = [16, 0], sizes = [8, 32], strides = [1, 1]} : vector<32x32xbf16> to vector<8x32xbf16>
    %cst_59 = arith.constant dense<0.000000e+00> : vector<16x32xf32>
    %277 = tpu.matmul %275, %276, %cst_59 {dimension_numbers = #tpu.dot_dimension_numbers<[1], [0], [0], [1], [0, 0, 1, 1], [], []>} : vector<16x8xbf16>, vector<8x32xbf16>, vector<16x32xf32> -> vector<16x32xf32>
    %278 = arith.addf %272, %277 : vector<16x32xf32>
    %279 = vector.extract_strided_slice %261 {offsets = [6, 0, 0], sizes = [2, 8, 8], strides = [1, 1, 1]} : vector<8x8x8xf32> to vector<2x8x8xf32>
    %280 = vector.shape_cast %279 : vector<2x8x8xf32> to vector<16x8xf32>
    %281 = arith.truncf %280 : vector<16x8xf32> to vector<16x8xbf16>
    %282 = vector.extract_strided_slice %217 {offsets = [24, 0], sizes = [8, 32], strides = [1, 1]} : vector<32x32xbf16> to vector<8x32xbf16>
    %cst_60 = arith.constant dense<0.000000e+00> : vector<16x32xf32>
    %283 = tpu.matmul %281, %282, %cst_60 {dimension_numbers = #tpu.dot_dimension_numbers<[1], [0], [0], [1], [0, 0, 1, 1], [], []>} : vector<16x8xbf16>, vector<8x32xbf16>, vector<16x32xf32> -> vector<16x32xf32>
    %284 = arith.addf %278, %283 : vector<16x32xf32>
    %285 = vector.broadcast %210 : vector<1x32xf32> to vector<16x32xf32>
    %286 = arith.addf %284, %285 : vector<16x32xf32>
    %287 = arith.addf %201, %286 : vector<16x32xf32>
    %cst_61 = arith.constant dense<0.000000e+00> : vector<16xf32>
    %288 = vector.multi_reduction <add>, %287, %cst_61 [1] : vector<16x32xf32> to vector<16xf32>
    %289 = vector.shape_cast %288 : vector<16xf32> to vector<16x1xf32>
    %cst_62 = arith.constant 3.200000e+01 : f32
    %290 = vector.broadcast %cst_62 : f32 to vector<16x1xf32>
    %291 = arith.divf %289, %290 : vector<16x1xf32>
    %292 = vector.broadcast %291 : vector<16x1xf32> to vector<16x32xf32>
    %293 = arith.subf %287, %292 : vector<16x32xf32>
    %294 = arith.mulf %293, %293 : vector<16x32xf32>
    %cst_63 = arith.constant dense<0.000000e+00> : vector<16xf32>
    %295 = vector.multi_reduction <add>, %294, %cst_63 [1] : vector<16x32xf32> to vector<16xf32>
    %296 = vector.shape_cast %295 : vector<16xf32> to vector<16x1xf32>
    %cst_64 = arith.constant 3.200000e+01 : f32
    %297 = vector.broadcast %cst_64 : f32 to vector<16x1xf32>
    %298 = arith.divf %296, %297 : vector<16x1xf32>
    %299 = vector.broadcast %291 : vector<16x1xf32> to vector<16x32xf32>
    %300 = arith.subf %287, %299 : vector<16x32xf32>
    %cst_65 = arith.constant 9.99999996E-13 : f32
    %301 = vector.broadcast %cst_65 : f32 to vector<16x1xf32>
    %302 = arith.addf %298, %301 : vector<16x1xf32>
    %303 = math.rsqrt %302 : vector<16x1xf32>
    %304 = vector.broadcast %303 : vector<16x1xf32> to vector<16x32xf32>
    %305 = arith.mulf %300, %304 : vector<16x32xf32>
    %306 = vector.broadcast %211 : vector<1x32xf32> to vector<16x32xf32>
    %307 = arith.mulf %305, %306 : vector<16x32xf32>
    %308 = vector.broadcast %212 : vector<1x32xf32> to vector<16x32xf32>
    %309 = arith.addf %307, %308 : vector<16x32xf32>
    %310 = arith.truncf %309 : vector<16x32xf32> to vector<16x32xbf16>
    %cst_66 = arith.constant dense<0.000000e+00> : vector<16x64xf32>
    %311 = tpu.matmul %310, %218, %cst_66 {dimension_numbers = #tpu.dot_dimension_numbers<[1], [0], [0], [1], [0, 0, 1, 1], [], []>} : vector<16x32xbf16>, vector<32x64xbf16>, vector<16x64xf32> -> vector<16x64xf32>
    %312 = vector.broadcast %209 : vector<1x64xf32> to vector<16x64xf32>
    %313 = arith.addf %311, %312 : vector<16x64xf32>
    %314 = arith.mulf %313, %313 : vector<16x64xf32>
    %315 = arith.mulf %313, %314 : vector<16x64xf32>
    %cst_67 = arith.constant 4.471500e-02 : f32
    %316 = vector.broadcast %cst_67 : f32 to vector<16x64xf32>
    %317 = arith.mulf %316, %315 : vector<16x64xf32>
    %318 = arith.addf %313, %317 : vector<16x64xf32>
    %cst_68 = arith.constant 0.797884583 : f32
    %319 = vector.broadcast %cst_68 : f32 to vector<16x64xf32>
    %320 = arith.mulf %319, %318 : vector<16x64xf32>
    %321 = math.tanh %320 : vector<16x64xf32>
    %cst_69 = arith.constant 1.000000e+00 : f32
    %322 = vector.broadcast %cst_69 : f32 to vector<16x64xf32>
    %323 = arith.addf %322, %321 : vector<16x64xf32>
    %cst_70 = arith.constant 5.000000e-01 : f32
    %324 = vector.broadcast %cst_70 : f32 to vector<16x64xf32>
    %325 = arith.mulf %324, %323 : vector<16x64xf32>
    %326 = arith.mulf %313, %325 : vector<16x64xf32>
    %327 = arith.truncf %326 : vector<16x64xf32> to vector<16x64xbf16>
    %cst_71 = arith.constant dense<0.000000e+00> : vector<16x32xf32>
    %328 = tpu.matmul %327, %205, %cst_71 {dimension_numbers = #tpu.dot_dimension_numbers<[1], [0], [0], [1], [0, 0, 1, 1], [], []>} : vector<16x64xbf16>, vector<64x32xbf16>, vector<16x32xf32> -> vector<16x32xf32>
    %329 = vector.broadcast %213 : vector<1x32xf32> to vector<16x32xf32>
    %330 = arith.addf %328, %329 : vector<16x32xf32>
    %331 = arith.addf %309, %330 : vector<16x32xf32>
    %cst_72 = arith.constant dense<0.000000e+00> : vector<16xf32>
    %332 = vector.multi_reduction <add>, %331, %cst_72 [1] : vector<16x32xf32> to vector<16xf32>
    %333 = vector.shape_cast %332 : vector<16xf32> to vector<16x1xf32>
    %cst_73 = arith.constant 3.200000e+01 : f32
    %334 = vector.broadcast %cst_73 : f32 to vector<16x1xf32>
    %335 = arith.divf %333, %334 : vector<16x1xf32>
    %336 = vector.broadcast %335 : vector<16x1xf32> to vector<16x32xf32>
    %337 = arith.subf %331, %336 : vector<16x32xf32>
    %338 = arith.mulf %337, %337 : vector<16x32xf32>
    %cst_74 = arith.constant dense<0.000000e+00> : vector<16xf32>
    %339 = vector.multi_reduction <add>, %338, %cst_74 [1] : vector<16x32xf32> to vector<16xf32>
    %340 = vector.shape_cast %339 : vector<16xf32> to vector<16x1xf32>
    %cst_75 = arith.constant 3.200000e+01 : f32
    %341 = vector.broadcast %cst_75 : f32 to vector<16x1xf32>
    %342 = arith.divf %340, %341 : vector<16x1xf32>
    %343 = vector.broadcast %335 : vector<16x1xf32> to vector<16x32xf32>
    %344 = arith.subf %331, %343 : vector<16x32xf32>
    %cst_76 = arith.constant 9.99999996E-13 : f32
    %345 = vector.broadcast %cst_76 : f32 to vector<16x1xf32>
    %346 = arith.addf %342, %345 : vector<16x1xf32>
    %347 = math.rsqrt %346 : vector<16x1xf32>
    %348 = vector.broadcast %347 : vector<16x1xf32> to vector<16x32xf32>
    %349 = arith.mulf %344, %348 : vector<16x32xf32>
    %350 = vector.broadcast %214 : vector<1x32xf32> to vector<16x32xf32>
    %351 = arith.mulf %349, %350 : vector<16x32xf32>
    %352 = vector.broadcast %215 : vector<1x32xf32> to vector<16x32xf32>
    %353 = arith.addf %351, %352 : vector<16x32xf32>
    %354 = vector.shape_cast %353 : vector<16x32xf32> to vector<2x8x32xf32>
    %355 = vector.extract_strided_slice %354 {offsets = [0, 0, 0], sizes = [2, 1, 32], strides = [1, 1, 1]} : vector<2x8x32xf32> to vector<2x1x32xf32>
    %356 = vector.shape_cast %355 : vector<2x1x32xf32> to vector<2x32xf32>
    %c0_77 = arith.constant 0 : index
    %c0_78 = arith.constant 0 : index
    %357 = vector.load %arg7[%c0_77, %c0_78] : memref<33x128xf32, #tpu.memory_space<vmem>>, vector<33x128xf32>
    %358 = vector.extract_strided_slice %357 {offsets = [0, 0], sizes = [32, 128], strides = [1, 1]} : vector<33x128xf32> to vector<32x128xf32>
    %cst_79 = arith.constant dense<0.000000e+00> : vector<2x128xf32>
    %359 = tpu.matmul %356, %358, %cst_79 {dimension_numbers = #tpu.dot_dimension_numbers<[1], [0], [0], [1], [0, 0, 1, 1], [], []>} : vector<2x32xf32>, vector<32x128xf32>, vector<2x128xf32> -> vector<2x128xf32>
    %360 = vector.extract_strided_slice %357 {offsets = [32, 0], sizes = [1, 128], strides = [1, 1]} : vector<33x128xf32> to vector<1x128xf32>
    %361 = vector.broadcast %360 : vector<1x128xf32> to vector<2x128xf32>
    %362 = arith.addf %359, %361 : vector<2x128xf32>
    %c0_80 = arith.constant 0 : index
    %c0_81 = arith.constant 0 : index
    %363 = vector.load %arg8[%c0_80, %c0_81] : memref<2x128xf32, #tpu.memory_space<vmem>>, vector<2x128xf32>
    tpu.vector_store %arg8[%c0_80, %c0_81], %362 {strides = array<i32>} : memref<2x128xf32, #tpu.memory_space<vmem>>, vector<2x128xf32>,
    return
  }
}

</mosaic_0001>

<llo_original>
// kernel: bert_for_multilabel_forward.1
$region0: #{bert_for_multilabel_forward.1}
  #allocation0 [shape = 'u32[]', space=smem, size = 0x4, offset = 0x4, fixed_abs, tag = 'smem constant byte address 0x4 - core index']
  #allocation1 [shape = 'u32[144,128]{1,0:T(1,128)}', space=vmem, size = 0x12000, scoped, tag = 'internal scratch']
  %s0 = inlined_call_operand.vmem [shape: s32[16,1], index: 0, kind: input, shape index: {}]
  %s1 = inlined_call_operand.vmem [shape: s32[2,8], index: 1, kind: input, shape index: {}]
  %s2 = inlined_call_operand.vmem [shape: f32[120,32], index: 2, kind: input, shape index: {}]
  %s3 = inlined_call_operand.vmem [shape: bf16[2,32,192], index: 3, kind: input, shape index: {}]
  %s4 = inlined_call_operand.vmem [shape: bf16[2,64,32], index: 4, kind: input, shape index: {}]
  %s5 = inlined_call_operand.vmem [shape: f32[4,96], index: 5, kind: input, shape index: {}]
  %s6 = inlined_call_operand.vmem [shape: f32[14,32], index: 6, kind: input, shape index: {}]
  %s7 = inlined_call_operand.vmem [shape: f32[33,128], index: 7, kind: input, shape index: {}]
  %s8 = inlined_call_operand.hbm [shape: f32[2,128], index: 8, kind: output, shape index: {}]
  %s9 = sld [smem:[#allocation0]]
  $region42: #{bert_for_multilabel_forward.1} parent=0
    _
  %s11 = ssub.s32 1, %s9
  %s12 = scalar_select 0, %s11, %s9
  $region1: #{bert_for_multilabel_forward.1} parent=0
    #allocation2 [shape = 'u8[1024]{0}', space=vmem, size = 0x400, scoped, tag = 'output window, operand 0, single buffered']
    #allocation3 [shape = 's32[1]{0}', space=sflag, size = 0x4, scoped, tag = 'scoped memory for bert_for_multilabel_forward.1']
    %13 = vsyncpa [#allocation3], 0
    // Predicated region
    $region2: #{bert_for_multilabel_forward.1} parent=1 // pred_check
      _
    $region3: #{bert_for_multilabel_forward.1} parent=1 // pred_check_branch
      %15 = sbr.rel (0) target = $region5
    $region4: #{bert_for_multilabel_forward.1} parent=1 // pred_region
      _
    $region5: #{bert_for_multilabel_forward.1} parent=1 // pred_fallthru
      _
    // Predicated region
    $region6: #{bert_for_multilabel_forward.1} parent=1 // pred_check
      _
    $region7: #{bert_for_multilabel_forward.1} parent=1 // pred_check_branch
      %17 = sbr.rel (0) target = $region9
    $region8: #{bert_for_multilabel_forward.1} parent=1 // pred_region
      _
    $region9: #{bert_for_multilabel_forward.1} parent=1 // pred_fallthru
      _
    // Predicated region
    $region10: #{bert_for_multilabel_forward.1} parent=1 // pred_check
      _
    $region11: #{bert_for_multilabel_forward.1} parent=1 // pred_check_branch
      %19 = sbr.rel (0) target = $region13
    $region12: #{bert_for_multilabel_forward.1} parent=1 // pred_region
      _
    $region13: #{bert_for_multilabel_forward.1} parent=1 // pred_fallthru
      _
    // Predicated region
    $region14: #{bert_for_multilabel_forward.1} parent=1 // pred_check
      _
    $region15: #{bert_for_multilabel_forward.1} parent=1 // pred_check_branch
      %21 = sbr.rel (0) target = $region17
    $region16: #{bert_for_multilabel_forward.1} parent=1 // pred_region
      _
    $region17: #{bert_for_multilabel_forward.1} parent=1 // pred_fallthru
      _
    // Predicated region
    $region18: #{bert_for_multilabel_forward.1} parent=1 // pred_check
      _
    $region19: #{bert_for_multilabel_forward.1} parent=1 // pred_check_branch
      %23 = sbr.rel (0) target = $region21
    $region20: #{bert_for_multilabel_forward.1} parent=1 // pred_region
      _
    $region21: #{bert_for_multilabel_forward.1} parent=1 // pred_fallthru
      _
    // Predicated region
    $region22: #{bert_for_multilabel_forward.1} parent=1 // pred_check
      _
    $region23: #{bert_for_multilabel_forward.1} parent=1 // pred_check_branch
      %25 = sbr.rel (0) target = $region25
    $region24: #{bert_for_multilabel_forward.1} parent=1 // pred_region
      _
    $region25: #{bert_for_multilabel_forward.1} parent=1 // pred_fallthru
      _
    // Predicated region
    $region26: #{bert_for_multilabel_forward.1} parent=1 // pred_check
      _
    $region27: #{bert_for_multilabel_forward.1} parent=1 // pred_check_branch
      %27 = sbr.rel (0) target = $region29
    $region28: #{bert_for_multilabel_forward.1} parent=1 // pred_region
      _
    $region29: #{bert_for_multilabel_forward.1} parent=1 // pred_fallthru
      _
    // Predicated region
    $region30: #{bert_for_multilabel_forward.1} parent=1 // pred_check
      _
    $region31: #{bert_for_multilabel_forward.1} parent=1 // pred_check_branch
      %29 = sbr.rel (0) target = $region33
    $region32: #{bert_for_multilabel_forward.1} parent=1 // pred_region
      _
    $region33: #{bert_for_multilabel_forward.1} parent=1 // pred_fallthru
      _
    %v31 = vld [vmem:[%s6] sm:$0xff]
    %v32 = vld [vmem:[%s6 + $0x8] sm:$0x3f]
    %v33 = vld [vmem:[%s5] sm:$0xf]
    %v34 = vld [vmem:[%s2] sm:$0xff]
    %v35 = vld [vmem:[%s2 + $0x8] sm:$0xff]
    %v36 = vld [vmem:[%s2 + $0x10] sm:$0xff]
    %v37 = vld [vmem:[%s2 + $0x18] sm:$0xff]
    %v38 = vld [vmem:[%s2 + $0x20] sm:$0xff]
    %v39 = vld [vmem:[%s2 + $0x28] sm:$0xff]
    %v40 = vld [vmem:[%s2 + $0x30] sm:$0xff]
    %v41 = vld [vmem:[%s2 + $0x38] sm:$0xff]
    %v42 = vld [vmem:[%s2 + $0x40] sm:$0xff]
    %v43 = vld [vmem:[%s2 + $0x48] sm:$0xff]
    %v44 = vld [vmem:[%s2 + $0x50] sm:$0xff]
    %v45 = vld [vmem:[%s2 + $0x58] sm:$0xff]
    %v46 = vld [vmem:[%s2 + $0x60] sm:$0xff]
    %v47 = vld [vmem:[%s2 + $0x68] sm:$0xff]
    %v48 = vld [vmem:[%s2 + $0x70] sm:$0xff]
    %v49 = vld [vmem:[%s0] sm:$0xff]
    %v50 = vld [vmem:[%s0 + $0x8] sm:$0xff]
    %v51 = vlaneseq
    %v52 = vand.u32 %v51, 127
    %53 = vset.pattern.permute.xlu0 0
    %54 = vperm.xlu0 %53, %v49
    %v55 = vpop.permute.xlu0 %54
    %56 = vset.pattern.permute.xlu0 0
    %57 = vperm.xlu0 %56, %v50
    %v58 = vpop.permute.xlu0 %57
    %vm59 = vcmp.eq.s32.totalorder %v52, %v55
    %vm60 = vcmp.eq.s32.totalorder %v52, %v58
    %v61 = vsel %vm59, 1, 0
    %v62 = vsel %vm60, 1, 0
    %v63 = vcvt.s32.f32 %v61
    %v64 = vcvt.s32.f32 %v62
    %vm65 = vcmask 982016
    %v67 = vsel %vm65, %v63, 0
    %v70 = vsel %vm65, %v64, 0
    %72 = vmatprep.subr.mxu0 0.0
    %73 = vmatpush1.msra.mxu0 %v34
    %74 = vmatprep.subr.mxu0 0.0
    %75 = vmatpush1.msra.mxu0 %v35
    %76 = vmatprep.subr.mxu0 0.0
    %77 = vmatpush1.msra.mxu0 %v36
    %78 = vmatprep.subr.mxu0 0.0
    %79 = vmatpush1.msra.mxu0 %v37
    %80 = vmatprep.subr.mxu0 0.0
    %81 = vmatpush1.msra.mxu0 %v38
    %82 = vmatprep.subr.mxu0 0.0
    %83 = vmatpush1.msra.mxu0 %v39
    %84 = vmatprep.subr.mxu0 0.0
    %85 = vmatpush1.msra.mxu0 %v40
    %86 = vmatprep.subr.mxu0 0.0
    %87 = vmatpush1.msra.mxu0 %v41
    %88 = vmatprep.subr.mxu0 0.0
    %89 = vmatpush1.msra.mxu0 %v42
    %90 = vmatprep.subr.mxu0 0.0
    %91 = vmatpush1.msra.mxu0 %v43
    %92 = vmatprep.subr.mxu0 0.0
    %93 = vmatpush1.msra.mxu0 %v44
    %94 = vmatprep.subr.mxu0 0.0
    %95 = vmatpush1.msra.mxu0 %v45
    %96 = vmatprep.subr.mxu0 0.0
    %97 = vmatpush1.msra.mxu0 %v46
    %98 = vmatprep.subr.mxu0 0.0
    %99 = vmatpush1.msra.mxu0 %v47
    %100 = vmatprep.subr.mxu0 0.0
    %101 = vmatpush1.msra.mxu0 %v48
    %102 = vmatprep.subr.mxu0 0.0
    %103 = vmatpush1.msra.mxu0 0.0
    %104 = vmatprep.subr.mxu0 0.0
    %105 = vmatpush1.msra.mxu0 0.0
    %106 = vmatprep.subr.mxu0 0.0
    %107 = vmatpush1.msra.mxu0 0.0
    %108 = vmatprep.subr.mxu0 0.0
    %109 = vmatpush1.msra.mxu0 0.0
    %110 = vmatprep.subr.mxu0 0.0
    %111 = vmatpush1.msra.mxu0 0.0
    %112 = vmatprep.subr.mxu0 0.0
    %113 = vmatpush1.msra.mxu0 0.0
    %114 = vmatprep.subr.mxu0 0.0
    %115 = vmatpush1.msra.mxu0 0.0
    %116 = vmatprep.subr.mxu0 0.0
    %117 = vmatpush1.msra.mxu0 0.0
    %118 = vmatprep.subr.mxu0 0.0
    %119 = vmatpush1.msra.mxu0 0.0
    %120 = vmatprep.subr.mxu0 0.0
    %121 = vmatpush1.msra.mxu0 0.0
    %122 = vmatprep.subr.mxu0 0.0
    %123 = vmatpush1.msra.mxu0 0.0
    %124 = vmatprep.subr.mxu0 0.0
    %125 = vmatpush1.msra.mxu0 0.0
    %126 = vmatprep.subr.mxu0 0.0
    %127 = vmatpush1.msra.mxu0 0.0
    %128 = vmatprep.subr.mxu0 0.0
    %129 = vmatpush1.msra.mxu0 0.0
    %130 = vmatprep.subr.mxu0 0.0
    %131 = vmatpush1.msra.mxu0 0.0
    %132 = vmatprep.subr.mxu0 0.0
    %133 = vmatpush1.msra.mxu0 0.0
    %134 = vmatprep.subr.mxu0 0.0
    %135 = vmatpush1.msra.mxu0 0.0
    %136 = vmatprep.mubr.f32.mxu0 0.0
    %137 = vmatmul.mubr.f32.gmra.mrb[0].mxu0 %v67
    %v138 = vpop.f32.mrb[0].mxu0
    %v139 = vadd.f32 0.0, %v138
    %v140 = vpop.f32.mrb[0].mxu0
    %141 = vmatprep.mubr.f32.mxu0 0.0
    %142 = vmatmul.mubr.f32.gmra.mrb[0].mxu0 %v70
    %v143 = vpop.f32.mrb[0].mxu0
    %v144 = vadd.f32 0.0, %v143
    %v145 = vpop.f32.mrb[0].mxu0
    %146 = vdwg.mxu0
    %v147 = vadd.f32 %v139, %v47
    %v148 = vadd.f32 %v144, %v47
    %vm149 = vcmask 261120
    %v150 = vsel %vm149, %v147, 0.0
    %151 = vadd.xlane.f32.xlu0 %v150
    %v152 = vpop.xlane.xlu0 %151
    %v153 = vsel %vm149, %v148, 0.0
    %154 = vadd.xlane.f32.xlu0 %v153
    %v155 = vpop.xlane.xlu0 %154
    %v156 = vrcp.pop 32.0
    %v157 = vmul.f32 %v152, %v156
    %v158 = vmul.f32 %v155, %v156
    %v159 = vsub.f32 %v147, %v157
    %v160 = vsub.f32 %v148, %v158
    %v161 = vmul.f32 %v159, %v159
    %v162 = vmul.f32 %v160, %v160
    %v163 = vsel %vm149, %v161, 0.0
    %164 = vadd.xlane.f32.xlu0 %v163
    %v165 = vpop.xlane.xlu0 %164
    %v166 = vsel %vm149, %v162, 0.0
    %167 = vadd.xlane.f32.xlu0 %v166
    %v168 = vpop.xlane.xlu0 %167
    %v169 = vmul.f32 %v165, %v156
    %v170 = vmul.f32 %v168, %v156
    %v171 = vadd.f32 %v169, 1e-12
    %v172 = vadd.f32 %v170, 1e-12
    %v173 = vrsqrt.pop %v171
    %v174 = vrsqrt.pop %v172
    %v175 = vmul.f32 %v159, %v173
    %v176 = vmul.f32 %v160, %v174
    %v177 = vlaneseq
    %v178 = vshrl.u32 %v177, 7
    %v179 = vsub.s32 0, %v178
    %v180 = vrot.slane %v31, %v179
    %v181 = vmul.f32 %v175, %v180
    %v182 = vmul.f32 %v176, %v180
    %v183 = vlaneseq
    %v184 = vshrl.u32 %v183, 7
    %v185 = vsub.s32 1, %v184
    %v186 = vrot.slane %v31, %v185
    %v187 = vadd.f32 %v181, %v186
    %v188 = vadd.f32 %v182, %v186
    %v189 = vld [vmem:[%s1] sm:$0x3]
    %vm190 = vcmp.eq.s32.totalorder %v189, 0
    %v191 = vsel %vm190, -1e+09, 0.0
    %v194 = vunpack.c.l.s4 1966171168
    %v195 = vunpack.c.0.s8 %v194
    %v196 = vlaneseq
    %v197 = vshrl.u32 %v196, 7
    %v198 = vsub.s32 %v195, %v197
    %v199 = vrot.slane %v191, %v198
    %v200 = vcombine.high %v199, %v199
    %v202 = vunpack.c.l.s4 1966171168
    %v203 = vunpack.c.0.s8 %v202
    %v204 = vlaneseq
    %v205 = vshrl.u32 %v204, 7
    %v206 = vsub.s32 %v203, %v205
    %v207 = vrot.slane %v199, %v206
    %v209 = vunpack.c.l.s4 1966171168
    %v210 = vunpack.c.0.s8 %v209
    %v211 = vlaneseq
    %v212 = vshrl.u32 %v211, 7
    %v213 = vsub.s32 %v210, %v212
    %v214 = vrot.slane %v200, %v213
    %v215 = vld [vmem:[%s3] sm:$0xff]
    %v216 = vld [vmem:[%s3 + $0x8] sm:$0xff]
    %v217 = vld [vmem:[%s3 + $0x10] sm:$0xff]
    %v218 = vld [vmem:[%s3 + $0x18] sm:$0xff]
    %v219 = vld [vmem:[%s4] sm:$0xf]
    %v220 = vld [vmem:[%s4 + $0x4] sm:$0xf]
    %v221 = vld [vmem:[%s4 + $0x8] sm:$0xf]
    %v222 = vld [vmem:[%s4 + $0xc] sm:$0xf]
    %v223 = vld [vmem:[%s4 + $0x10] sm:$0xf]
    %v224 = vld [vmem:[%s4 + $0x14] sm:$0xf]
    %v225 = vld [vmem:[%s4 + $0x18] sm:$0xf]
    %v226 = vld [vmem:[%s4 + $0x1c] sm:$0xf]
    %v227 = vpack.c.bf16 %v188, %v187
    %v228 = vlaneseq
    %v229 = vshrl.u32 %v228, 7
    %v230 = vsub.s32 0, %v229
    %v231 = vrot.slane %v33, %v230
    %v236 = vunpack.c.l.b16 %v215
    %v237 = vunpack.c.l.b16 %v216
    %v238 = vunpack.c.l.b16 %v217
    %v239 = vunpack.c.l.b16 %v218
    %v240 = vpack.c.b16 %v237, %v236
    %v241 = vpack.c.b16 %v239, %v238
    %v245 = vsel %vm149, %v227, 0
    %247 = vmatprep.subr.bf16.mxu0 0
    %248 = vmatpush1.bf16.msra.mxu0 %v240
    %249 = vmatprep.subr.bf16.mxu0 0
    %250 = vmatpush1.bf16.msra.mxu0 %v241
    %251 = vmatprep.subr.bf16.mxu0 0
    %252 = vmatpush1.bf16.msra.mxu0 0
    %253 = vmatprep.subr.bf16.mxu0 0
    %254 = vmatpush1.bf16.msra.mxu0 0
    %255 = vmatprep.subr.bf16.mxu0 0
    %256 = vmatpush1.bf16.msra.mxu0 0
    %257 = vmatprep.subr.bf16.mxu0 0
    %258 = vmatpush1.bf16.msra.mxu0 0
    %259 = vmatprep.subr.bf16.mxu0 0
    %260 = vmatpush1.bf16.msra.mxu0 0
    %261 = vmatprep.subr.bf16.mxu0 0
    %262 = vmatpush1.bf16.msra.mxu0 0
    %263 = vmatprep.subr.bf16.mxu0 0
    %264 = vmatpush1.bf16.msra.mxu0 0
    %265 = vmatprep.subr.bf16.mxu0 0
    %266 = vmatpush1.bf16.msra.mxu0 0
    %267 = vmatprep.subr.bf16.mxu0 0
    %268 = vmatpush1.bf16.msra.mxu0 0
    %269 = vmatprep.subr.bf16.mxu0 0
    %270 = vmatpush1.bf16.msra.mxu0 0
    %271 = vmatprep.subr.bf16.mxu0 0
    %272 = vmatpush1.bf16.msra.mxu0 0
    %273 = vmatprep.subr.bf16.mxu0 0
    %274 = vmatpush1.bf16.msra.mxu0 0
    %275 = vmatprep.subr.bf16.mxu0 0
    %276 = vmatpush1.bf16.msra.mxu0 0
    %277 = vmatprep.subr.bf16.mxu0 0
    %278 = vmatpush1.bf16.msra.mxu0 0
    %279 = vmatprep.mubr.bf16.mxu0 0
    %280 = vmatmul.mubr.bf16.gmra.mrb[0].mxu0 %v245
    %v281 = vpop.f32.mrb[0].mxu0
    %v282 = vadd.f32 %v231, %v281
    %v283 = vpop.f32.mrb[0].mxu0
    %v284 = vpop.f32.mrb[0].mxu0
    %v285 = vadd.f32 %v231, %v284
    %v286 = vpop.f32.mrb[0].mxu0
    %287 = vdwg.mxu0
    %290 = vrot.lane.b32.xlu0 %v282, 120
    %v291 = vpop.permute.xlu0 %290
    %292 = vrot.lane.b32.xlu0 %v285, 120
    %v293 = vpop.permute.xlu0 %292
    %296 = vrot.lane.b32.xlu0 %v282, 112
    %v297 = vpop.permute.xlu0 %296
    %298 = vrot.lane.b32.xlu0 %v285, 112
    %v299 = vpop.permute.xlu0 %298
    %302 = vrot.lane.b32.xlu0 %v282, 104
    %v303 = vpop.permute.xlu0 %302
    %304 = vrot.lane.b32.xlu0 %v285, 104
    %v305 = vpop.permute.xlu0 %304
    %v308 = vpack.c.bf16 %v282, %v282
    %v309 = vpack.c.bf16 %v285, %v285
    %v310 = vpack.c.bf16 %v291, %v291
    %v311 = vpack.c.bf16 %v293, %v293
    %v312 = vpack.c.bf16 %v297, %v297
    %v313 = vpack.c.bf16 %v299, %v299
    %v314 = vpack.c.bf16 %v303, %v303
    %v315 = vpack.c.bf16 %v305, %v305
    %v316 = vlaneseq
    %v317 = vshrl.u32 %v316, 7
    %v318 = vsub.s32 0, %v317
    %v319 = vrot.slane %v207, %v318
    %v320 = vlaneseq
    %v321 = vshrl.u32 %v320, 7
    %v322 = vsub.s32 0, %v321
    %v323 = vrot.slane %v214, %v322
    %327 = vrot.lane.b32.xlu0 %v308, 96
    %v328 = vpop.permute.xlu0 %327
    %vm329 = vcmask 64512
    %v331 = vsel %vm329, %v308, 0
    %v334 = vsel %vm329, %v328, 0
    %336 = vmatprep.subr.bf16.mxu0 0
    %337 = vmatpush1.bf16.xpose.msra.mxu0 %v334
    %338 = vmatprep.subr.bf16.mxu0 0
    %339 = vmatpush1.bf16.xpose.msra.mxu0 0
    %340 = vmatprep.subr.bf16.mxu0 0
    %341 = vmatpush1.bf16.xpose.msra.mxu0 0
    %342 = vmatprep.subr.bf16.mxu0 0
    %343 = vmatpush1.bf16.xpose.msra.mxu0 0
    %344 = vmatprep.subr.bf16.mxu0 0
    %345 = vmatpush1.bf16.xpose.msra.mxu0 0
    %346 = vmatprep.subr.bf16.mxu0 0
    %347 = vmatpush1.bf16.xpose.msra.mxu0 0
    %348 = vmatprep.subr.bf16.mxu0 0
    %349 = vmatpush1.bf16.xpose.msra.mxu0 0
    %350 = vmatprep.subr.bf16.mxu0 0
    %351 = vmatpush1.bf16.xpose.msra.mxu0 0
    %352 = vmatprep.subr.bf16.mxu0 0
    %353 = vmatpush1.bf16.xpose.msra.mxu0 0
    %354 = vmatprep.subr.bf16.mxu0 0
    %355 = vmatpush1.bf16.xpose.msra.mxu0 0
    %356 = vmatprep.subr.bf16.mxu0 0
    %357 = vmatpush1.bf16.xpose.msra.mxu0 0
    %358 = vmatprep.subr.bf16.mxu0 0
    %359 = vmatpush1.bf16.xpose.msra.mxu0 0
    %360 = vmatprep.subr.bf16.mxu0 0
    %361 = vmatpush1.bf16.xpose.msra.mxu0 0
    %362 = vmatprep.subr.bf16.mxu0 0
    %363 = vmatpush1.bf16.xpose.msra.mxu0 0
    %364 = vmatprep.subr.bf16.mxu0 0
    %365 = vmatpush1.bf16.xpose.msra.mxu0 0
    %366 = vmatprep.subr.bf16.mxu0 0
    %367 = vmatpush1.bf16.xpose.msra.mxu0 0
    %368 = vmatprep.mubr.bf16.mxu0 0
    %369 = vmatmul.mubr.bf16.gmra.mrb[0].mxu0 %v331
    %v370 = vpop.f32.mrb[0].mxu0
    %v371 = vadd.f32 %v319, %v370
    %v372 = vpop.f32.mrb[0].mxu0
    %v373 = vpop.f32.mrb[0].mxu0
    %v374 = vpop.f32.mrb[0].mxu0
    %375 = vdwg.mxu0
    %377 = vrot.lane.b32.xlu0 %v309, 96
    %v378 = vpop.permute.xlu0 %377
    %v380 = vsel %vm329, %v309, 0
    %v383 = vsel %vm329, %v378, 0
    %385 = vmatprep.subr.bf16.mxu0 0
    %386 = vmatpush1.bf16.xpose.msra.mxu0 %v383
    %387 = vmatprep.subr.bf16.mxu0 0
    %388 = vmatpush1.bf16.xpose.msra.mxu0 0
    %389 = vmatprep.subr.bf16.mxu0 0
    %390 = vmatpush1.bf16.xpose.msra.mxu0 0
    %391 = vmatprep.subr.bf16.mxu0 0
    %392 = vmatpush1.bf16.xpose.msra.mxu0 0
    %393 = vmatprep.subr.bf16.mxu0 0
    %394 = vmatpush1.bf16.xpose.msra.mxu0 0
    %395 = vmatprep.subr.bf16.mxu0 0
    %396 = vmatpush1.bf16.xpose.msra.mxu0 0
    %397 = vmatprep.subr.bf16.mxu0 0
    %398 = vmatpush1.bf16.xpose.msra.mxu0 0
    %399 = vmatprep.subr.bf16.mxu0 0
    %400 = vmatpush1.bf16.xpose.msra.mxu0 0
    %401 = vmatprep.subr.bf16.mxu0 0
    %402 = vmatpush1.bf16.xpose.msra.mxu0 0
    %403 = vmatprep.subr.bf16.mxu0 0
    %404 = vmatpush1.bf16.xpose.msra.mxu0 0
    %405 = vmatprep.subr.bf16.mxu0 0
    %406 = vmatpush1.bf16.xpose.msra.mxu0 0
    %407 = vmatprep.subr.bf16.mxu0 0
    %408 = vmatpush1.bf16.xpose.msra.mxu0 0
    %409 = vmatprep.subr.bf16.mxu0 0
    %410 = vmatpush1.bf16.xpose.msra.mxu0 0
    %411 = vmatprep.subr.bf16.mxu0 0
    %412 = vmatpush1.bf16.xpose.msra.mxu0 0
    %413 = vmatprep.subr.bf16.mxu0 0
    %414 = vmatpush1.bf16.xpose.msra.mxu0 0
    %415 = vmatprep.subr.bf16.mxu0 0
    %416 = vmatpush1.bf16.xpose.msra.mxu0 0
    %417 = vmatprep.mubr.bf16.mxu0 0
    %418 = vmatmul.mubr.bf16.gmra.mrb[0].mxu0 %v380
    %v419 = vpop.f32.mrb[0].mxu0
    %v420 = vadd.f32 %v323, %v419
    %v421 = vpop.f32.mrb[0].mxu0
    %v422 = vpop.f32.mrb[0].mxu0
    %v423 = vpop.f32.mrb[0].mxu0
    %424 = vdwg.mxu0
    %426 = vrot.lane.b32.xlu0 %v310, 96
    %v427 = vpop.permute.xlu0 %426
    %v429 = vsel %vm329, %v310, 0
    %v432 = vsel %vm329, %v427, 0
    %434 = vmatprep.subr.bf16.mxu0 0
    %435 = vmatpush1.bf16.xpose.msra.mxu0 %v432
    %436 = vmatprep.subr.bf16.mxu0 0
    %437 = vmatpush1.bf16.xpose.msra.mxu0 0
    %438 = vmatprep.subr.bf16.mxu0 0
    %439 = vmatpush1.bf16.xpose.msra.mxu0 0
    %440 = vmatprep.subr.bf16.mxu0 0
    %441 = vmatpush1.bf16.xpose.msra.mxu0 0
    %442 = vmatprep.subr.bf16.mxu0 0
    %443 = vmatpush1.bf16.xpose.msra.mxu0 0
    %444 = vmatprep.subr.bf16.mxu0 0
    %445 = vmatpush1.bf16.xpose.msra.mxu0 0
    %446 = vmatprep.subr.bf16.mxu0 0
    %447 = vmatpush1.bf16.xpose.msra.mxu0 0
    %448 = vmatprep.subr.bf16.mxu0 0
    %449 = vmatpush1.bf16.xpose.msra.mxu0 0
    %450 = vmatprep.subr.bf16.mxu0 0
    %451 = vmatpush1.bf16.xpose.msra.mxu0 0
    %452 = vmatprep.subr.bf16.mxu0 0
    %453 = vmatpush1.bf16.xpose.msra.mxu0 0
    %454 = vmatprep.subr.bf16.mxu0 0
    %455 = vmatpush1.bf16.xpose.msra.mxu0 0
    %456 = vmatprep.subr.bf16.mxu0 0
    %457 = vmatpush1.bf16.xpose.msra.mxu0 0
    %458 = vmatprep.subr.bf16.mxu0 0
    %459 = vmatpush1.bf16.xpose.msra.mxu0 0
    %460 = vmatprep.subr.bf16.mxu0 0
    %461 = vmatpush1.bf16.xpose.msra.mxu0 0
    %462 = vmatprep.subr.bf16.mxu0 0
    %463 = vmatpush1.bf16.xpose.msra.mxu0 0
    %464 = vmatprep.subr.bf16.mxu0 0
    %465 = vmatpush1.bf16.xpose.msra.mxu0 0
    %466 = vmatprep.mubr.bf16.mxu0 0
    %467 = vmatmul.mubr.bf16.gmra.mrb[0].mxu0 %v429
    %v468 = vpop.f32.mrb[0].mxu0
    %v469 = vadd.f32 %v319, %v468
    %v470 = vpop.f32.mrb[0].mxu0
    %v471 = vpop.f32.mrb[0].mxu0
    %v472 = vpop.f32.mrb[0].mxu0
    %473 = vdwg.mxu0
    %475 = vrot.lane.b32.xlu0 %v311, 96
    %v476 = vpop.permute.xlu0 %475
    %v478 = vsel %vm329, %v311, 0
    %v481 = vsel %vm329, %v476, 0
    %483 = vmatprep.subr.bf16.mxu0 0
    %484 = vmatpush1.bf16.xpose.msra.mxu0 %v481
    %485 = vmatprep.subr.bf16.mxu0 0
    %486 = vmatpush1.bf16.xpose.msra.mxu0 0
    %487 = vmatprep.subr.bf16.mxu0 0
    %488 = vmatpush1.bf16.xpose.msra.mxu0 0
    %489 = vmatprep.subr.bf16.mxu0 0
    %490 = vmatpush1.bf16.xpose.msra.mxu0 0
    %491 = vmatprep.subr.bf16.mxu0 0
    %492 = vmatpush1.bf16.xpose.msra.mxu0 0
    %493 = vmatprep.subr.bf16.mxu0 0
    %494 = vmatpush1.bf16.xpose.msra.mxu0 0
    %495 = vmatprep.subr.bf16.mxu0 0
    %496 = vmatpush1.bf16.xpose.msra.mxu0 0
    %497 = vmatprep.subr.bf16.mxu0 0
    %498 = vmatpush1.bf16.xpose.msra.mxu0 0
    %499 = vmatprep.subr.bf16.mxu0 0
    %500 = vmatpush1.bf16.xpose.msra.mxu0 0
    %501 = vmatprep.subr.bf16.mxu0 0
    %502 = vmatpush1.bf16.xpose.msra.mxu0 0
    %503 = vmatprep.subr.bf16.mxu0 0
    %504 = vmatpush1.bf16.xpose.msra.mxu0 0
    %505 = vmatprep.subr.bf16.mxu0 0
    %506 = vmatpush1.bf16.xpose.msra.mxu0 0
    %507 = vmatprep.subr.bf16.mxu0 0
    %508 = vmatpush1.bf16.xpose.msra.mxu0 0
    %509 = vmatprep.subr.bf16.mxu0 0
    %510 = vmatpush1.bf16.xpose.msra.mxu0 0
    %511 = vmatprep.subr.bf16.mxu0 0
    %512 = vmatpush1.bf16.xpose.msra.mxu0 0
    %513 = vmatprep.subr.bf16.mxu0 0
    %514 = vmatpush1.bf16.xpose.msra.mxu0 0
    %515 = vmatprep.mubr.bf16.mxu0 0
    %516 = vmatmul.mubr.bf16.gmra.mrb[0].mxu0 %v478
    %v517 = vpop.f32.mrb[0].mxu0
    %v518 = vadd.f32 %v323, %v517
    %v519 = vpop.f32.mrb[0].mxu0
    %v520 = vpop.f32.mrb[0].mxu0
    %v521 = vpop.f32.mrb[0].mxu0
    %522 = vdwg.mxu0
    %524 = vrot.lane.b32.xlu0 %v312, 96
    %v525 = vpop.permute.xlu0 %524
    %v527 = vsel %vm329, %v312, 0
    %v530 = vsel %vm329, %v525, 0
    %532 = vmatprep.subr.bf16.mxu0 0
    %533 = vmatpush1.bf16.xpose.msra.mxu0 %v530
    %534 = vmatprep.subr.bf16.mxu0 0
    %535 = vmatpush1.bf16.xpose.msra.mxu0 0
    %536 = vmatprep.subr.bf16.mxu0 0
    %537 = vmatpush1.bf16.xpose.msra.mxu0 0
    %538 = vmatprep.subr.bf16.mxu0 0
    %539 = vmatpush1.bf16.xpose.msra.mxu0 0
    %540 = vmatprep.subr.bf16.mxu0 0
    %541 = vmatpush1.bf16.xpose.msra.mxu0 0
    %542 = vmatprep.subr.bf16.mxu0 0
    %543 = vmatpush1.bf16.xpose.msra.mxu0 0
    %544 = vmatprep.subr.bf16.mxu0 0
    %545 = vmatpush1.bf16.xpose.msra.mxu0 0
    %546 = vmatprep.subr.bf16.mxu0 0
    %547 = vmatpush1.bf16.xpose.msra.mxu0 0
    %548 = vmatprep.subr.bf16.mxu0 0
    %549 = vmatpush1.bf16.xpose.msra.mxu0 0
    %550 = vmatprep.subr.bf16.mxu0 0
    %551 = vmatpush1.bf16.xpose.msra.mxu0 0
    %552 = vmatprep.subr.bf16.mxu0 0
    %553 = vmatpush1.bf16.xpose.msra.mxu0 0
    %554 = vmatprep.subr.bf16.mxu0 0
    %555 = vmatpush1.bf16.xpose.msra.mxu0 0
    %556 = vmatprep.subr.bf16.mxu0 0
    %557 = vmatpush1.bf16.xpose.msra.mxu0 0
    %558 = vmatprep.subr.bf16.mxu0 0
    %559 = vmatpush1.bf16.xpose.msra.mxu0 0
    %560 = vmatprep.subr.bf16.mxu0 0
    %561 = vmatpush1.bf16.xpose.msra.mxu0 0
    %562 = vmatprep.subr.bf16.mxu0 0
    %563 = vmatpush1.bf16.xpose.msra.mxu0 0
    %564 = vmatprep.mubr.bf16.mxu0 0
    %565 = vmatmul.mubr.bf16.gmra.mrb[0].mxu0 %v527
    %v566 = vpop.f32.mrb[0].mxu0
    %v567 = vadd.f32 %v319, %v566
    %v568 = vpop.f32.mrb[0].mxu0
    %v569 = vpop.f32.mrb[0].mxu0
    %v570 = vpop.f32.mrb[0].mxu0
    %571 = vdwg.mxu0
    %573 = vrot.lane.b32.xlu0 %v313, 96
    %v574 = vpop.permute.xlu0 %573
    %v576 = vsel %vm329, %v313, 0
    %v579 = vsel %vm329, %v574, 0
    %581 = vmatprep.subr.bf16.mxu0 0
    %582 = vmatpush1.bf16.xpose.msra.mxu0 %v579
    %583 = vmatprep.subr.bf16.mxu0 0
    %584 = vmatpush1.bf16.xpose.msra.mxu0 0
    %585 = vmatprep.subr.bf16.mxu0 0
    %586 = vmatpush1.bf16.xpose.msra.mxu0 0
    %587 = vmatprep.subr.bf16.mxu0 0
    %588 = vmatpush1.bf16.xpose.msra.mxu0 0
    %589 = vmatprep.subr.bf16.mxu0 0
    %590 = vmatpush1.bf16.xpose.msra.mxu0 0
    %591 = vmatprep.subr.bf16.mxu0 0
    %592 = vmatpush1.bf16.xpose.msra.mxu0 0
    %593 = vmatprep.subr.bf16.mxu0 0
    %594 = vmatpush1.bf16.xpose.msra.mxu0 0
    %595 = vmatprep.subr.bf16.mxu0 0
    %596 = vmatpush1.bf16.xpose.msra.mxu0 0
    %597 = vmatprep.subr.bf16.mxu0 0
    %598 = vmatpush1.bf16.xpose.msra.mxu0 0
    %599 = vmatprep.subr.bf16.mxu0 0
    %600 = vmatpush1.bf16.xpose.msra.mxu0 0
    %601 = vmatprep.subr.bf16.mxu0 0
    %602 = vmatpush1.bf16.xpose.msra.mxu0 0
    %603 = vmatprep.subr.bf16.mxu0 0
    %604 = vmatpush1.bf16.xpose.msra.mxu0 0
    %605 = vmatprep.subr.bf16.mxu0 0
    %606 = vmatpush1.bf16.xpose.msra.mxu0 0
    %607 = vmatprep.subr.bf16.mxu0 0
    %608 = vmatpush1.bf16.xpose.msra.mxu0 0
    %609 = vmatprep.subr.bf16.mxu0 0
    %610 = vmatpush1.bf16.xpose.msra.mxu0 0
    %611 = vmatprep.subr.bf16.mxu0 0
    %612 = vmatpush1.bf16.xpose.msra.mxu0 0
    %613 = vmatprep.mubr.bf16.mxu0 0
    %614 = vmatmul.mubr.bf16.gmra.mrb[0].mxu0 %v576
    %v615 = vpop.f32.mrb[0].mxu0
    %v616 = vadd.f32 %v323, %v615
    %v617 = vpop.f32.mrb[0].mxu0
    %v618 = vpop.f32.mrb[0].mxu0
    %v619 = vpop.f32.mrb[0].mxu0
    %620 = vdwg.mxu0
    %622 = vrot.lane.b32.xlu0 %v314, 96
    %v623 = vpop.permute.xlu0 %622
    %v625 = vsel %vm329, %v314, 0
    %v628 = vsel %vm329, %v623, 0
    %630 = vmatprep.subr.bf16.mxu0 0
    %631 = vmatpush1.bf16.xpose.msra.mxu0 %v628
    %632 = vmatprep.subr.bf16.mxu0 0
    %633 = vmatpush1.bf16.xpose.msra.mxu0 0
    %634 = vmatprep.subr.bf16.mxu0 0
    %635 = vmatpush1.bf16.xpose.msra.mxu0 0
    %636 = vmatprep.subr.bf16.mxu0 0
    %637 = vmatpush1.bf16.xpose.msra.mxu0 0
    %638 = vmatprep.subr.bf16.mxu0 0
    %639 = vmatpush1.bf16.xpose.msra.mxu0 0
    %640 = vmatprep.subr.bf16.mxu0 0
    %641 = vmatpush1.bf16.xpose.msra.mxu0 0
    %642 = vmatprep.subr.bf16.mxu0 0
    %643 = vmatpush1.bf16.xpose.msra.mxu0 0
    %644 = vmatprep.subr.bf16.mxu0 0
    %645 = vmatpush1.bf16.xpose.msra.mxu0 0
    %646 = vmatprep.subr.bf16.mxu0 0
    %647 = vmatpush1.bf16.xpose.msra.mxu0 0
    %648 = vmatprep.subr.bf16.mxu0 0
    %649 = vmatpush1.bf16.xpose.msra.mxu0 0
    %650 = vmatprep.subr.bf16.mxu0 0
    %651 = vmatpush1.bf16.xpose.msra.mxu0 0
    %652 = vmatprep.subr.bf16.mxu0 0
    %653 = vmatpush1.bf16.xpose.msra.mxu0 0
    %654 = vmatprep.subr.bf16.mxu0 0
    %655 = vmatpush1.bf16.xpose.msra.mxu0 0
    %656 = vmatprep.subr.bf16.mxu0 0
    %657 = vmatpush1.bf16.xpose.msra.mxu0 0
    %658 = vmatprep.subr.bf16.mxu0 0
    %659 = vmatpush1.bf16.xpose.msra.mxu0 0
    %660 = vmatprep.subr.bf16.mxu0 0
    %661 = vmatpush1.bf16.xpose.msra.mxu0 0
    %662 = vmatprep.mubr.bf16.mxu0 0
    %663 = vmatmul.mubr.bf16.gmra.mrb[0].mxu0 %v625
    %v664 = vpop.f32.mrb[0].mxu0
    %v665 = vadd.f32 %v319, %v664
    %v666 = vpop.f32.mrb[0].mxu0
    %v667 = vpop.f32.mrb[0].mxu0
    %v668 = vpop.f32.mrb[0].mxu0
    %669 = vdwg.mxu0
    %671 = vrot.lane.b32.xlu0 %v315, 96
    %v672 = vpop.permute.xlu0 %671
    %v674 = vsel %vm329, %v315, 0
    %v677 = vsel %vm329, %v672, 0
    %679 = vmatprep.subr.bf16.mxu0 0
    %680 = vmatpush1.bf16.xpose.msra.mxu0 %v677
    %681 = vmatprep.subr.bf16.mxu0 0
    %682 = vmatpush1.bf16.xpose.msra.mxu0 0
    %683 = vmatprep.subr.bf16.mxu0 0
    %684 = vmatpush1.bf16.xpose.msra.mxu0 0
    %685 = vmatprep.subr.bf16.mxu0 0
    %686 = vmatpush1.bf16.xpose.msra.mxu0 0
    %687 = vmatprep.subr.bf16.mxu0 0
    %688 = vmatpush1.bf16.xpose.msra.mxu0 0
    %689 = vmatprep.subr.bf16.mxu0 0
    %690 = vmatpush1.bf16.xpose.msra.mxu0 0
    %691 = vmatprep.subr.bf16.mxu0 0
    %692 = vmatpush1.bf16.xpose.msra.mxu0 0
    %693 = vmatprep.subr.bf16.mxu0 0
    %694 = vmatpush1.bf16.xpose.msra.mxu0 0
    %695 = vmatprep.subr.bf16.mxu0 0
    %696 = vmatpush1.bf16.xpose.msra.mxu0 0
    %697 = vmatprep.subr.bf16.mxu0 0
    %698 = vmatpush1.bf16.xpose.msra.mxu0 0
    %699 = vmatprep.subr.bf16.mxu0 0
    %700 = vmatpush1.bf16.xpose.msra.mxu0 0
    %701 = vmatprep.subr.bf16.mxu0 0
    %702 = vmatpush1.bf16.xpose.msra.mxu0 0
    %703 = vmatprep.subr.bf16.mxu0 0
    %704 = vmatpush1.bf16.xpose.msra.mxu0 0
    %705 = vmatprep.subr.bf16.mxu0 0
    %706 = vmatpush1.bf16.xpose.msra.mxu0 0
    %707 = vmatprep.subr.bf16.mxu0 0
    %708 = vmatpush1.bf16.xpose.msra.mxu0 0
    %709 = vmatprep.subr.bf16.mxu0 0
    %710 = vmatpush1.bf16.xpose.msra.mxu0 0
    %711 = vmatprep.mubr.bf16.mxu0 0
    %712 = vmatmul.mubr.bf16.gmra.mrb[0].mxu0 %v674
    %v713 = vpop.f32.mrb[0].mxu0
    %v714 = vadd.f32 %v323, %v713
    %v715 = vpop.f32.mrb[0].mxu0
    %v716 = vpop.f32.mrb[0].mxu0
    %v717 = vpop.f32.mrb[0].mxu0
    %718 = vdwg.mxu0
    %v719 = vsel %vm329, %v371, -inf
    %720 = vmax.xlane.f32.xlu0 %v719
    %v721 = vpop.xlane.xlu0 %720
    %v722 = vsel %vm329, %v420, -inf
    %723 = vmax.xlane.f32.xlu0 %v722
    %v724 = vpop.xlane.xlu0 %723
    %v725 = vsel %vm329, %v469, -inf
    %726 = vmax.xlane.f32.xlu0 %v725
    %v727 = vpop.xlane.xlu0 %726
    %v728 = vsel %vm329, %v518, -inf
    %729 = vmax.xlane.f32.xlu0 %v728
    %v730 = vpop.xlane.xlu0 %729
    %v731 = vsel %vm329, %v567, -inf
    %732 = vmax.xlane.f32.xlu0 %v731
    %v733 = vpop.xlane.xlu0 %732
    %v734 = vsel %vm329, %v616, -inf
    %735 = vmax.xlane.f32.xlu0 %v734
    %v736 = vpop.xlane.xlu0 %735
    %v737 = vsel %vm329, %v665, -inf
    %738 = vmax.xlane.f32.xlu0 %v737
    %v739 = vpop.xlane.xlu0 %738
    %v740 = vsel %vm329, %v714, -inf
    %741 = vmax.xlane.f32.xlu0 %v740
    %v742 = vpop.xlane.xlu0 %741
    %v743 = vsub.f32 %v371, %v721
    %v744 = vsub.f32 %v420, %v724
    %v745 = vsub.f32 %v469, %v727
    %v746 = vsub.f32 %v518, %v730
    %v747 = vsub.f32 %v567, %v733
    %v748 = vsub.f32 %v616, %v736
    %v749 = vsub.f32 %v665, %v739
    %v750 = vsub.f32 %v714, %v742
    %v751 = vmul.f32 %v743, 1.442695
    %v752 = vpow.pop %v751
    %v753 = vmul.f32 %v744, 1.442695
    %v754 = vpow.pop %v753
    %v755 = vmul.f32 %v745, 1.442695
    %v756 = vpow.pop %v755
    %v757 = vmul.f32 %v746, 1.442695
    %v758 = vpow.pop %v757
    %v759 = vmul.f32 %v747, 1.442695
    %v760 = vpow.pop %v759
    %v761 = vmul.f32 %v748, 1.442695
    %v762 = vpow.pop %v761
    %v763 = vmul.f32 %v749, 1.442695
    %v764 = vpow.pop %v763
    %v765 = vmul.f32 %v750, 1.442695
    %v766 = vpow.pop %v765
    %v767 = vsel %vm329, %v752, 0.0
    %768 = vadd.xlane.f32.xlu0 %v767
    %v769 = vpop.xlane.xlu0 %768
    %v770 = vsel %vm329, %v754, 0.0
    %771 = vadd.xlane.f32.xlu0 %v770
    %v772 = vpop.xlane.xlu0 %771
    %v773 = vsel %vm329, %v756, 0.0
    %774 = vadd.xlane.f32.xlu0 %v773
    %v775 = vpop.xlane.xlu0 %774
    %v776 = vsel %vm329, %v758, 0.0
    %777 = vadd.xlane.f32.xlu0 %v776
    %v778 = vpop.xlane.xlu0 %777
    %v779 = vsel %vm329, %v760, 0.0
    %780 = vadd.xlane.f32.xlu0 %v779
    %v781 = vpop.xlane.xlu0 %780
    %v782 = vsel %vm329, %v762, 0.0
    %783 = vadd.xlane.f32.xlu0 %v782
    %v784 = vpop.xlane.xlu0 %783
    %v785 = vsel %vm329, %v764, 0.0
    %786 = vadd.xlane.f32.xlu0 %v785
    %v787 = vpop.xlane.xlu0 %786
    %v788 = vsel %vm329, %v766, 0.0
    %789 = vadd.xlane.f32.xlu0 %v788
    %v790 = vpop.xlane.xlu0 %789
    %v791 = vrcp.pop %v769
    %v792 = vrcp.pop %v772
    %v793 = vrcp.pop %v775
    %v794 = vrcp.pop %v778
    %v795 = vrcp.pop %v781
    %v796 = vrcp.pop %v784
    %v797 = vrcp.pop %v787
    %v798 = vrcp.pop %v790
    %v799 = vmul.f32 %v752, %v791
    %v800 = vmul.f32 %v754, %v792
    %v801 = vmul.f32 %v756, %v793
    %v802 = vmul.f32 %v758, %v794
    %v803 = vmul.f32 %v760, %v795
    %v804 = vmul.f32 %v762, %v796
    %v805 = vmul.f32 %v764, %v797
    %v806 = vmul.f32 %v766, %v798
    %v807 = vpack.c.bf16 %v799, %v799
    %v808 = vpack.c.bf16 %v800, %v800
    %v809 = vpack.c.bf16 %v801, %v801
    %v810 = vpack.c.bf16 %v802, %v802
    %v811 = vpack.c.bf16 %v803, %v803
    %v812 = vpack.c.bf16 %v804, %v804
    %v813 = vpack.c.bf16 %v805, %v805
    %v814 = vpack.c.bf16 %v806, %v806
    %815 = vrot.lane.b32.xlu0 %v308, 64
    %v816 = vpop.permute.xlu0 %815
    %v818 = vsel %vm329, %v807, 0
    %vm820 = vcmask 1043456
    %v822 = vsel %vm820, %v816, 0
    %824 = vmatprep.subr.bf16.mxu0 0
    %825 = vmatpush1.bf16.msra.mxu0 %v822
    %826 = vmatprep.subr.bf16.mxu0 0
    %827 = vmatpush1.bf16.msra.mxu0 0
    %828 = vmatprep.subr.bf16.mxu0 0
    %829 = vmatpush1.bf16.msra.mxu0 0
    %830 = vmatprep.subr.bf16.mxu0 0
    %831 = vmatpush1.bf16.msra.mxu0 0
    %832 = vmatprep.subr.bf16.mxu0 0
    %833 = vmatpush1.bf16.msra.mxu0 0
    %834 = vmatprep.subr.bf16.mxu0 0
    %835 = vmatpush1.bf16.msra.mxu0 0
    %836 = vmatprep.subr.bf16.mxu0 0
    %837 = vmatpush1.bf16.msra.mxu0 0
    %838 = vmatprep.subr.bf16.mxu0 0
    %839 = vmatpush1.bf16.msra.mxu0 0
    %840 = vmatprep.subr.bf16.mxu0 0
    %841 = vmatpush1.bf16.msra.mxu0 0
    %842 = vmatprep.subr.bf16.mxu0 0
    %843 = vmatpush1.bf16.msra.mxu0 0
    %844 = vmatprep.subr.bf16.mxu0 0
    %845 = vmatpush1.bf16.msra.mxu0 0
    %846 = vmatprep.subr.bf16.mxu0 0
    %847 = vmatpush1.bf16.msra.mxu0 0
    %848 = vmatprep.subr.bf16.mxu0 0
    %849 = vmatpush1.bf16.msra.mxu0 0
    %850 = vmatprep.subr.bf16.mxu0 0
    %851 = vmatpush1.bf16.msra.mxu0 0
    %852 = vmatprep.subr.bf16.mxu0 0
    %853 = vmatpush1.bf16.msra.mxu0 0
    %854 = vmatprep.subr.bf16.mxu0 0
    %855 = vmatpush1.bf16.msra.mxu0 0
    %856 = vmatprep.mubr.bf16.mxu0 0
    %857 = vmatmul.mubr.bf16.gmra.mrb[0].mxu0 %v818
    %v858 = vpop.f32.mrb[0].mxu0
    %v859 = vadd.f32 0.0, %v858
    %v860 = vpop.f32.mrb[0].mxu0
    %v861 = vpop.f32.mrb[0].mxu0
    %v862 = vpop.f32.mrb[0].mxu0
    %863 = vdwg.mxu0
    %864 = vrot.lane.b32.xlu0 %v309, 64
    %v865 = vpop.permute.xlu0 %864
    %v867 = vsel %vm329, %v808, 0
    %v870 = vsel %vm820, %v865, 0
    %872 = vmatprep.subr.bf16.mxu0 0
    %873 = vmatpush1.bf16.msra.mxu0 %v870
    %874 = vmatprep.subr.bf16.mxu0 0
    %875 = vmatpush1.bf16.msra.mxu0 0
    %876 = vmatprep.subr.bf16.mxu0 0
    %877 = vmatpush1.bf16.msra.mxu0 0
    %878 = vmatprep.subr.bf16.mxu0 0
    %879 = vmatpush1.bf16.msra.mxu0 0
    %880 = vmatprep.subr.bf16.mxu0 0
    %881 = vmatpush1.bf16.msra.mxu0 0
    %882 = vmatprep.subr.bf16.mxu0 0
    %883 = vmatpush1.bf16.msra.mxu0 0
    %884 = vmatprep.subr.bf16.mxu0 0
    %885 = vmatpush1.bf16.msra.mxu0 0
    %886 = vmatprep.subr.bf16.mxu0 0
    %887 = vmatpush1.bf16.msra.mxu0 0
    %888 = vmatprep.subr.bf16.mxu0 0
    %889 = vmatpush1.bf16.msra.mxu0 0
    %890 = vmatprep.subr.bf16.mxu0 0
    %891 = vmatpush1.bf16.msra.mxu0 0
    %892 = vmatprep.subr.bf16.mxu0 0
    %893 = vmatpush1.bf16.msra.mxu0 0
    %894 = vmatprep.subr.bf16.mxu0 0
    %895 = vmatpush1.bf16.msra.mxu0 0
    %896 = vmatprep.subr.bf16.mxu0 0
    %897 = vmatpush1.bf16.msra.mxu0 0
    %898 = vmatprep.subr.bf16.mxu0 0
    %899 = vmatpush1.bf16.msra.mxu0 0
    %900 = vmatprep.subr.bf16.mxu0 0
    %901 = vmatpush1.bf16.msra.mxu0 0
    %902 = vmatprep.subr.bf16.mxu0 0
    %903 = vmatpush1.bf16.msra.mxu0 0
    %904 = vmatprep.mubr.bf16.mxu0 0
    %905 = vmatmul.mubr.bf16.gmra.mrb[0].mxu0 %v867
    %v906 = vpop.f32.mrb[0].mxu0
    %v907 = vadd.f32 0.0, %v906
    %v908 = vpop.f32.mrb[0].mxu0
    %v909 = vpop.f32.mrb[0].mxu0
    %v910 = vpop.f32.mrb[0].mxu0
    %911 = vdwg.mxu0
    %912 = vrot.lane.b32.xlu0 %v310, 64
    %v913 = vpop.permute.xlu0 %912
    %v915 = vsel %vm329, %v809, 0
    %v918 = vsel %vm820, %v913, 0
    %920 = vmatprep.subr.bf16.mxu0 0
    %921 = vmatpush1.bf16.msra.mxu0 %v918
    %922 = vmatprep.subr.bf16.mxu0 0
    %923 = vmatpush1.bf16.msra.mxu0 0
    %924 = vmatprep.subr.bf16.mxu0 0
    %925 = vmatpush1.bf16.msra.mxu0 0
    %926 = vmatprep.subr.bf16.mxu0 0
    %927 = vmatpush1.bf16.msra.mxu0 0
    %928 = vmatprep.subr.bf16.mxu0 0
    %929 = vmatpush1.bf16.msra.mxu0 0
    %930 = vmatprep.subr.bf16.mxu0 0
    %931 = vmatpush1.bf16.msra.mxu0 0
    %932 = vmatprep.subr.bf16.mxu0 0
    %933 = vmatpush1.bf16.msra.mxu0 0
    %934 = vmatprep.subr.bf16.mxu0 0
    %935 = vmatpush1.bf16.msra.mxu0 0
    %936 = vmatprep.subr.bf16.mxu0 0
    %937 = vmatpush1.bf16.msra.mxu0 0
    %938 = vmatprep.subr.bf16.mxu0 0
    %939 = vmatpush1.bf16.msra.mxu0 0
    %940 = vmatprep.subr.bf16.mxu0 0
    %941 = vmatpush1.bf16.msra.mxu0 0
    %942 = vmatprep.subr.bf16.mxu0 0
    %943 = vmatpush1.bf16.msra.mxu0 0
    %944 = vmatprep.subr.bf16.mxu0 0
    %945 = vmatpush1.bf16.msra.mxu0 0
    %946 = vmatprep.subr.bf16.mxu0 0
    %947 = vmatpush1.bf16.msra.mxu0 0
    %948 = vmatprep.subr.bf16.mxu0 0
    %949 = vmatpush1.bf16.msra.mxu0 0
    %950 = vmatprep.subr.bf16.mxu0 0
    %951 = vmatpush1.bf16.msra.mxu0 0
    %952 = vmatprep.mubr.bf16.mxu0 0
    %953 = vmatmul.mubr.bf16.gmra.mrb[0].mxu0 %v915
    %v954 = vpop.f32.mrb[0].mxu0
    %v955 = vadd.f32 0.0, %v954
    %v956 = vpop.f32.mrb[0].mxu0
    %v957 = vpop.f32.mrb[0].mxu0
    %v958 = vpop.f32.mrb[0].mxu0
    %959 = vdwg.mxu0
    %960 = vrot.lane.b32.xlu0 %v311, 64
    %v961 = vpop.permute.xlu0 %960
    %v963 = vsel %vm329, %v810, 0
    %v966 = vsel %vm820, %v961, 0
    %968 = vmatprep.subr.bf16.mxu0 0
    %969 = vmatpush1.bf16.msra.mxu0 %v966
    %970 = vmatprep.subr.bf16.mxu0 0
    %971 = vmatpush1.bf16.msra.mxu0 0
    %972 = vmatprep.subr.bf16.mxu0 0
    %973 = vmatpush1.bf16.msra.mxu0 0
    %974 = vmatprep.subr.bf16.mxu0 0
    %975 = vmatpush1.bf16.msra.mxu0 0
    %976 = vmatprep.subr.bf16.mxu0 0
    %977 = vmatpush1.bf16.msra.mxu0 0
    %978 = vmatprep.subr.bf16.mxu0 0
    %979 = vmatpush1.bf16.msra.mxu0 0
    %980 = vmatprep.subr.bf16.mxu0 0
    %981 = vmatpush1.bf16.msra.mxu0 0
    %982 = vmatprep.subr.bf16.mxu0 0
    %983 = vmatpush1.bf16.msra.mxu0 0
    %984 = vmatprep.subr.bf16.mxu0 0
    %985 = vmatpush1.bf16.msra.mxu0 0
    %986 = vmatprep.subr.bf16.mxu0 0
    %987 = vmatpush1.bf16.msra.mxu0 0
    %988 = vmatprep.subr.bf16.mxu0 0
    %989 = vmatpush1.bf16.msra.mxu0 0
    %990 = vmatprep.subr.bf16.mxu0 0
    %991 = vmatpush1.bf16.msra.mxu0 0
    %992 = vmatprep.subr.bf16.mxu0 0
    %993 = vmatpush1.bf16.msra.mxu0 0
    %994 = vmatprep.subr.bf16.mxu0 0
    %995 = vmatpush1.bf16.msra.mxu0 0
    %996 = vmatprep.subr.bf16.mxu0 0
    %997 = vmatpush1.bf16.msra.mxu0 0
    %998 = vmatprep.subr.bf16.mxu0 0
    %999 = vmatpush1.bf16.msra.mxu0 0
    %1000 = vmatprep.mubr.bf16.mxu0 0
    %1001 = vmatmul.mubr.bf16.gmra.mrb[0].mxu0 %v963
    %v1002 = vpop.f32.mrb[0].mxu0
    %v1003 = vadd.f32 0.0, %v1002
    %v1004 = vpop.f32.mrb[0].mxu0
    %v1005 = vpop.f32.mrb[0].mxu0
    %v1006 = vpop.f32.mrb[0].mxu0
    %1007 = vdwg.mxu0
    %1008 = vrot.lane.b32.xlu0 %v312, 64
    %v1009 = vpop.permute.xlu0 %1008
    %v1011 = vsel %vm329, %v811, 0
    %v1014 = vsel %vm820, %v1009, 0
    %1016 = vmatprep.subr.bf16.mxu0 0
    %1017 = vmatpush1.bf16.msra.mxu0 %v1014
    %1018 = vmatprep.subr.bf16.mxu0 0
    %1019 = vmatpush1.bf16.msra.mxu0 0
    %1020 = vmatprep.subr.bf16.mxu0 0
    %1021 = vmatpush1.bf16.msra.mxu0 0
    %1022 = vmatprep.subr.bf16.mxu0 0
    %1023 = vmatpush1.bf16.msra.mxu0 0
    %1024 = vmatprep.subr.bf16.mxu0 0
    %1025 = vmatpush1.bf16.msra.mxu0 0
    %1026 = vmatprep.subr.bf16.mxu0 0
    %1027 = vmatpush1.bf16.msra.mxu0 0
    %1028 = vmatprep.subr.bf16.mxu0 0
    %1029 = vmatpush1.bf16.msra.mxu0 0
    %1030 = vmatprep.subr.bf16.mxu0 0
    %1031 = vmatpush1.bf16.msra.mxu0 0
    %1032 = vmatprep.subr.bf16.mxu0 0
    %1033 = vmatpush1.bf16.msra.mxu0 0
    %1034 = vmatprep.subr.bf16.mxu0 0
    %1035 = vmatpush1.bf16.msra.mxu0 0
    %1036 = vmatprep.subr.bf16.mxu0 0
    %1037 = vmatpush1.bf16.msra.mxu0 0
    %1038 = vmatprep.subr.bf16.mxu0 0
    %1039 = vmatpush1.bf16.msra.mxu0 0
    %1040 = vmatprep.subr.bf16.mxu0 0
    %1041 = vmatpush1.bf16.msra.mxu0 0
    %1042 = vmatprep.subr.bf16.mxu0 0
    %1043 = vmatpush1.bf16.msra.mxu0 0
    %1044 = vmatprep.subr.bf16.mxu0 0
    %1045 = vmatpush1.bf16.msra.mxu0 0
    %1046 = vmatprep.subr.bf16.mxu0 0
    %1047 = vmatpush1.bf16.msra.mxu0 0
    %1048 = vmatprep.mubr.bf16.mxu0 0
    %1049 = vmatmul.mubr.bf16.gmra.mrb[0].mxu0 %v1011
    %v1050 = vpop.f32.mrb[0].mxu0
    %v1051 = vadd.f32 0.0, %v1050
    %v1052 = vpop.f32.mrb[0].mxu0
    %v1053 = vpop.f32.mrb[0].mxu0
    %v1054 = vpop.f32.mrb[0].mxu0
    %1055 = vdwg.mxu0
    %1056 = vrot.lane.b32.xlu0 %v313, 64
    %v1057 = vpop.permute.xlu0 %1056
    %v1059 = vsel %vm329, %v812, 0
    %v1062 = vsel %vm820, %v1057, 0
    %1064 = vmatprep.subr.bf16.mxu0 0
    %1065 = vmatpush1.bf16.msra.mxu0 %v1062
    %1066 = vmatprep.subr.bf16.mxu0 0
    %1067 = vmatpush1.bf16.msra.mxu0 0
    %1068 = vmatprep.subr.bf16.mxu0 0
    %1069 = vmatpush1.bf16.msra.mxu0 0
    %1070 = vmatprep.subr.bf16.mxu0 0
    %1071 = vmatpush1.bf16.msra.mxu0 0
    %1072 = vmatprep.subr.bf16.mxu0 0
    %1073 = vmatpush1.bf16.msra.mxu0 0
    %1074 = vmatprep.subr.bf16.mxu0 0
    %1075 = vmatpush1.bf16.msra.mxu0 0
    %1076 = vmatprep.subr.bf16.mxu0 0
    %1077 = vmatpush1.bf16.msra.mxu0 0
    %1078 = vmatprep.subr.bf16.mxu0 0
    %1079 = vmatpush1.bf16.msra.mxu0 0
    %1080 = vmatprep.subr.bf16.mxu0 0
    %1081 = vmatpush1.bf16.msra.mxu0 0
    %1082 = vmatprep.subr.bf16.mxu0 0
    %1083 = vmatpush1.bf16.msra.mxu0 0
    %1084 = vmatprep.subr.bf16.mxu0 0
    %1085 = vmatpush1.bf16.msra.mxu0 0
    %1086 = vmatprep.subr.bf16.mxu0 0
    %1087 = vmatpush1.bf16.msra.mxu0 0
    %1088 = vmatprep.subr.bf16.mxu0 0
    %1089 = vmatpush1.bf16.msra.mxu0 0
    %1090 = vmatprep.subr.bf16.mxu0 0
    %1091 = vmatpush1.bf16.msra.mxu0 0
    %1092 = vmatprep.subr.bf16.mxu0 0
    %1093 = vmatpush1.bf16.msra.mxu0 0
    %1094 = vmatprep.subr.bf16.mxu0 0
    %1095 = vmatpush1.bf16.msra.mxu0 0
    %1096 = vmatprep.mubr.bf16.mxu0 0
    %1097 = vmatmul.mubr.bf16.gmra.mrb[0].mxu0 %v1059
    %v1098 = vpop.f32.mrb[0].mxu0
    %v1099 = vadd.f32 0.0, %v1098
    %v1100 = vpop.f32.mrb[0].mxu0
    %v1101 = vpop.f32.mrb[0].mxu0
    %v1102 = vpop.f32.mrb[0].mxu0
    %1103 = vdwg.mxu0
    %1104 = vrot.lane.b32.xlu0 %v314, 64
    %v1105 = vpop.permute.xlu0 %1104
    %v1107 = vsel %vm329, %v813, 0
    %v1110 = vsel %vm820, %v1105, 0
    %1112 = vmatprep.subr.bf16.mxu0 0
    %1113 = vmatpush1.bf16.msra.mxu0 %v1110
    %1114 = vmatprep.subr.bf16.mxu0 0
    %1115 = vmatpush1.bf16.msra.mxu0 0
    %1116 = vmatprep.subr.bf16.mxu0 0
    %1117 = vmatpush1.bf16.msra.mxu0 0
    %1118 = vmatprep.subr.bf16.mxu0 0
    %1119 = vmatpush1.bf16.msra.mxu0 0
    %1120 = vmatprep.subr.bf16.mxu0 0
    %1121 = vmatpush1.bf16.msra.mxu0 0
    %1122 = vmatprep.subr.bf16.mxu0 0
    %1123 = vmatpush1.bf16.msra.mxu0 0
    %1124 = vmatprep.subr.bf16.mxu0 0
    %1125 = vmatpush1.bf16.msra.mxu0 0
    %1126 = vmatprep.subr.bf16.mxu0 0
    %1127 = vmatpush1.bf16.msra.mxu0 0
    %1128 = vmatprep.subr.bf16.mxu0 0
    %1129 = vmatpush1.bf16.msra.mxu0 0
    %1130 = vmatprep.subr.bf16.mxu0 0
    %1131 = vmatpush1.bf16.msra.mxu0 0
    %1132 = vmatprep.subr.bf16.mxu0 0
    %1133 = vmatpush1.bf16.msra.mxu0 0
    %1134 = vmatprep.subr.bf16.mxu0 0
    %1135 = vmatpush1.bf16.msra.mxu0 0
    %1136 = vmatprep.subr.bf16.mxu0 0
    %1137 = vmatpush1.bf16.msra.mxu0 0
    %1138 = vmatprep.subr.bf16.mxu0 0
    %1139 = vmatpush1.bf16.msra.mxu0 0
    %1140 = vmatprep.subr.bf16.mxu0 0
    %1141 = vmatpush1.bf16.msra.mxu0 0
    %1142 = vmatprep.subr.bf16.mxu0 0
    %1143 = vmatpush1.bf16.msra.mxu0 0
    %1144 = vmatprep.mubr.bf16.mxu0 0
    %1145 = vmatmul.mubr.bf16.gmra.mrb[0].mxu0 %v1107
    %v1146 = vpop.f32.mrb[0].mxu0
    %v1147 = vadd.f32 0.0, %v1146
    %v1148 = vpop.f32.mrb[0].mxu0
    %v1149 = vpop.f32.mrb[0].mxu0
    %v1150 = vpop.f32.mrb[0].mxu0
    %1151 = vdwg.mxu0
    %1152 = vrot.lane.b32.xlu0 %v315, 64
    %v1153 = vpop.permute.xlu0 %1152
    %v1155 = vsel %vm329, %v814, 0
    %v1158 = vsel %vm820, %v1153, 0
    %1160 = vmatprep.subr.bf16.mxu0 0
    %1161 = vmatpush1.bf16.msra.mxu0 %v1158
    %1162 = vmatprep.subr.bf16.mxu0 0
    %1163 = vmatpush1.bf16.msra.mxu0 0
    %1164 = vmatprep.subr.bf16.mxu0 0
    %1165 = vmatpush1.bf16.msra.mxu0 0
    %1166 = vmatprep.subr.bf16.mxu0 0
    %1167 = vmatpush1.bf16.msra.mxu0 0
    %1168 = vmatprep.subr.bf16.mxu0 0
    %1169 = vmatpush1.bf16.msra.mxu0 0
    %1170 = vmatprep.subr.bf16.mxu0 0
    %1171 = vmatpush1.bf16.msra.mxu0 0
    %1172 = vmatprep.subr.bf16.mxu0 0
    %1173 = vmatpush1.bf16.msra.mxu0 0
    %1174 = vmatprep.subr.bf16.mxu0 0
    %1175 = vmatpush1.bf16.msra.mxu0 0
    %1176 = vmatprep.subr.bf16.mxu0 0
    %1177 = vmatpush1.bf16.msra.mxu0 0
    %1178 = vmatprep.subr.bf16.mxu0 0
    %1179 = vmatpush1.bf16.msra.mxu0 0
    %1180 = vmatprep.subr.bf16.mxu0 0
    %1181 = vmatpush1.bf16.msra.mxu0 0
    %1182 = vmatprep.subr.bf16.mxu0 0
    %1183 = vmatpush1.bf16.msra.mxu0 0
    %1184 = vmatprep.subr.bf16.mxu0 0
    %1185 = vmatpush1.bf16.msra.mxu0 0
    %1186 = vmatprep.subr.bf16.mxu0 0
    %1187 = vmatpush1.bf16.msra.mxu0 0
    %1188 = vmatprep.subr.bf16.mxu0 0
    %1189 = vmatpush1.bf16.msra.mxu0 0
    %1190 = vmatprep.subr.bf16.mxu0 0
    %1191 = vmatpush1.bf16.msra.mxu0 0
    %1192 = vmatprep.mubr.bf16.mxu0 0
    %1193 = vmatmul.mubr.bf16.gmra.mrb[0].mxu0 %v1155
    %v1194 = vpop.f32.mrb[0].mxu0
    %v1195 = vadd.f32 0.0, %v1194
    %v1196 = vpop.f32.mrb[0].mxu0
    %v1197 = vpop.f32.mrb[0].mxu0
    %v1198 = vpop.f32.mrb[0].mxu0
    %1199 = vdwg.mxu0
    %v1200 = vpack.c.bf16 %v907, %v859
    %v1201 = vpack.c.bf16 %v1003, %v955
    %v1202 = vpack.c.b16 %v237, %v237
    %1203 = vrot.lane.b32.xlu0 %v1202, 32
    %v1204 = vpop.permute.xlu0 %1203
    %v1206 = vsel %vm329, %v1201, 0
    %v1209 = vsel %vm820, %v1204, 0
    %1211 = vmatprep.subr.bf16.mxu0 0
    %1212 = vmatpush1.bf16.msra.mxu0 %v1209
    %1213 = vmatprep.subr.bf16.mxu0 0
    %1214 = vmatpush1.bf16.msra.mxu0 0
    %1215 = vmatprep.subr.bf16.mxu0 0
    %1216 = vmatpush1.bf16.msra.mxu0 0
    %1217 = vmatprep.subr.bf16.mxu0 0
    %1218 = vmatpush1.bf16.msra.mxu0 0
    %1219 = vmatprep.subr.bf16.mxu0 0
    %1220 = vmatpush1.bf16.msra.mxu0 0
    %1221 = vmatprep.subr.bf16.mxu0 0
    %1222 = vmatpush1.bf16.msra.mxu0 0
    %1223 = vmatprep.subr.bf16.mxu0 0
    %1224 = vmatpush1.bf16.msra.mxu0 0
    %1225 = vmatprep.subr.bf16.mxu0 0
    %1226 = vmatpush1.bf16.msra.mxu0 0
    %1227 = vmatprep.subr.bf16.mxu0 0
    %1228 = vmatpush1.bf16.msra.mxu0 0
    %1229 = vmatprep.subr.bf16.mxu0 0
    %1230 = vmatpush1.bf16.msra.mxu0 0
    %1231 = vmatprep.subr.bf16.mxu0 0
    %1232 = vmatpush1.bf16.msra.mxu0 0
    %1233 = vmatprep.subr.bf16.mxu0 0
    %1234 = vmatpush1.bf16.msra.mxu0 0
    %1235 = vmatprep.subr.bf16.mxu0 0
    %1236 = vmatpush1.bf16.msra.mxu0 0
    %1237 = vmatprep.subr.bf16.mxu0 0
    %1238 = vmatpush1.bf16.msra.mxu0 0
    %1239 = vmatprep.subr.bf16.mxu0 0
    %1240 = vmatpush1.bf16.msra.mxu0 0
    %1241 = vmatprep.subr.bf16.mxu0 0
    %1242 = vmatpush1.bf16.msra.mxu0 0
    %1243 = vmatprep.mubr.bf16.mxu0 0
    %1244 = vmatmul.mubr.bf16.gmra.mrb[0].mxu0 %v1206
    %v1245 = vpop.f32.mrb[0].mxu0
    %v1246 = vadd.f32 0.0, %v1245
    %v1247 = vpop.f32.mrb[0].mxu0
    %v1248 = vpop.f32.mrb[0].mxu0
    %v1249 = vadd.f32 0.0, %v1248
    %v1250 = vpop.f32.mrb[0].mxu0
    %1251 = vdwg.mxu0
    %v1252 = vpack.c.b16 %v236, %v236
    %1253 = vrot.lane.b32.xlu0 %v1252, 32
    %v1254 = vpop.permute.xlu0 %1253
    %v1256 = vsel %vm329, %v1200, 0
    %v1259 = vsel %vm820, %v1254, 0
    %1261 = vmatprep.subr.bf16.mxu0 0
    %1262 = vmatpush1.bf16.msra.mxu0 %v1259
    %1263 = vmatprep.subr.bf16.mxu0 0
    %1264 = vmatpush1.bf16.msra.mxu0 0
    %1265 = vmatprep.subr.bf16.mxu0 0
    %1266 = vmatpush1.bf16.msra.mxu0 0
    %1267 = vmatprep.subr.bf16.mxu0 0
    %1268 = vmatpush1.bf16.msra.mxu0 0
    %1269 = vmatprep.subr.bf16.mxu0 0
    %1270 = vmatpush1.bf16.msra.mxu0 0
    %1271 = vmatprep.subr.bf16.mxu0 0
    %1272 = vmatpush1.bf16.msra.mxu0 0
    %1273 = vmatprep.subr.bf16.mxu0 0
    %1274 = vmatpush1.bf16.msra.mxu0 0
    %1275 = vmatprep.subr.bf16.mxu0 0
    %1276 = vmatpush1.bf16.msra.mxu0 0
    %1277 = vmatprep.subr.bf16.mxu0 0
    %1278 = vmatpush1.bf16.msra.mxu0 0
    %1279 = vmatprep.subr.bf16.mxu0 0
    %1280 = vmatpush1.bf16.msra.mxu0 0
    %1281 = vmatprep.subr.bf16.mxu0 0
    %1282 = vmatpush1.bf16.msra.mxu0 0
    %1283 = vmatprep.subr.bf16.mxu0 0
    %1284 = vmatpush1.bf16.msra.mxu0 0
    %1285 = vmatprep.subr.bf16.mxu0 0
    %1286 = vmatpush1.bf16.msra.mxu0 0
    %1287 = vmatprep.subr.bf16.mxu0 0
    %1288 = vmatpush1.bf16.msra.mxu0 0
    %1289 = vmatprep.subr.bf16.mxu0 0
    %1290 = vmatpush1.bf16.msra.mxu0 0
    %1291 = vmatprep.subr.bf16.mxu0 0
    %1292 = vmatpush1.bf16.msra.mxu0 0
    %1293 = vmatprep.mubr.bf16.mxu0 0
    %1294 = vmatmul.mubr.bf16.gmra.mrb[0].mxu0 %v1256
    %v1295 = vpop.f32.mrb[0].mxu0
    %v1296 = vadd.f32 %v1246, %v1295
    %v1297 = vpop.f32.mrb[0].mxu0
    %v1298 = vpop.f32.mrb[0].mxu0
    %v1299 = vadd.f32 %v1249, %v1298
    %v1300 = vpop.f32.mrb[0].mxu0
    %1301 = vdwg.mxu0
    %v1302 = vpack.c.bf16 %v1099, %v1051
    %v1303 = vpack.c.b16 %v238, %v238
    %1304 = vrot.lane.b32.xlu0 %v1303, 32
    %v1305 = vpop.permute.xlu0 %1304
    %v1307 = vsel %vm329, %v1302, 0
    %v1310 = vsel %vm820, %v1305, 0
    %1312 = vmatprep.subr.bf16.mxu0 0
    %1313 = vmatpush1.bf16.msra.mxu0 %v1310
    %1314 = vmatprep.subr.bf16.mxu0 0
    %1315 = vmatpush1.bf16.msra.mxu0 0
    %1316 = vmatprep.subr.bf16.mxu0 0
    %1317 = vmatpush1.bf16.msra.mxu0 0
    %1318 = vmatprep.subr.bf16.mxu0 0
    %1319 = vmatpush1.bf16.msra.mxu0 0
    %1320 = vmatprep.subr.bf16.mxu0 0
    %1321 = vmatpush1.bf16.msra.mxu0 0
    %1322 = vmatprep.subr.bf16.mxu0 0
    %1323 = vmatpush1.bf16.msra.mxu0 0
    %1324 = vmatprep.subr.bf16.mxu0 0
    %1325 = vmatpush1.bf16.msra.mxu0 0
    %1326 = vmatprep.subr.bf16.mxu0 0
    %1327 = vmatpush1.bf16.msra.mxu0 0
    %1328 = vmatprep.subr.bf16.mxu0 0
    %1329 = vmatpush1.bf16.msra.mxu0 0
    %1330 = vmatprep.subr.bf16.mxu0 0
    %1331 = vmatpush1.bf16.msra.mxu0 0
    %1332 = vmatprep.subr.bf16.mxu0 0
    %1333 = vmatpush1.bf16.msra.mxu0 0
    %1334 = vmatprep.subr.bf16.mxu0 0
    %1335 = vmatpush1.bf16.msra.mxu0 0
    %1336 = vmatprep.subr.bf16.mxu0 0
    %1337 = vmatpush1.bf16.msra.mxu0 0
    %1338 = vmatprep.subr.bf16.mxu0 0
    %1339 = vmatpush1.bf16.msra.mxu0 0
    %1340 = vmatprep.subr.bf16.mxu0 0
    %1341 = vmatpush1.bf16.msra.mxu0 0
    %1342 = vmatprep.subr.bf16.mxu0 0
    %1343 = vmatpush1.bf16.msra.mxu0 0
    %1344 = vmatprep.mubr.bf16.mxu0 0
    %1345 = vmatmul.mubr.bf16.gmra.mrb[0].mxu0 %v1307
    %v1346 = vpop.f32.mrb[0].mxu0
    %v1347 = vadd.f32 0.0, %v1346
    %v1348 = vpop.f32.mrb[0].mxu0
    %v1349 = vpop.f32.mrb[0].mxu0
    %v1350 = vadd.f32 0.0, %v1349
    %v1351 = vpop.f32.mrb[0].mxu0
    %1352 = vdwg.mxu0
    %v1353 = vadd.f32 %v1296, %v1347
    %v1354 = vadd.f32 %v1299, %v1350
    %v1355 = vpack.c.bf16 %v1195, %v1147
    %v1356 = vpack.c.b16 %v239, %v239
    %1357 = vrot.lane.b32.xlu0 %v1356, 32
    %v1358 = vpop.permute.xlu0 %1357
    %v1360 = vsel %vm329, %v1355, 0
    %v1363 = vsel %vm820, %v1358, 0
    %1365 = vmatprep.subr.bf16.mxu0 0
    %1366 = vmatpush1.bf16.msra.mxu0 %v1363
    %1367 = vmatprep.subr.bf16.mxu0 0
    %1368 = vmatpush1.bf16.msra.mxu0 0
    %1369 = vmatprep.subr.bf16.mxu0 0
    %1370 = vmatpush1.bf16.msra.mxu0 0
    %1371 = vmatprep.subr.bf16.mxu0 0
    %1372 = vmatpush1.bf16.msra.mxu0 0
    %1373 = vmatprep.subr.bf16.mxu0 0
    %1374 = vmatpush1.bf16.msra.mxu0 0
    %1375 = vmatprep.subr.bf16.mxu0 0
    %1376 = vmatpush1.bf16.msra.mxu0 0
    %1377 = vmatprep.subr.bf16.mxu0 0
    %1378 = vmatpush1.bf16.msra.mxu0 0
    %1379 = vmatprep.subr.bf16.mxu0 0
    %1380 = vmatpush1.bf16.msra.mxu0 0
    %1381 = vmatprep.subr.bf16.mxu0 0
    %1382 = vmatpush1.bf16.msra.mxu0 0
    %1383 = vmatprep.subr.bf16.mxu0 0
    %1384 = vmatpush1.bf16.msra.mxu0 0
    %1385 = vmatprep.subr.bf16.mxu0 0
    %1386 = vmatpush1.bf16.msra.mxu0 0
    %1387 = vmatprep.subr.bf16.mxu0 0
    %1388 = vmatpush1.bf16.msra.mxu0 0
    %1389 = vmatprep.subr.bf16.mxu0 0
    %1390 = vmatpush1.bf16.msra.mxu0 0
    %1391 = vmatprep.subr.bf16.mxu0 0
    %1392 = vmatpush1.bf16.msra.mxu0 0
    %1393 = vmatprep.subr.bf16.mxu0 0
    %1394 = vmatpush1.bf16.msra.mxu0 0
    %1395 = vmatprep.subr.bf16.mxu0 0
    %1396 = vmatpush1.bf16.msra.mxu0 0
    %1397 = vmatprep.mubr.bf16.mxu0 0
    %1398 = vmatmul.mubr.bf16.gmra.mrb[0].mxu0 %v1360
    %v1399 = vpop.f32.mrb[0].mxu0
    %v1400 = vadd.f32 0.0, %v1399
    %v1401 = vpop.f32.mrb[0].mxu0
    %v1402 = vpop.f32.mrb[0].mxu0
    %v1403 = vadd.f32 0.0, %v1402
    %v1404 = vpop.f32.mrb[0].mxu0
    %1405 = vdwg.mxu0
    %v1406 = vadd.f32 %v1353, %v1400
    %v1407 = vadd.f32 %v1354, %v1403
    %v1408 = vlaneseq
    %v1409 = vshrl.u32 %v1408, 7
    %v1410 = vsub.s32 2, %v1409
    %v1411 = vrot.slane %v31, %v1410
    %v1412 = vadd.f32 %v1406, %v1411
    %v1413 = vadd.f32 %v1407, %v1411
    %v1414 = vadd.f32 %v187, %v1412
    %v1415 = vadd.f32 %v188, %v1413
    %v1416 = vsel %vm149, %v1414, 0.0
    %1417 = vadd.xlane.f32.xlu0 %v1416
    %v1418 = vpop.xlane.xlu0 %1417
    %v1419 = vsel %vm149, %v1415, 0.0
    %1420 = vadd.xlane.f32.xlu0 %v1419
    %v1421 = vpop.xlane.xlu0 %1420
    %v1422 = vmul.f32 %v1418, %v156
    %v1423 = vmul.f32 %v1421, %v156
    %v1424 = vsub.f32 %v1414, %v1422
    %v1425 = vsub.f32 %v1415, %v1423
    %v1426 = vmul.f32 %v1424, %v1424
    %v1427 = vmul.f32 %v1425, %v1425
    %v1428 = vsel %vm149, %v1426, 0.0
    %1429 = vadd.xlane.f32.xlu0 %v1428
    %v1430 = vpop.xlane.xlu0 %1429
    %v1431 = vsel %vm149, %v1427, 0.0
    %1432 = vadd.xlane.f32.xlu0 %v1431
    %v1433 = vpop.xlane.xlu0 %1432
    %v1434 = vmul.f32 %v1430, %v156
    %v1435 = vmul.f32 %v1433, %v156
    %v1436 = vadd.f32 %v1434, 1e-12
    %v1437 = vadd.f32 %v1435, 1e-12
    %v1438 = vrsqrt.pop %v1436
    %v1439 = vrsqrt.pop %v1437
    %v1440 = vmul.f32 %v1424, %v1438
    %v1441 = vmul.f32 %v1425, %v1439
    %v1442 = vlaneseq
    %v1443 = vshrl.u32 %v1442, 7
    %v1444 = vsub.s32 3, %v1443
    %v1445 = vrot.slane %v31, %v1444
    %v1446 = vmul.f32 %v1440, %v1445
    %v1447 = vmul.f32 %v1441, %v1445
    %v1448 = vlaneseq
    %v1449 = vshrl.u32 %v1448, 7
    %v1450 = vsub.s32 4, %v1449
    %v1451 = vrot.slane %v31, %v1450
    %v1452 = vadd.f32 %v1446, %v1451
    %v1453 = vadd.f32 %v1447, %v1451
    %v1454 = vpack.c.bf16 %v1453, %v1452
    %v1455 = vlaneseq
    %v1456 = vshrl.u32 %v1455, 7
    %v1457 = vsub.s32 1, %v1456
    %v1458 = vrot.slane %v33, %v1457
    %v1459 = vunpack.c.h.b16 %v215
    %v1460 = vunpack.c.h.b16 %v216
    %v1461 = vunpack.c.h.b16 %v217
    %v1462 = vunpack.c.h.b16 %v218
    %v1463 = vpack.c.b16 %v1460, %v1459
    %v1464 = vpack.c.b16 %v1462, %v1461
    %v1468 = vsel %vm149, %v1454, 0
    %1470 = vmatprep.subr.bf16.mxu0 0
    %1471 = vmatpush1.bf16.msra.mxu0 %v1463
    %1472 = vmatprep.subr.bf16.mxu0 0
    %1473 = vmatpush1.bf16.msra.mxu0 %v1464
    %1474 = vmatprep.subr.bf16.mxu0 0
    %1475 = vmatpush1.bf16.msra.mxu0 0
    %1476 = vmatprep.subr.bf16.mxu0 0
    %1477 = vmatpush1.bf16.msra.mxu0 0
    %1478 = vmatprep.subr.bf16.mxu0 0
    %1479 = vmatpush1.bf16.msra.mxu0 0
    %1480 = vmatprep.subr.bf16.mxu0 0
    %1481 = vmatpush1.bf16.msra.mxu0 0
    %1482 = vmatprep.subr.bf16.mxu0 0
    %1483 = vmatpush1.bf16.msra.mxu0 0
    %1484 = vmatprep.subr.bf16.mxu0 0
    %1485 = vmatpush1.bf16.msra.mxu0 0
    %1486 = vmatprep.subr.bf16.mxu0 0
    %1487 = vmatpush1.bf16.msra.mxu0 0
    %1488 = vmatprep.subr.bf16.mxu0 0
    %1489 = vmatpush1.bf16.msra.mxu0 0
    %1490 = vmatprep.subr.bf16.mxu0 0
    %1491 = vmatpush1.bf16.msra.mxu0 0
    %1492 = vmatprep.subr.bf16.mxu0 0
    %1493 = vmatpush1.bf16.msra.mxu0 0
    %1494 = vmatprep.subr.bf16.mxu0 0
    %1495 = vmatpush1.bf16.msra.mxu0 0
    %1496 = vmatprep.subr.bf16.mxu0 0
    %1497 = vmatpush1.bf16.msra.mxu0 0
    %1498 = vmatprep.subr.bf16.mxu0 0
    %1499 = vmatpush1.bf16.msra.mxu0 0
    %1500 = vmatprep.subr.bf16.mxu0 0
    %1501 = vmatpush1.bf16.msra.mxu0 0
    %1502 = vmatprep.mubr.bf16.mxu0 0
    %1503 = vmatmul.mubr.bf16.gmra.mrb[0].mxu0 %v1468
    %v1504 = vpop.f32.mrb[0].mxu0
    %v1505 = vadd.f32 %v1458, %v1504
    %v1506 = vpop.f32.mrb[0].mxu0
    %v1507 = vpop.f32.mrb[0].mxu0
    %v1508 = vadd.f32 %v1458, %v1507
    %v1509 = vpop.f32.mrb[0].mxu0
    %1510 = vdwg.mxu0
    %v1511 = vmul.f32 %v1505, %v1505
    %v1512 = vmul.f32 %v1508, %v1508
    %v1513 = vmul.f32 %v1505, %v1511
    %v1514 = vmul.f32 %v1508, %v1512
    %v1515 = vmul.f32 %v1513, 0.044715
    %v1516 = vmul.f32 %v1514, 0.044715
    %v1517 = vadd.f32 %v1505, %v1515
    %v1518 = vadd.f32 %v1508, %v1516
    %v1519 = vmul.f32 %v1517, 0.7978846
    %v1520 = vmul.f32 %v1518, 0.7978846
    %v1521 = vtanh.pop %v1519
    %v1522 = vtanh.pop %v1520
    %v1523 = vadd.f32 %v1521, 1.0
    %v1524 = vadd.f32 %v1522, 1.0
    %v1525 = vmul.f32 %v1523, 0.5
    %v1526 = vmul.f32 %v1524, 0.5
    %v1527 = vmul.f32 %v1505, %v1525
    %v1528 = vmul.f32 %v1508, %v1526
    %v1529 = vpack.c.bf16 %v1528, %v1527
    %v1530 = vlaneseq
    %v1531 = vshrl.u32 %v1530, 7
    %v1532 = vsub.s32 5, %v1531
    %v1533 = vrot.slane %v31, %v1532
    %v1542 = vunpack.c.l.b16 %v219
    %v1543 = vunpack.c.l.b16 %v220
    %v1544 = vunpack.c.l.b16 %v221
    %v1545 = vunpack.c.l.b16 %v222
    %v1546 = vunpack.c.l.b16 %v223
    %v1547 = vunpack.c.l.b16 %v224
    %v1548 = vunpack.c.l.b16 %v225
    %v1549 = vunpack.c.l.b16 %v226
    %v1550 = vpack.c.b16 %v1543, %v1542
    %v1551 = vpack.c.b16 %v1545, %v1544
    %v1552 = vpack.c.b16 %v1547, %v1546
    %v1553 = vpack.c.b16 %v1549, %v1548
    %vm1558 = vcmask 523264
    %v1560 = vsel %vm1558, %v1529, 0
    %1562 = vmatprep.subr.bf16.mxu0 0
    %1563 = vmatpush1.bf16.msra.mxu0 %v1550
    %1564 = vmatprep.subr.bf16.mxu0 0
    %1565 = vmatpush1.bf16.msra.mxu0 %v1551
    %1566 = vmatprep.subr.bf16.mxu0 0
    %1567 = vmatpush1.bf16.msra.mxu0 %v1552
    %1568 = vmatprep.subr.bf16.mxu0 0
    %1569 = vmatpush1.bf16.msra.mxu0 %v1553
    %1570 = vmatprep.subr.bf16.mxu0 0
    %1571 = vmatpush1.bf16.msra.mxu0 0
    %1572 = vmatprep.subr.bf16.mxu0 0
    %1573 = vmatpush1.bf16.msra.mxu0 0
    %1574 = vmatprep.subr.bf16.mxu0 0
    %1575 = vmatpush1.bf16.msra.mxu0 0
    %1576 = vmatprep.subr.bf16.mxu0 0
    %1577 = vmatpush1.bf16.msra.mxu0 0
    %1578 = vmatprep.subr.bf16.mxu0 0
    %1579 = vmatpush1.bf16.msra.mxu0 0
    %1580 = vmatprep.subr.bf16.mxu0 0
    %1581 = vmatpush1.bf16.msra.mxu0 0
    %1582 = vmatprep.subr.bf16.mxu0 0
    %1583 = vmatpush1.bf16.msra.mxu0 0
    %1584 = vmatprep.subr.bf16.mxu0 0
    %1585 = vmatpush1.bf16.msra.mxu0 0
    %1586 = vmatprep.subr.bf16.mxu0 0
    %1587 = vmatpush1.bf16.msra.mxu0 0
    %1588 = vmatprep.subr.bf16.mxu0 0
    %1589 = vmatpush1.bf16.msra.mxu0 0
    %1590 = vmatprep.subr.bf16.mxu0 0
    %1591 = vmatpush1.bf16.msra.mxu0 0
    %1592 = vmatprep.subr.bf16.mxu0 0
    %1593 = vmatpush1.bf16.msra.mxu0 0
    %1594 = vmatprep.mubr.bf16.mxu0 0
    %1595 = vmatmul.mubr.bf16.gmra.mrb[0].mxu0 %v1560
    %v1596 = vpop.f32.mrb[0].mxu0
    %v1597 = vadd.f32 %v1533, %v1596
    %v1598 = vpop.f32.mrb[0].mxu0
    %v1599 = vpop.f32.mrb[0].mxu0
    %v1600 = vadd.f32 %v1533, %v1599
    %v1601 = vpop.f32.mrb[0].mxu0
    %1602 = vdwg.mxu0
    %v1603 = vadd.f32 %v1452, %v1597
    %v1604 = vadd.f32 %v1453, %v1600
    %v1605 = vsel %vm149, %v1603, 0.0
    %1606 = vadd.xlane.f32.xlu0 %v1605
    %v1607 = vpop.xlane.xlu0 %1606
    %v1608 = vsel %vm149, %v1604, 0.0
    %1609 = vadd.xlane.f32.xlu0 %v1608
    %v1610 = vpop.xlane.xlu0 %1609
    %v1611 = vmul.f32 %v1607, %v156
    %v1612 = vmul.f32 %v1610, %v156
    %v1613 = vsub.f32 %v1603, %v1611
    %v1614 = vsub.f32 %v1604, %v1612
    %v1615 = vmul.f32 %v1613, %v1613
    %v1616 = vmul.f32 %v1614, %v1614
    %v1617 = vsel %vm149, %v1615, 0.0
    %1618 = vadd.xlane.f32.xlu0 %v1617
    %v1619 = vpop.xlane.xlu0 %1618
    %v1620 = vsel %vm149, %v1616, 0.0
    %1621 = vadd.xlane.f32.xlu0 %v1620
    %v1622 = vpop.xlane.xlu0 %1621
    %v1623 = vmul.f32 %v1619, %v156
    %v1624 = vmul.f32 %v1622, %v156
    %v1625 = vadd.f32 %v1623, 1e-12
    %v1626 = vadd.f32 %v1624, 1e-12
    %v1627 = vrsqrt.pop %v1625
    %v1628 = vrsqrt.pop %v1626
    %v1629 = vmul.f32 %v1613, %v1627
    %v1630 = vmul.f32 %v1614, %v1628
    %v1631 = vlaneseq
    %v1632 = vshrl.u32 %v1631, 7
    %v1633 = vsub.s32 6, %v1632
    %v1634 = vrot.slane %v31, %v1633
    %v1635 = vmul.f32 %v1629, %v1634
    %v1636 = vmul.f32 %v1630, %v1634
    %v1637 = vlaneseq
    %v1638 = vshrl.u32 %v1637, 7
    %v1639 = vsub.s32 7, %v1638
    %v1640 = vrot.slane %v31, %v1639
    %v1641 = vadd.f32 %v1635, %v1640
    %v1642 = vadd.f32 %v1636, %v1640
    %s1643 = scalar_lea.vmem %s3, 32
    %v1644 = vld [vmem:[%s1643] sm:$0xff]
    %v1645 = vld [vmem:[%s1643 + $0x8] sm:$0xff]
    %v1646 = vld [vmem:[%s1643 + $0x10] sm:$0xff]
    %v1647 = vld [vmem:[%s1643 + $0x18] sm:$0xff]
    %s1648 = scalar_lea.vmem %s4, 32
    %v1649 = vld [vmem:[%s1648] sm:$0xf]
    %v1650 = vld [vmem:[%s1648 + $0x4] sm:$0xf]
    %v1651 = vld [vmem:[%s1648 + $0x8] sm:$0xf]
    %v1652 = vld [vmem:[%s1648 + $0xc] sm:$0xf]
    %v1653 = vld [vmem:[%s1648 + $0x10] sm:$0xf]
    %v1654 = vld [vmem:[%s1648 + $0x14] sm:$0xf]
    %v1655 = vld [vmem:[%s1648 + $0x18] sm:$0xf]
    %v1656 = vld [vmem:[%s1648 + $0x1c] sm:$0xf]
    %v1657 = vpack.c.bf16 %v1642, %v1641
    %v1658 = vlaneseq
    %v1659 = vshrl.u32 %v1658, 7
    %v1660 = vsub.s32 2, %v1659
    %v1661 = vrot.slane %v33, %v1660
    %v1666 = vunpack.c.l.b16 %v1644
    %v1667 = vunpack.c.l.b16 %v1645
    %v1668 = vunpack.c.l.b16 %v1646
    %v1669 = vunpack.c.l.b16 %v1647
    %v1670 = vpack.c.b16 %v1667, %v1666
    %v1671 = vpack.c.b16 %v1669, %v1668
    %v1675 = vsel %vm149, %v1657, 0
    %1677 = vmatprep.subr.bf16.mxu0 0
    %1678 = vmatpush1.bf16.msra.mxu0 %v1670
    %1679 = vmatprep.subr.bf16.mxu0 0
    %1680 = vmatpush1.bf16.msra.mxu0 %v1671
    %1681 = vmatprep.subr.bf16.mxu0 0
    %1682 = vmatpush1.bf16.msra.mxu0 0
    %1683 = vmatprep.subr.bf16.mxu0 0
    %1684 = vmatpush1.bf16.msra.mxu0 0
    %1685 = vmatprep.subr.bf16.mxu0 0
    %1686 = vmatpush1.bf16.msra.mxu0 0
    %1687 = vmatprep.subr.bf16.mxu0 0
    %1688 = vmatpush1.bf16.msra.mxu0 0
    %1689 = vmatprep.subr.bf16.mxu0 0
    %1690 = vmatpush1.bf16.msra.mxu0 0
    %1691 = vmatprep.subr.bf16.mxu0 0
    %1692 = vmatpush1.bf16.msra.mxu0 0
    %1693 = vmatprep.subr.bf16.mxu0 0
    %1694 = vmatpush1.bf16.msra.mxu0 0
    %1695 = vmatprep.subr.bf16.mxu0 0
    %1696 = vmatpush1.bf16.msra.mxu0 0
    %1697 = vmatprep.subr.bf16.mxu0 0
    %1698 = vmatpush1.bf16.msra.mxu0 0
    %1699 = vmatprep.subr.bf16.mxu0 0
    %1700 = vmatpush1.bf16.msra.mxu0 0
    %1701 = vmatprep.subr.bf16.mxu0 0
    %1702 = vmatpush1.bf16.msra.mxu0 0
    %1703 = vmatprep.subr.bf16.mxu0 0
    %1704 = vmatpush1.bf16.msra.mxu0 0
    %1705 = vmatprep.subr.bf16.mxu0 0
    %1706 = vmatpush1.bf16.msra.mxu0 0
    %1707 = vmatprep.subr.bf16.mxu0 0
    %1708 = vmatpush1.bf16.msra.mxu0 0
    %1709 = vmatprep.mubr.bf16.mxu0 0
    %1710 = vmatmul.mubr.bf16.gmra.mrb[0].mxu0 %v1675
    %v1711 = vpop.f32.mrb[0].mxu0
    %v1712 = vadd.f32 %v1661, %v1711
    %v1713 = vpop.f32.mrb[0].mxu0
    %v1714 = vpop.f32.mrb[0].mxu0
    %v1715 = vadd.f32 %v1661, %v1714
    %v1716 = vpop.f32.mrb[0].mxu0
    %1717 = vdwg.mxu0
    %1720 = vrot.lane.b32.xlu0 %v1712, 120
    %v1721 = vpop.permute.xlu0 %1720
    %1722 = vrot.lane.b32.xlu0 %v1715, 120
    %v1723 = vpop.permute.xlu0 %1722
    %1726 = vrot.lane.b32.xlu0 %v1712, 112
    %v1727 = vpop.permute.xlu0 %1726
    %1728 = vrot.lane.b32.xlu0 %v1715, 112
    %v1729 = vpop.permute.xlu0 %1728
    %1732 = vrot.lane.b32.xlu0 %v1712, 104
    %v1733 = vpop.permute.xlu0 %1732
    %1734 = vrot.lane.b32.xlu0 %v1715, 104
    %v1735 = vpop.permute.xlu0 %1734
    %v1738 = vpack.c.bf16 %v1712, %v1712
    %v1739 = vpack.c.bf16 %v1715, %v1715
    %v1740 = vpack.c.bf16 %v1721, %v1721
    %v1741 = vpack.c.bf16 %v1723, %v1723
    %v1742 = vpack.c.bf16 %v1727, %v1727
    %v1743 = vpack.c.bf16 %v1729, %v1729
    %v1744 = vpack.c.bf16 %v1733, %v1733
    %v1745 = vpack.c.bf16 %v1735, %v1735
    %1747 = vrot.lane.b32.xlu0 %v1738, 96
    %v1748 = vpop.permute.xlu0 %1747
    %v1750 = vsel %vm329, %v1738, 0
    %v1753 = vsel %vm329, %v1748, 0
    %1755 = vmatprep.subr.bf16.mxu0 0
    %1756 = vmatpush1.bf16.xpose.msra.mxu0 %v1753
    %1757 = vmatprep.subr.bf16.mxu0 0
    %1758 = vmatpush1.bf16.xpose.msra.mxu0 0
    %1759 = vmatprep.subr.bf16.mxu0 0
    %1760 = vmatpush1.bf16.xpose.msra.mxu0 0
    %1761 = vmatprep.subr.bf16.mxu0 0
    %1762 = vmatpush1.bf16.xpose.msra.mxu0 0
    %1763 = vmatprep.subr.bf16.mxu0 0
    %1764 = vmatpush1.bf16.xpose.msra.mxu0 0
    %1765 = vmatprep.subr.bf16.mxu0 0
    %1766 = vmatpush1.bf16.xpose.msra.mxu0 0
    %1767 = vmatprep.subr.bf16.mxu0 0
    %1768 = vmatpush1.bf16.xpose.msra.mxu0 0
    %1769 = vmatprep.subr.bf16.mxu0 0
    %1770 = vmatpush1.bf16.xpose.msra.mxu0 0
    %1771 = vmatprep.subr.bf16.mxu0 0
    %1772 = vmatpush1.bf16.xpose.msra.mxu0 0
    %1773 = vmatprep.subr.bf16.mxu0 0
    %1774 = vmatpush1.bf16.xpose.msra.mxu0 0
    %1775 = vmatprep.subr.bf16.mxu0 0
    %1776 = vmatpush1.bf16.xpose.msra.mxu0 0
    %1777 = vmatprep.subr.bf16.mxu0 0
    %1778 = vmatpush1.bf16.xpose.msra.mxu0 0
    %1779 = vmatprep.subr.bf16.mxu0 0
    %1780 = vmatpush1.bf16.xpose.msra.mxu0 0
    %1781 = vmatprep.subr.bf16.mxu0 0
    %1782 = vmatpush1.bf16.xpose.msra.mxu0 0
    %1783 = vmatprep.subr.bf16.mxu0 0
    %1784 = vmatpush1.bf16.xpose.msra.mxu0 0
    %1785 = vmatprep.subr.bf16.mxu0 0
    %1786 = vmatpush1.bf16.xpose.msra.mxu0 0
    %1787 = vmatprep.mubr.bf16.mxu0 0
    %1788 = vmatmul.mubr.bf16.gmra.mrb[0].mxu0 %v1750
    %v1789 = vpop.f32.mrb[0].mxu0
    %v1790 = vadd.f32 %v319, %v1789
    %v1791 = vpop.f32.mrb[0].mxu0
    %v1792 = vpop.f32.mrb[0].mxu0
    %v1793 = vpop.f32.mrb[0].mxu0
    %1794 = vdwg.mxu0
    %1796 = vrot.lane.b32.xlu0 %v1739, 96
    %v1797 = vpop.permute.xlu0 %1796
    %v1799 = vsel %vm329, %v1739, 0
    %v1802 = vsel %vm329, %v1797, 0
    %1804 = vmatprep.subr.bf16.mxu0 0
    %1805 = vmatpush1.bf16.xpose.msra.mxu0 %v1802
    %1806 = vmatprep.subr.bf16.mxu0 0
    %1807 = vmatpush1.bf16.xpose.msra.mxu0 0
    %1808 = vmatprep.subr.bf16.mxu0 0
    %1809 = vmatpush1.bf16.xpose.msra.mxu0 0
    %1810 = vmatprep.subr.bf16.mxu0 0
    %1811 = vmatpush1.bf16.xpose.msra.mxu0 0
    %1812 = vmatprep.subr.bf16.mxu0 0
    %1813 = vmatpush1.bf16.xpose.msra.mxu0 0
    %1814 = vmatprep.subr.bf16.mxu0 0
    %1815 = vmatpush1.bf16.xpose.msra.mxu0 0
    %1816 = vmatprep.subr.bf16.mxu0 0
    %1817 = vmatpush1.bf16.xpose.msra.mxu0 0
    %1818 = vmatprep.subr.bf16.mxu0 0
    %1819 = vmatpush1.bf16.xpose.msra.mxu0 0
    %1820 = vmatprep.subr.bf16.mxu0 0
    %1821 = vmatpush1.bf16.xpose.msra.mxu0 0
    %1822 = vmatprep.subr.bf16.mxu0 0
    %1823 = vmatpush1.bf16.xpose.msra.mxu0 0
    %1824 = vmatprep.subr.bf16.mxu0 0
    %1825 = vmatpush1.bf16.xpose.msra.mxu0 0
    %1826 = vmatprep.subr.bf16.mxu0 0
    %1827 = vmatpush1.bf16.xpose.msra.mxu0 0
    %1828 = vmatprep.subr.bf16.mxu0 0
    %1829 = vmatpush1.bf16.xpose.msra.mxu0 0
    %1830 = vmatprep.subr.bf16.mxu0 0
    %1831 = vmatpush1.bf16.xpose.msra.mxu0 0
    %1832 = vmatprep.subr.bf16.mxu0 0
    %1833 = vmatpush1.bf16.xpose.msra.mxu0 0
    %1834 = vmatprep.subr.bf16.mxu0 0
    %1835 = vmatpush1.bf16.xpose.msra.mxu0 0
    %1836 = vmatprep.mubr.bf16.mxu0 0
    %1837 = vmatmul.mubr.bf16.gmra.mrb[0].mxu0 %v1799
    %v1838 = vpop.f32.mrb[0].mxu0
    %v1839 = vadd.f32 %v323, %v1838
    %v1840 = vpop.f32.mrb[0].mxu0
    %v1841 = vpop.f32.mrb[0].mxu0
    %v1842 = vpop.f32.mrb[0].mxu0
    %1843 = vdwg.mxu0
    %1845 = vrot.lane.b32.xlu0 %v1740, 96
    %v1846 = vpop.permute.xlu0 %1845
    %v1848 = vsel %vm329, %v1740, 0
    %v1851 = vsel %vm329, %v1846, 0
    %1853 = vmatprep.subr.bf16.mxu0 0
    %1854 = vmatpush1.bf16.xpose.msra.mxu0 %v1851
    %1855 = vmatprep.subr.bf16.mxu0 0
    %1856 = vmatpush1.bf16.xpose.msra.mxu0 0
    %1857 = vmatprep.subr.bf16.mxu0 0
    %1858 = vmatpush1.bf16.xpose.msra.mxu0 0
    %1859 = vmatprep.subr.bf16.mxu0 0
    %1860 = vmatpush1.bf16.xpose.msra.mxu0 0
    %1861 = vmatprep.subr.bf16.mxu0 0
    %1862 = vmatpush1.bf16.xpose.msra.mxu0 0
    %1863 = vmatprep.subr.bf16.mxu0 0
    %1864 = vmatpush1.bf16.xpose.msra.mxu0 0
    %1865 = vmatprep.subr.bf16.mxu0 0
    %1866 = vmatpush1.bf16.xpose.msra.mxu0 0
    %1867 = vmatprep.subr.bf16.mxu0 0
    %1868 = vmatpush1.bf16.xpose.msra.mxu0 0
    %1869 = vmatprep.subr.bf16.mxu0 0
    %1870 = vmatpush1.bf16.xpose.msra.mxu0 0
    %1871 = vmatprep.subr.bf16.mxu0 0
    %1872 = vmatpush1.bf16.xpose.msra.mxu0 0
    %1873 = vmatprep.subr.bf16.mxu0 0
    %1874 = vmatpush1.bf16.xpose.msra.mxu0 0
    %1875 = vmatprep.subr.bf16.mxu0 0
    %1876 = vmatpush1.bf16.xpose.msra.mxu0 0
    %1877 = vmatprep.subr.bf16.mxu0 0
    %1878 = vmatpush1.bf16.xpose.msra.mxu0 0
    %1879 = vmatprep.subr.bf16.mxu0 0
    %1880 = vmatpush1.bf16.xpose.msra.mxu0 0
    %1881 = vmatprep.subr.bf16.mxu0 0
    %1882 = vmatpush1.bf16.xpose.msra.mxu0 0
    %1883 = vmatprep.subr.bf16.mxu0 0
    %1884 = vmatpush1.bf16.xpose.msra.mxu0 0
    %1885 = vmatprep.mubr.bf16.mxu0 0
    %1886 = vmatmul.mubr.bf16.gmra.mrb[0].mxu0 %v1848
    %v1887 = vpop.f32.mrb[0].mxu0
    %v1888 = vadd.f32 %v319, %v1887
    %v1889 = vpop.f32.mrb[0].mxu0
    %v1890 = vpop.f32.mrb[0].mxu0
    %v1891 = vpop.f32.mrb[0].mxu0
    %1892 = vdwg.mxu0
    %1894 = vrot.lane.b32.xlu0 %v1741, 96
    %v1895 = vpop.permute.xlu0 %1894
    %v1897 = vsel %vm329, %v1741, 0
    %v1900 = vsel %vm329, %v1895, 0
    %1902 = vmatprep.subr.bf16.mxu0 0
    %1903 = vmatpush1.bf16.xpose.msra.mxu0 %v1900
    %1904 = vmatprep.subr.bf16.mxu0 0
    %1905 = vmatpush1.bf16.xpose.msra.mxu0 0
    %1906 = vmatprep.subr.bf16.mxu0 0
    %1907 = vmatpush1.bf16.xpose.msra.mxu0 0
    %1908 = vmatprep.subr.bf16.mxu0 0
    %1909 = vmatpush1.bf16.xpose.msra.mxu0 0
    %1910 = vmatprep.subr.bf16.mxu0 0
    %1911 = vmatpush1.bf16.xpose.msra.mxu0 0
    %1912 = vmatprep.subr.bf16.mxu0 0
    %1913 = vmatpush1.bf16.xpose.msra.mxu0 0
    %1914 = vmatprep.subr.bf16.mxu0 0
    %1915 = vmatpush1.bf16.xpose.msra.mxu0 0
    %1916 = vmatprep.subr.bf16.mxu0 0
    %1917 = vmatpush1.bf16.xpose.msra.mxu0 0
    %1918 = vmatprep.subr.bf16.mxu0 0
    %1919 = vmatpush1.bf16.xpose.msra.mxu0 0
    %1920 = vmatprep.subr.bf16.mxu0 0
    %1921 = vmatpush1.bf16.xpose.msra.mxu0 0
    %1922 = vmatprep.subr.bf16.mxu0 0
    %1923 = vmatpush1.bf16.xpose.msra.mxu0 0
    %1924 = vmatprep.subr.bf16.mxu0 0
    %1925 = vmatpush1.bf16.xpose.msra.mxu0 0
    %1926 = vmatprep.subr.bf16.mxu0 0
    %1927 = vmatpush1.bf16.xpose.msra.mxu0 0
    %1928 = vmatprep.subr.bf16.mxu0 0
    %1929 = vmatpush1.bf16.xpose.msra.mxu0 0
    %1930 = vmatprep.subr.bf16.mxu0 0
    %1931 = vmatpush1.bf16.xpose.msra.mxu0 0
    %1932 = vmatprep.subr.bf16.mxu0 0
    %1933 = vmatpush1.bf16.xpose.msra.mxu0 0
    %1934 = vmatprep.mubr.bf16.mxu0 0
    %1935 = vmatmul.mubr.bf16.gmra.mrb[0].mxu0 %v1897
    %v1936 = vpop.f32.mrb[0].mxu0
    %v1937 = vadd.f32 %v323, %v1936
    %v1938 = vpop.f32.mrb[0].mxu0
    %v1939 = vpop.f32.mrb[0].mxu0
    %v1940 = vpop.f32.mrb[0].mxu0
    %1941 = vdwg.mxu0
    %1943 = vrot.lane.b32.xlu0 %v1742, 96
    %v1944 = vpop.permute.xlu0 %1943
    %v1946 = vsel %vm329, %v1742, 0
    %v1949 = vsel %vm329, %v1944, 0
    %1951 = vmatprep.subr.bf16.mxu0 0
    %1952 = vmatpush1.bf16.xpose.msra.mxu0 %v1949
    %1953 = vmatprep.subr.bf16.mxu0 0
    %1954 = vmatpush1.bf16.xpose.msra.mxu0 0
    %1955 = vmatprep.subr.bf16.mxu0 0
    %1956 = vmatpush1.bf16.xpose.msra.mxu0 0
    %1957 = vmatprep.subr.bf16.mxu0 0
    %1958 = vmatpush1.bf16.xpose.msra.mxu0 0
    %1959 = vmatprep.subr.bf16.mxu0 0
    %1960 = vmatpush1.bf16.xpose.msra.mxu0 0
    %1961 = vmatprep.subr.bf16.mxu0 0
    %1962 = vmatpush1.bf16.xpose.msra.mxu0 0
    %1963 = vmatprep.subr.bf16.mxu0 0
    %1964 = vmatpush1.bf16.xpose.msra.mxu0 0
    %1965 = vmatprep.subr.bf16.mxu0 0
    %1966 = vmatpush1.bf16.xpose.msra.mxu0 0
    %1967 = vmatprep.subr.bf16.mxu0 0
    %1968 = vmatpush1.bf16.xpose.msra.mxu0 0
    %1969 = vmatprep.subr.bf16.mxu0 0
    %1970 = vmatpush1.bf16.xpose.msra.mxu0 0
    %1971 = vmatprep.subr.bf16.mxu0 0
    %1972 = vmatpush1.bf16.xpose.msra.mxu0 0
    %1973 = vmatprep.subr.bf16.mxu0 0
    %1974 = vmatpush1.bf16.xpose.msra.mxu0 0
    %1975 = vmatprep.subr.bf16.mxu0 0
    %1976 = vmatpush1.bf16.xpose.msra.mxu0 0
    %1977 = vmatprep.subr.bf16.mxu0 0
    %1978 = vmatpush1.bf16.xpose.msra.mxu0 0
    %1979 = vmatprep.subr.bf16.mxu0 0
    %1980 = vmatpush1.bf16.xpose.msra.mxu0 0
    %1981 = vmatprep.subr.bf16.mxu0 0
    %1982 = vmatpush1.bf16.xpose.msra.mxu0 0
    %1983 = vmatprep.mubr.bf16.mxu0 0
    %1984 = vmatmul.mubr.bf16.gmra.mrb[0].mxu0 %v1946
    %v1985 = vpop.f32.mrb[0].mxu0
    %v1986 = vadd.f32 %v319, %v1985
    %v1987 = vpop.f32.mrb[0].mxu0
    %v1988 = vpop.f32.mrb[0].mxu0
    %v1989 = vpop.f32.mrb[0].mxu0
    %1990 = vdwg.mxu0
    %1992 = vrot.lane.b32.xlu0 %v1743, 96
    %v1993 = vpop.permute.xlu0 %1992
    %v1995 = vsel %vm329, %v1743, 0
    %v1998 = vsel %vm329, %v1993, 0
    %2000 = vmatprep.subr.bf16.mxu0 0
    %2001 = vmatpush1.bf16.xpose.msra.mxu0 %v1998
    %2002 = vmatprep.subr.bf16.mxu0 0
    %2003 = vmatpush1.bf16.xpose.msra.mxu0 0
    %2004 = vmatprep.subr.bf16.mxu0 0
    %2005 = vmatpush1.bf16.xpose.msra.mxu0 0
    %2006 = vmatprep.subr.bf16.mxu0 0
    %2007 = vmatpush1.bf16.xpose.msra.mxu0 0
    %2008 = vmatprep.subr.bf16.mxu0 0
    %2009 = vmatpush1.bf16.xpose.msra.mxu0 0
    %2010 = vmatprep.subr.bf16.mxu0 0
    %2011 = vmatpush1.bf16.xpose.msra.mxu0 0
    %2012 = vmatprep.subr.bf16.mxu0 0
    %2013 = vmatpush1.bf16.xpose.msra.mxu0 0
    %2014 = vmatprep.subr.bf16.mxu0 0
    %2015 = vmatpush1.bf16.xpose.msra.mxu0 0
    %2016 = vmatprep.subr.bf16.mxu0 0
    %2017 = vmatpush1.bf16.xpose.msra.mxu0 0
    %2018 = vmatprep.subr.bf16.mxu0 0
    %2019 = vmatpush1.bf16.xpose.msra.mxu0 0
    %2020 = vmatprep.subr.bf16.mxu0 0
    %2021 = vmatpush1.bf16.xpose.msra.mxu0 0
    %2022 = vmatprep.subr.bf16.mxu0 0
    %2023 = vmatpush1.bf16.xpose.msra.mxu0 0
    %2024 = vmatprep.subr.bf16.mxu0 0
    %2025 = vmatpush1.bf16.xpose.msra.mxu0 0
    %2026 = vmatprep.subr.bf16.mxu0 0
    %2027 = vmatpush1.bf16.xpose.msra.mxu0 0
    %2028 = vmatprep.subr.bf16.mxu0 0
    %2029 = vmatpush1.bf16.xpose.msra.mxu0 0
    %2030 = vmatprep.subr.bf16.mxu0 0
    %2031 = vmatpush1.bf16.xpose.msra.mxu0 0
    %2032 = vmatprep.mubr.bf16.mxu0 0
    %2033 = vmatmul.mubr.bf16.gmra.mrb[0].mxu0 %v1995
    %v2034 = vpop.f32.mrb[0].mxu0
    %v2035 = vadd.f32 %v323, %v2034
    %v2036 = vpop.f32.mrb[0].mxu0
    %v2037 = vpop.f32.mrb[0].mxu0
    %v2038 = vpop.f32.mrb[0].mxu0
    %2039 = vdwg.mxu0
    %2041 = vrot.lane.b32.xlu0 %v1744, 96
    %v2042 = vpop.permute.xlu0 %2041
    %v2044 = vsel %vm329, %v1744, 0
    %v2047 = vsel %vm329, %v2042, 0
    %2049 = vmatprep.subr.bf16.mxu0 0
    %2050 = vmatpush1.bf16.xpose.msra.mxu0 %v2047
    %2051 = vmatprep.subr.bf16.mxu0 0
    %2052 = vmatpush1.bf16.xpose.msra.mxu0 0
    %2053 = vmatprep.subr.bf16.mxu0 0
    %2054 = vmatpush1.bf16.xpose.msra.mxu0 0
    %2055 = vmatprep.subr.bf16.mxu0 0
    %2056 = vmatpush1.bf16.xpose.msra.mxu0 0
    %2057 = vmatprep.subr.bf16.mxu0 0
    %2058 = vmatpush1.bf16.xpose.msra.mxu0 0
    %2059 = vmatprep.subr.bf16.mxu0 0
    %2060 = vmatpush1.bf16.xpose.msra.mxu0 0
    %2061 = vmatprep.subr.bf16.mxu0 0
    %2062 = vmatpush1.bf16.xpose.msra.mxu0 0
    %2063 = vmatprep.subr.bf16.mxu0 0
    %2064 = vmatpush1.bf16.xpose.msra.mxu0 0
    %2065 = vmatprep.subr.bf16.mxu0 0
    %2066 = vmatpush1.bf16.xpose.msra.mxu0 0
    %2067 = vmatprep.subr.bf16.mxu0 0
    %2068 = vmatpush1.bf16.xpose.msra.mxu0 0
    %2069 = vmatprep.subr.bf16.mxu0 0
    %2070 = vmatpush1.bf16.xpose.msra.mxu0 0
    %2071 = vmatprep.subr.bf16.mxu0 0
    %2072 = vmatpush1.bf16.xpose.msra.mxu0 0
    %2073 = vmatprep.subr.bf16.mxu0 0
    %2074 = vmatpush1.bf16.xpose.msra.mxu0 0
    %2075 = vmatprep.subr.bf16.mxu0 0
    %2076 = vmatpush1.bf16.xpose.msra.mxu0 0
    %2077 = vmatprep.subr.bf16.mxu0 0
    %2078 = vmatpush1.bf16.xpose.msra.mxu0 0
    %2079 = vmatprep.subr.bf16.mxu0 0
    %2080 = vmatpush1.bf16.xpose.msra.mxu0 0
    %2081 = vmatprep.mubr.bf16.mxu0 0
    %2082 = vmatmul.mubr.bf16.gmra.mrb[0].mxu0 %v2044
    %v2083 = vpop.f32.mrb[0].mxu0
    %v2084 = vadd.f32 %v319, %v2083
    %v2085 = vpop.f32.mrb[0].mxu0
    %v2086 = vpop.f32.mrb[0].mxu0
    %v2087 = vpop.f32.mrb[0].mxu0
    %2088 = vdwg.mxu0
    %2090 = vrot.lane.b32.xlu0 %v1745, 96
    %v2091 = vpop.permute.xlu0 %2090
    %v2093 = vsel %vm329, %v1745, 0
    %v2096 = vsel %vm329, %v2091, 0
    %2098 = vmatprep.subr.bf16.mxu0 0
    %2099 = vmatpush1.bf16.xpose.msra.mxu0 %v2096
    %2100 = vmatprep.subr.bf16.mxu0 0
    %2101 = vmatpush1.bf16.xpose.msra.mxu0 0
    %2102 = vmatprep.subr.bf16.mxu0 0
    %2103 = vmatpush1.bf16.xpose.msra.mxu0 0
    %2104 = vmatprep.subr.bf16.mxu0 0
    %2105 = vmatpush1.bf16.xpose.msra.mxu0 0
    %2106 = vmatprep.subr.bf16.mxu0 0
    %2107 = vmatpush1.bf16.xpose.msra.mxu0 0
    %2108 = vmatprep.subr.bf16.mxu0 0
    %2109 = vmatpush1.bf16.xpose.msra.mxu0 0
    %2110 = vmatprep.subr.bf16.mxu0 0
    %2111 = vmatpush1.bf16.xpose.msra.mxu0 0
    %2112 = vmatprep.subr.bf16.mxu0 0
    %2113 = vmatpush1.bf16.xpose.msra.mxu0 0
    %2114 = vmatprep.subr.bf16.mxu0 0
    %2115 = vmatpush1.bf16.xpose.msra.mxu0 0
    %2116 = vmatprep.subr.bf16.mxu0 0
    %2117 = vmatpush1.bf16.xpose.msra.mxu0 0
    %2118 = vmatprep.subr.bf16.mxu0 0
    %2119 = vmatpush1.bf16.xpose.msra.mxu0 0
    %2120 = vmatprep.subr.bf16.mxu0 0
    %2121 = vmatpush1.bf16.xpose.msra.mxu0 0
    %2122 = vmatprep.subr.bf16.mxu0 0
    %2123 = vmatpush1.bf16.xpose.msra.mxu0 0
    %2124 = vmatprep.subr.bf16.mxu0 0
    %2125 = vmatpush1.bf16.xpose.msra.mxu0 0
    %2126 = vmatprep.subr.bf16.mxu0 0
    %2127 = vmatpush1.bf16.xpose.msra.mxu0 0
    %2128 = vmatprep.subr.bf16.mxu0 0
    %2129 = vmatpush1.bf16.xpose.msra.mxu0 0
    %2130 = vmatprep.mubr.bf16.mxu0 0
    %2131 = vmatmul.mubr.bf16.gmra.mrb[0].mxu0 %v2093
    %v2132 = vpop.f32.mrb[0].mxu0
    %v2133 = vadd.f32 %v323, %v2132
    %v2134 = vpop.f32.mrb[0].mxu0
    %v2135 = vpop.f32.mrb[0].mxu0
    %v2136 = vpop.f32.mrb[0].mxu0
    %2137 = vdwg.mxu0
    %v2138 = vsel %vm329, %v1790, -inf
    %2139 = vmax.xlane.f32.xlu0 %v2138
    %v2140 = vpop.xlane.xlu0 %2139
    %v2141 = vsel %vm329, %v1839, -inf
    %2142 = vmax.xlane.f32.xlu0 %v2141
    %v2143 = vpop.xlane.xlu0 %2142
    %v2144 = vsel %vm329, %v1888, -inf
    %2145 = vmax.xlane.f32.xlu0 %v2144
    %v2146 = vpop.xlane.xlu0 %2145
    %v2147 = vsel %vm329, %v1937, -inf
    %2148 = vmax.xlane.f32.xlu0 %v2147
    %v2149 = vpop.xlane.xlu0 %2148
    %v2150 = vsel %vm329, %v1986, -inf
    %2151 = vmax.xlane.f32.xlu0 %v2150
    %v2152 = vpop.xlane.xlu0 %2151
    %v2153 = vsel %vm329, %v2035, -inf
    %2154 = vmax.xlane.f32.xlu0 %v2153
    %v2155 = vpop.xlane.xlu0 %2154
    %v2156 = vsel %vm329, %v2084, -inf
    %2157 = vmax.xlane.f32.xlu0 %v2156
    %v2158 = vpop.xlane.xlu0 %2157
    %v2159 = vsel %vm329, %v2133, -inf
    %2160 = vmax.xlane.f32.xlu0 %v2159
    %v2161 = vpop.xlane.xlu0 %2160
    %v2162 = vsub.f32 %v1790, %v2140
    %v2163 = vsub.f32 %v1839, %v2143
    %v2164 = vsub.f32 %v1888, %v2146
    %v2165 = vsub.f32 %v1937, %v2149
    %v2166 = vsub.f32 %v1986, %v2152
    %v2167 = vsub.f32 %v2035, %v2155
    %v2168 = vsub.f32 %v2084, %v2158
    %v2169 = vsub.f32 %v2133, %v2161
    %v2170 = vmul.f32 %v2162, 1.442695
    %v2171 = vpow.pop %v2170
    %v2172 = vmul.f32 %v2163, 1.442695
    %v2173 = vpow.pop %v2172
    %v2174 = vmul.f32 %v2164, 1.442695
    %v2175 = vpow.pop %v2174
    %v2176 = vmul.f32 %v2165, 1.442695
    %v2177 = vpow.pop %v2176
    %v2178 = vmul.f32 %v2166, 1.442695
    %v2179 = vpow.pop %v2178
    %v2180 = vmul.f32 %v2167, 1.442695
    %v2181 = vpow.pop %v2180
    %v2182 = vmul.f32 %v2168, 1.442695
    %v2183 = vpow.pop %v2182
    %v2184 = vmul.f32 %v2169, 1.442695
    %v2185 = vpow.pop %v2184
    %v2186 = vsel %vm329, %v2171, 0.0
    %2187 = vadd.xlane.f32.xlu0 %v2186
    %v2188 = vpop.xlane.xlu0 %2187
    %v2189 = vsel %vm329, %v2173, 0.0
    %2190 = vadd.xlane.f32.xlu0 %v2189
    %v2191 = vpop.xlane.xlu0 %2190
    %v2192 = vsel %vm329, %v2175, 0.0
    %2193 = vadd.xlane.f32.xlu0 %v2192
    %v2194 = vpop.xlane.xlu0 %2193
    %v2195 = vsel %vm329, %v2177, 0.0
    %2196 = vadd.xlane.f32.xlu0 %v2195
    %v2197 = vpop.xlane.xlu0 %2196
    %v2198 = vsel %vm329, %v2179, 0.0
    %2199 = vadd.xlane.f32.xlu0 %v2198
    %v2200 = vpop.xlane.xlu0 %2199
    %v2201 = vsel %vm329, %v2181, 0.0
    %2202 = vadd.xlane.f32.xlu0 %v2201
    %v2203 = vpop.xlane.xlu0 %2202
    %v2204 = vsel %vm329, %v2183, 0.0
    %2205 = vadd.xlane.f32.xlu0 %v2204
    %v2206 = vpop.xlane.xlu0 %2205
    %v2207 = vsel %vm329, %v2185, 0.0
    %2208 = vadd.xlane.f32.xlu0 %v2207
    %v2209 = vpop.xlane.xlu0 %2208
    %v2210 = vrcp.pop %v2188
    %v2211 = vrcp.pop %v2191
    %v2212 = vrcp.pop %v2194
    %v2213 = vrcp.pop %v2197
    %v2214 = vrcp.pop %v2200
    %v2215 = vrcp.pop %v2203
    %v2216 = vrcp.pop %v2206
    %v2217 = vrcp.pop %v2209
    %v2218 = vmul.f32 %v2171, %v2210
    %v2219 = vmul.f32 %v2173, %v2211
    %v2220 = vmul.f32 %v2175, %v2212
    %v2221 = vmul.f32 %v2177, %v2213
    %v2222 = vmul.f32 %v2179, %v2214
    %v2223 = vmul.f32 %v2181, %v2215
    %v2224 = vmul.f32 %v2183, %v2216
    %v2225 = vmul.f32 %v2185, %v2217
    %v2226 = vpack.c.bf16 %v2218, %v2218
    %v2227 = vpack.c.bf16 %v2219, %v2219
    %v2228 = vpack.c.bf16 %v2220, %v2220
    %v2229 = vpack.c.bf16 %v2221, %v2221
    %v2230 = vpack.c.bf16 %v2222, %v2222
    %v2231 = vpack.c.bf16 %v2223, %v2223
    %v2232 = vpack.c.bf16 %v2224, %v2224
    %v2233 = vpack.c.bf16 %v2225, %v2225
    %2234 = vrot.lane.b32.xlu0 %v1738, 64
    %v2235 = vpop.permute.xlu0 %2234
    %v2237 = vsel %vm329, %v2226, 0
    %v2240 = vsel %vm820, %v2235, 0
    %2242 = vmatprep.subr.bf16.mxu0 0
    %2243 = vmatpush1.bf16.msra.mxu0 %v2240
    %2244 = vmatprep.subr.bf16.mxu0 0
    %2245 = vmatpush1.bf16.msra.mxu0 0
    %2246 = vmatprep.subr.bf16.mxu0 0
    %2247 = vmatpush1.bf16.msra.mxu0 0
    %2248 = vmatprep.subr.bf16.mxu0 0
    %2249 = vmatpush1.bf16.msra.mxu0 0
    %2250 = vmatprep.subr.bf16.mxu0 0
    %2251 = vmatpush1.bf16.msra.mxu0 0
    %2252 = vmatprep.subr.bf16.mxu0 0
    %2253 = vmatpush1.bf16.msra.mxu0 0
    %2254 = vmatprep.subr.bf16.mxu0 0
    %2255 = vmatpush1.bf16.msra.mxu0 0
    %2256 = vmatprep.subr.bf16.mxu0 0
    %2257 = vmatpush1.bf16.msra.mxu0 0
    %2258 = vmatprep.subr.bf16.mxu0 0
    %2259 = vmatpush1.bf16.msra.mxu0 0
    %2260 = vmatprep.subr.bf16.mxu0 0
    %2261 = vmatpush1.bf16.msra.mxu0 0
    %2262 = vmatprep.subr.bf16.mxu0 0
    %2263 = vmatpush1.bf16.msra.mxu0 0
    %2264 = vmatprep.subr.bf16.mxu0 0
    %2265 = vmatpush1.bf16.msra.mxu0 0
    %2266 = vmatprep.subr.bf16.mxu0 0
    %2267 = vmatpush1.bf16.msra.mxu0 0
    %2268 = vmatprep.subr.bf16.mxu0 0
    %2269 = vmatpush1.bf16.msra.mxu0 0
    %2270 = vmatprep.subr.bf16.mxu0 0
    %2271 = vmatpush1.bf16.msra.mxu0 0
    %2272 = vmatprep.subr.bf16.mxu0 0
    %2273 = vmatpush1.bf16.msra.mxu0 0
    %2274 = vmatprep.mubr.bf16.mxu0 0
    %2275 = vmatmul.mubr.bf16.gmra.mrb[0].mxu0 %v2237
    %v2276 = vpop.f32.mrb[0].mxu0
    %v2277 = vadd.f32 0.0, %v2276
    %v2278 = vpop.f32.mrb[0].mxu0
    %v2279 = vpop.f32.mrb[0].mxu0
    %v2280 = vpop.f32.mrb[0].mxu0
    %2281 = vdwg.mxu0
    %2282 = vrot.lane.b32.xlu0 %v1739, 64
    %v2283 = vpop.permute.xlu0 %2282
    %v2285 = vsel %vm329, %v2227, 0
    %v2288 = vsel %vm820, %v2283, 0
    %2290 = vmatprep.subr.bf16.mxu0 0
    %2291 = vmatpush1.bf16.msra.mxu0 %v2288
    %2292 = vmatprep.subr.bf16.mxu0 0
    %2293 = vmatpush1.bf16.msra.mxu0 0
    %2294 = vmatprep.subr.bf16.mxu0 0
    %2295 = vmatpush1.bf16.msra.mxu0 0
    %2296 = vmatprep.subr.bf16.mxu0 0
    %2297 = vmatpush1.bf16.msra.mxu0 0
    %2298 = vmatprep.subr.bf16.mxu0 0
    %2299 = vmatpush1.bf16.msra.mxu0 0
    %2300 = vmatprep.subr.bf16.mxu0 0
    %2301 = vmatpush1.bf16.msra.mxu0 0
    %2302 = vmatprep.subr.bf16.mxu0 0
    %2303 = vmatpush1.bf16.msra.mxu0 0
    %2304 = vmatprep.subr.bf16.mxu0 0
    %2305 = vmatpush1.bf16.msra.mxu0 0
    %2306 = vmatprep.subr.bf16.mxu0 0
    %2307 = vmatpush1.bf16.msra.mxu0 0
    %2308 = vmatprep.subr.bf16.mxu0 0
    %2309 = vmatpush1.bf16.msra.mxu0 0
    %2310 = vmatprep.subr.bf16.mxu0 0
    %2311 = vmatpush1.bf16.msra.mxu0 0
    %2312 = vmatprep.subr.bf16.mxu0 0
    %2313 = vmatpush1.bf16.msra.mxu0 0
    %2314 = vmatprep.subr.bf16.mxu0 0
    %2315 = vmatpush1.bf16.msra.mxu0 0
    %2316 = vmatprep.subr.bf16.mxu0 0
    %2317 = vmatpush1.bf16.msra.mxu0 0
    %2318 = vmatprep.subr.bf16.mxu0 0
    %2319 = vmatpush1.bf16.msra.mxu0 0
    %2320 = vmatprep.subr.bf16.mxu0 0
    %2321 = vmatpush1.bf16.msra.mxu0 0
    %2322 = vmatprep.mubr.bf16.mxu0 0
    %2323 = vmatmul.mubr.bf16.gmra.mrb[0].mxu0 %v2285
    %v2324 = vpop.f32.mrb[0].mxu0
    %v2325 = vadd.f32 0.0, %v2324
    %v2326 = vpop.f32.mrb[0].mxu0
    %v2327 = vpop.f32.mrb[0].mxu0
    %v2328 = vpop.f32.mrb[0].mxu0
    %2329 = vdwg.mxu0
    %2330 = vrot.lane.b32.xlu0 %v1740, 64
    %v2331 = vpop.permute.xlu0 %2330
    %v2333 = vsel %vm329, %v2228, 0
    %v2336 = vsel %vm820, %v2331, 0
    %2338 = vmatprep.subr.bf16.mxu0 0
    %2339 = vmatpush1.bf16.msra.mxu0 %v2336
    %2340 = vmatprep.subr.bf16.mxu0 0
    %2341 = vmatpush1.bf16.msra.mxu0 0
    %2342 = vmatprep.subr.bf16.mxu0 0
    %2343 = vmatpush1.bf16.msra.mxu0 0
    %2344 = vmatprep.subr.bf16.mxu0 0
    %2345 = vmatpush1.bf16.msra.mxu0 0
    %2346 = vmatprep.subr.bf16.mxu0 0
    %2347 = vmatpush1.bf16.msra.mxu0 0
    %2348 = vmatprep.subr.bf16.mxu0 0
    %2349 = vmatpush1.bf16.msra.mxu0 0
    %2350 = vmatprep.subr.bf16.mxu0 0
    %2351 = vmatpush1.bf16.msra.mxu0 0
    %2352 = vmatprep.subr.bf16.mxu0 0
    %2353 = vmatpush1.bf16.msra.mxu0 0
    %2354 = vmatprep.subr.bf16.mxu0 0
    %2355 = vmatpush1.bf16.msra.mxu0 0
    %2356 = vmatprep.subr.bf16.mxu0 0
    %2357 = vmatpush1.bf16.msra.mxu0 0
    %2358 = vmatprep.subr.bf16.mxu0 0
    %2359 = vmatpush1.bf16.msra.mxu0 0
    %2360 = vmatprep.subr.bf16.mxu0 0
    %2361 = vmatpush1.bf16.msra.mxu0 0
    %2362 = vmatprep.subr.bf16.mxu0 0
    %2363 = vmatpush1.bf16.msra.mxu0 0
    %2364 = vmatprep.subr.bf16.mxu0 0
    %2365 = vmatpush1.bf16.msra.mxu0 0
    %2366 = vmatprep.subr.bf16.mxu0 0
    %2367 = vmatpush1.bf16.msra.mxu0 0
    %2368 = vmatprep.subr.bf16.mxu0 0
    %2369 = vmatpush1.bf16.msra.mxu0 0
    %2370 = vmatprep.mubr.bf16.mxu0 0
    %2371 = vmatmul.mubr.bf16.gmra.mrb[0].mxu0 %v2333
    %v2372 = vpop.f32.mrb[0].mxu0
    %v2373 = vadd.f32 0.0, %v2372
    %v2374 = vpop.f32.mrb[0].mxu0
    %v2375 = vpop.f32.mrb[0].mxu0
    %v2376 = vpop.f32.mrb[0].mxu0
    %2377 = vdwg.mxu0
    %2378 = vrot.lane.b32.xlu0 %v1741, 64
    %v2379 = vpop.permute.xlu0 %2378
    %v2381 = vsel %vm329, %v2229, 0
    %v2384 = vsel %vm820, %v2379, 0
    %2386 = vmatprep.subr.bf16.mxu0 0
    %2387 = vmatpush1.bf16.msra.mxu0 %v2384
    %2388 = vmatprep.subr.bf16.mxu0 0
    %2389 = vmatpush1.bf16.msra.mxu0 0
    %2390 = vmatprep.subr.bf16.mxu0 0
    %2391 = vmatpush1.bf16.msra.mxu0 0
    %2392 = vmatprep.subr.bf16.mxu0 0
    %2393 = vmatpush1.bf16.msra.mxu0 0
    %2394 = vmatprep.subr.bf16.mxu0 0
    %2395 = vmatpush1.bf16.msra.mxu0 0
    %2396 = vmatprep.subr.bf16.mxu0 0
    %2397 = vmatpush1.bf16.msra.mxu0 0
    %2398 = vmatprep.subr.bf16.mxu0 0
    %2399 = vmatpush1.bf16.msra.mxu0 0
    %2400 = vmatprep.subr.bf16.mxu0 0
    %2401 = vmatpush1.bf16.msra.mxu0 0
    %2402 = vmatprep.subr.bf16.mxu0 0
    %2403 = vmatpush1.bf16.msra.mxu0 0
    %2404 = vmatprep.subr.bf16.mxu0 0
    %2405 = vmatpush1.bf16.msra.mxu0 0
    %2406 = vmatprep.subr.bf16.mxu0 0
    %2407 = vmatpush1.bf16.msra.mxu0 0
    %2408 = vmatprep.subr.bf16.mxu0 0
    %2409 = vmatpush1.bf16.msra.mxu0 0
    %2410 = vmatprep.subr.bf16.mxu0 0
    %2411 = vmatpush1.bf16.msra.mxu0 0
    %2412 = vmatprep.subr.bf16.mxu0 0
    %2413 = vmatpush1.bf16.msra.mxu0 0
    %2414 = vmatprep.subr.bf16.mxu0 0
    %2415 = vmatpush1.bf16.msra.mxu0 0
    %2416 = vmatprep.subr.bf16.mxu0 0
    %2417 = vmatpush1.bf16.msra.mxu0 0
    %2418 = vmatprep.mubr.bf16.mxu0 0
    %2419 = vmatmul.mubr.bf16.gmra.mrb[0].mxu0 %v2381
    %v2420 = vpop.f32.mrb[0].mxu0
    %v2421 = vadd.f32 0.0, %v2420
    %v2422 = vpop.f32.mrb[0].mxu0
    %v2423 = vpop.f32.mrb[0].mxu0
    %v2424 = vpop.f32.mrb[0].mxu0
    %2425 = vdwg.mxu0
    %2426 = vrot.lane.b32.xlu0 %v1742, 64
    %v2427 = vpop.permute.xlu0 %2426
    %v2429 = vsel %vm329, %v2230, 0
    %v2432 = vsel %vm820, %v2427, 0
    %2434 = vmatprep.subr.bf16.mxu0 0
    %2435 = vmatpush1.bf16.msra.mxu0 %v2432
    %2436 = vmatprep.subr.bf16.mxu0 0
    %2437 = vmatpush1.bf16.msra.mxu0 0
    %2438 = vmatprep.subr.bf16.mxu0 0
    %2439 = vmatpush1.bf16.msra.mxu0 0
    %2440 = vmatprep.subr.bf16.mxu0 0
    %2441 = vmatpush1.bf16.msra.mxu0 0
    %2442 = vmatprep.subr.bf16.mxu0 0
    %2443 = vmatpush1.bf16.msra.mxu0 0
    %2444 = vmatprep.subr.bf16.mxu0 0
    %2445 = vmatpush1.bf16.msra.mxu0 0
    %2446 = vmatprep.subr.bf16.mxu0 0
    %2447 = vmatpush1.bf16.msra.mxu0 0
    %2448 = vmatprep.subr.bf16.mxu0 0
    %2449 = vmatpush1.bf16.msra.mxu0 0
    %2450 = vmatprep.subr.bf16.mxu0 0
    %2451 = vmatpush1.bf16.msra.mxu0 0
    %2452 = vmatprep.subr.bf16.mxu0 0
    %2453 = vmatpush1.bf16.msra.mxu0 0
    %2454 = vmatprep.subr.bf16.mxu0 0
    %2455 = vmatpush1.bf16.msra.mxu0 0
    %2456 = vmatprep.subr.bf16.mxu0 0
    %2457 = vmatpush1.bf16.msra.mxu0 0
    %2458 = vmatprep.subr.bf16.mxu0 0
    %2459 = vmatpush1.bf16.msra.mxu0 0
    %2460 = vmatprep.subr.bf16.mxu0 0
    %2461 = vmatpush1.bf16.msra.mxu0 0
    %2462 = vmatprep.subr.bf16.mxu0 0
    %2463 = vmatpush1.bf16.msra.mxu0 0
    %2464 = vmatprep.subr.bf16.mxu0 0
    %2465 = vmatpush1.bf16.msra.mxu0 0
    %2466 = vmatprep.mubr.bf16.mxu0 0
    %2467 = vmatmul.mubr.bf16.gmra.mrb[0].mxu0 %v2429
    %v2468 = vpop.f32.mrb[0].mxu0
    %v2469 = vadd.f32 0.0, %v2468
    %v2470 = vpop.f32.mrb[0].mxu0
    %v2471 = vpop.f32.mrb[0].mxu0
    %v2472 = vpop.f32.mrb[0].mxu0
    %2473 = vdwg.mxu0
    %2474 = vrot.lane.b32.xlu0 %v1743, 64
    %v2475 = vpop.permute.xlu0 %2474
    %v2477 = vsel %vm329, %v2231, 0
    %v2480 = vsel %vm820, %v2475, 0
    %2482 = vmatprep.subr.bf16.mxu0 0
    %2483 = vmatpush1.bf16.msra.mxu0 %v2480
    %2484 = vmatprep.subr.bf16.mxu0 0
    %2485 = vmatpush1.bf16.msra.mxu0 0
    %2486 = vmatprep.subr.bf16.mxu0 0
    %2487 = vmatpush1.bf16.msra.mxu0 0
    %2488 = vmatprep.subr.bf16.mxu0 0
    %2489 = vmatpush1.bf16.msra.mxu0 0
    %2490 = vmatprep.subr.bf16.mxu0 0
    %2491 = vmatpush1.bf16.msra.mxu0 0
    %2492 = vmatprep.subr.bf16.mxu0 0
    %2493 = vmatpush1.bf16.msra.mxu0 0
    %2494 = vmatprep.subr.bf16.mxu0 0
    %2495 = vmatpush1.bf16.msra.mxu0 0
    %2496 = vmatprep.subr.bf16.mxu0 0
    %2497 = vmatpush1.bf16.msra.mxu0 0
    %2498 = vmatprep.subr.bf16.mxu0 0
    %2499 = vmatpush1.bf16.msra.mxu0 0
    %2500 = vmatprep.subr.bf16.mxu0 0
    %2501 = vmatpush1.bf16.msra.mxu0 0
    %2502 = vmatprep.subr.bf16.mxu0 0
    %2503 = vmatpush1.bf16.msra.mxu0 0
    %2504 = vmatprep.subr.bf16.mxu0 0
    %2505 = vmatpush1.bf16.msra.mxu0 0
    %2506 = vmatprep.subr.bf16.mxu0 0
    %2507 = vmatpush1.bf16.msra.mxu0 0
    %2508 = vmatprep.subr.bf16.mxu0 0
    %2509 = vmatpush1.bf16.msra.mxu0 0
    %2510 = vmatprep.subr.bf16.mxu0 0
    %2511 = vmatpush1.bf16.msra.mxu0 0
    %2512 = vmatprep.subr.bf16.mxu0 0
    %2513 = vmatpush1.bf16.msra.mxu0 0
    %2514 = vmatprep.mubr.bf16.mxu0 0
    %2515 = vmatmul.mubr.bf16.gmra.mrb[0].mxu0 %v2477
    %v2516 = vpop.f32.mrb[0].mxu0
    %v2517 = vadd.f32 0.0, %v2516
    %v2518 = vpop.f32.mrb[0].mxu0
    %v2519 = vpop.f32.mrb[0].mxu0
    %v2520 = vpop.f32.mrb[0].mxu0
    %2521 = vdwg.mxu0
    %2522 = vrot.lane.b32.xlu0 %v1744, 64
    %v2523 = vpop.permute.xlu0 %2522
    %v2525 = vsel %vm329, %v2232, 0
    %v2528 = vsel %vm820, %v2523, 0
    %2530 = vmatprep.subr.bf16.mxu0 0
    %2531 = vmatpush1.bf16.msra.mxu0 %v2528
    %2532 = vmatprep.subr.bf16.mxu0 0
    %2533 = vmatpush1.bf16.msra.mxu0 0
    %2534 = vmatprep.subr.bf16.mxu0 0
    %2535 = vmatpush1.bf16.msra.mxu0 0
    %2536 = vmatprep.subr.bf16.mxu0 0
    %2537 = vmatpush1.bf16.msra.mxu0 0
    %2538 = vmatprep.subr.bf16.mxu0 0
    %2539 = vmatpush1.bf16.msra.mxu0 0
    %2540 = vmatprep.subr.bf16.mxu0 0
    %2541 = vmatpush1.bf16.msra.mxu0 0
    %2542 = vmatprep.subr.bf16.mxu0 0
    %2543 = vmatpush1.bf16.msra.mxu0 0
    %2544 = vmatprep.subr.bf16.mxu0 0
    %2545 = vmatpush1.bf16.msra.mxu0 0
    %2546 = vmatprep.subr.bf16.mxu0 0
    %2547 = vmatpush1.bf16.msra.mxu0 0
    %2548 = vmatprep.subr.bf16.mxu0 0
    %2549 = vmatpush1.bf16.msra.mxu0 0
    %2550 = vmatprep.subr.bf16.mxu0 0
    %2551 = vmatpush1.bf16.msra.mxu0 0
    %2552 = vmatprep.subr.bf16.mxu0 0
    %2553 = vmatpush1.bf16.msra.mxu0 0
    %2554 = vmatprep.subr.bf16.mxu0 0
    %2555 = vmatpush1.bf16.msra.mxu0 0
    %2556 = vmatprep.subr.bf16.mxu0 0
    %2557 = vmatpush1.bf16.msra.mxu0 0
    %2558 = vmatprep.subr.bf16.mxu0 0
    %2559 = vmatpush1.bf16.msra.mxu0 0
    %2560 = vmatprep.subr.bf16.mxu0 0
    %2561 = vmatpush1.bf16.msra.mxu0 0
    %2562 = vmatprep.mubr.bf16.mxu0 0
    %2563 = vmatmul.mubr.bf16.gmra.mrb[0].mxu0 %v2525
    %v2564 = vpop.f32.mrb[0].mxu0
    %v2565 = vadd.f32 0.0, %v2564
    %v2566 = vpop.f32.mrb[0].mxu0
    %v2567 = vpop.f32.mrb[0].mxu0
    %v2568 = vpop.f32.mrb[0].mxu0
    %2569 = vdwg.mxu0
    %2570 = vrot.lane.b32.xlu0 %v1745, 64
    %v2571 = vpop.permute.xlu0 %2570
    %v2573 = vsel %vm329, %v2233, 0
    %v2576 = vsel %vm820, %v2571, 0
    %2578 = vmatprep.subr.bf16.mxu0 0
    %2579 = vmatpush1.bf16.msra.mxu0 %v2576
    %2580 = vmatprep.subr.bf16.mxu0 0
    %2581 = vmatpush1.bf16.msra.mxu0 0
    %2582 = vmatprep.subr.bf16.mxu0 0
    %2583 = vmatpush1.bf16.msra.mxu0 0
    %2584 = vmatprep.subr.bf16.mxu0 0
    %2585 = vmatpush1.bf16.msra.mxu0 0
    %2586 = vmatprep.subr.bf16.mxu0 0
    %2587 = vmatpush1.bf16.msra.mxu0 0
    %2588 = vmatprep.subr.bf16.mxu0 0
    %2589 = vmatpush1.bf16.msra.mxu0 0
    %2590 = vmatprep.subr.bf16.mxu0 0
    %2591 = vmatpush1.bf16.msra.mxu0 0
    %2592 = vmatprep.subr.bf16.mxu0 0
    %2593 = vmatpush1.bf16.msra.mxu0 0
    %2594 = vmatprep.subr.bf16.mxu0 0
    %2595 = vmatpush1.bf16.msra.mxu0 0
    %2596 = vmatprep.subr.bf16.mxu0 0
    %2597 = vmatpush1.bf16.msra.mxu0 0
    %2598 = vmatprep.subr.bf16.mxu0 0
    %2599 = vmatpush1.bf16.msra.mxu0 0
    %2600 = vmatprep.subr.bf16.mxu0 0
    %2601 = vmatpush1.bf16.msra.mxu0 0
    %2602 = vmatprep.subr.bf16.mxu0 0
    %2603 = vmatpush1.bf16.msra.mxu0 0
    %2604 = vmatprep.subr.bf16.mxu0 0
    %2605 = vmatpush1.bf16.msra.mxu0 0
    %2606 = vmatprep.subr.bf16.mxu0 0
    %2607 = vmatpush1.bf16.msra.mxu0 0
    %2608 = vmatprep.subr.bf16.mxu0 0
    %2609 = vmatpush1.bf16.msra.mxu0 0
    %2610 = vmatprep.mubr.bf16.mxu0 0
    %2611 = vmatmul.mubr.bf16.gmra.mrb[0].mxu0 %v2573
    %v2612 = vpop.f32.mrb[0].mxu0
    %v2613 = vadd.f32 0.0, %v2612
    %v2614 = vpop.f32.mrb[0].mxu0
    %v2615 = vpop.f32.mrb[0].mxu0
    %v2616 = vpop.f32.mrb[0].mxu0
    %2617 = vdwg.mxu0
    %v2618 = vpack.c.bf16 %v2325, %v2277
    %v2619 = vpack.c.bf16 %v2421, %v2373
    %v2620 = vpack.c.b16 %v1667, %v1667
    %2621 = vrot.lane.b32.xlu0 %v2620, 32
    %v2622 = vpop.permute.xlu0 %2621
    %v2624 = vsel %vm329, %v2619, 0
    %v2627 = vsel %vm820, %v2622, 0
    %2629 = vmatprep.subr.bf16.mxu0 0
    %2630 = vmatpush1.bf16.msra.mxu0 %v2627
    %2631 = vmatprep.subr.bf16.mxu0 0
    %2632 = vmatpush1.bf16.msra.mxu0 0
    %2633 = vmatprep.subr.bf16.mxu0 0
    %2634 = vmatpush1.bf16.msra.mxu0 0
    %2635 = vmatprep.subr.bf16.mxu0 0
    %2636 = vmatpush1.bf16.msra.mxu0 0
    %2637 = vmatprep.subr.bf16.mxu0 0
    %2638 = vmatpush1.bf16.msra.mxu0 0
    %2639 = vmatprep.subr.bf16.mxu0 0
    %2640 = vmatpush1.bf16.msra.mxu0 0
    %2641 = vmatprep.subr.bf16.mxu0 0
    %2642 = vmatpush1.bf16.msra.mxu0 0
    %2643 = vmatprep.subr.bf16.mxu0 0
    %2644 = vmatpush1.bf16.msra.mxu0 0
    %2645 = vmatprep.subr.bf16.mxu0 0
    %2646 = vmatpush1.bf16.msra.mxu0 0
    %2647 = vmatprep.subr.bf16.mxu0 0
    %2648 = vmatpush1.bf16.msra.mxu0 0
    %2649 = vmatprep.subr.bf16.mxu0 0
    %2650 = vmatpush1.bf16.msra.mxu0 0
    %2651 = vmatprep.subr.bf16.mxu0 0
    %2652 = vmatpush1.bf16.msra.mxu0 0
    %2653 = vmatprep.subr.bf16.mxu0 0
    %2654 = vmatpush1.bf16.msra.mxu0 0
    %2655 = vmatprep.subr.bf16.mxu0 0
    %2656 = vmatpush1.bf16.msra.mxu0 0
    %2657 = vmatprep.subr.bf16.mxu0 0
    %2658 = vmatpush1.bf16.msra.mxu0 0
    %2659 = vmatprep.subr.bf16.mxu0 0
    %2660 = vmatpush1.bf16.msra.mxu0 0
    %2661 = vmatprep.mubr.bf16.mxu0 0
    %2662 = vmatmul.mubr.bf16.gmra.mrb[0].mxu0 %v2624
    %v2663 = vpop.f32.mrb[0].mxu0
    %v2664 = vadd.f32 0.0, %v2663
    %v2665 = vpop.f32.mrb[0].mxu0
    %v2666 = vpop.f32.mrb[0].mxu0
    %v2667 = vadd.f32 0.0, %v2666
    %v2668 = vpop.f32.mrb[0].mxu0
    %2669 = vdwg.mxu0
    %v2670 = vpack.c.b16 %v1666, %v1666
    %2671 = vrot.lane.b32.xlu0 %v2670, 32
    %v2672 = vpop.permute.xlu0 %2671
    %v2674 = vsel %vm329, %v2618, 0
    %v2677 = vsel %vm820, %v2672, 0
    %2679 = vmatprep.subr.bf16.mxu0 0
    %2680 = vmatpush1.bf16.msra.mxu0 %v2677
    %2681 = vmatprep.subr.bf16.mxu0 0
    %2682 = vmatpush1.bf16.msra.mxu0 0
    %2683 = vmatprep.subr.bf16.mxu0 0
    %2684 = vmatpush1.bf16.msra.mxu0 0
    %2685 = vmatprep.subr.bf16.mxu0 0
    %2686 = vmatpush1.bf16.msra.mxu0 0
    %2687 = vmatprep.subr.bf16.mxu0 0
    %2688 = vmatpush1.bf16.msra.mxu0 0
    %2689 = vmatprep.subr.bf16.mxu0 0
    %2690 = vmatpush1.bf16.msra.mxu0 0
    %2691 = vmatprep.subr.bf16.mxu0 0
    %2692 = vmatpush1.bf16.msra.mxu0 0
    %2693 = vmatprep.subr.bf16.mxu0 0
    %2694 = vmatpush1.bf16.msra.mxu0 0
    %2695 = vmatprep.subr.bf16.mxu0 0
    %2696 = vmatpush1.bf16.msra.mxu0 0
    %2697 = vmatprep.subr.bf16.mxu0 0
    %2698 = vmatpush1.bf16.msra.mxu0 0
    %2699 = vmatprep.subr.bf16.mxu0 0
    %2700 = vmatpush1.bf16.msra.mxu0 0
    %2701 = vmatprep.subr.bf16.mxu0 0
    %2702 = vmatpush1.bf16.msra.mxu0 0
    %2703 = vmatprep.subr.bf16.mxu0 0
    %2704 = vmatpush1.bf16.msra.mxu0 0
    %2705 = vmatprep.subr.bf16.mxu0 0
    %2706 = vmatpush1.bf16.msra.mxu0 0
    %2707 = vmatprep.subr.bf16.mxu0 0
    %2708 = vmatpush1.bf16.msra.mxu0 0
    %2709 = vmatprep.subr.bf16.mxu0 0
    %2710 = vmatpush1.bf16.msra.mxu0 0
    %2711 = vmatprep.mubr.bf16.mxu0 0
    %2712 = vmatmul.mubr.bf16.gmra.mrb[0].mxu0 %v2674
    %v2713 = vpop.f32.mrb[0].mxu0
    %v2714 = vadd.f32 %v2664, %v2713
    %v2715 = vpop.f32.mrb[0].mxu0
    %v2716 = vpop.f32.mrb[0].mxu0
    %v2717 = vadd.f32 %v2667, %v2716
    %v2718 = vpop.f32.mrb[0].mxu0
    %2719 = vdwg.mxu0
    %v2720 = vpack.c.bf16 %v2517, %v2469
    %v2721 = vpack.c.b16 %v1668, %v1668
    %2722 = vrot.lane.b32.xlu0 %v2721, 32
    %v2723 = vpop.permute.xlu0 %2722
    %v2725 = vsel %vm329, %v2720, 0
    %v2728 = vsel %vm820, %v2723, 0
    %2730 = vmatprep.subr.bf16.mxu0 0
    %2731 = vmatpush1.bf16.msra.mxu0 %v2728
    %2732 = vmatprep.subr.bf16.mxu0 0
    %2733 = vmatpush1.bf16.msra.mxu0 0
    %2734 = vmatprep.subr.bf16.mxu0 0
    %2735 = vmatpush1.bf16.msra.mxu0 0
    %2736 = vmatprep.subr.bf16.mxu0 0
    %2737 = vmatpush1.bf16.msra.mxu0 0
    %2738 = vmatprep.subr.bf16.mxu0 0
    %2739 = vmatpush1.bf16.msra.mxu0 0
    %2740 = vmatprep.subr.bf16.mxu0 0
    %2741 = vmatpush1.bf16.msra.mxu0 0
    %2742 = vmatprep.subr.bf16.mxu0 0
    %2743 = vmatpush1.bf16.msra.mxu0 0
    %2744 = vmatprep.subr.bf16.mxu0 0
    %2745 = vmatpush1.bf16.msra.mxu0 0
    %2746 = vmatprep.subr.bf16.mxu0 0
    %2747 = vmatpush1.bf16.msra.mxu0 0
    %2748 = vmatprep.subr.bf16.mxu0 0
    %2749 = vmatpush1.bf16.msra.mxu0 0
    %2750 = vmatprep.subr.bf16.mxu0 0
    %2751 = vmatpush1.bf16.msra.mxu0 0
    %2752 = vmatprep.subr.bf16.mxu0 0
    %2753 = vmatpush1.bf16.msra.mxu0 0
    %2754 = vmatprep.subr.bf16.mxu0 0
    %2755 = vmatpush1.bf16.msra.mxu0 0
    %2756 = vmatprep.subr.bf16.mxu0 0
    %2757 = vmatpush1.bf16.msra.mxu0 0
    %2758 = vmatprep.subr.bf16.mxu0 0
    %2759 = vmatpush1.bf16.msra.mxu0 0
    %2760 = vmatprep.subr.bf16.mxu0 0
    %2761 = vmatpush1.bf16.msra.mxu0 0
    %2762 = vmatprep.mubr.bf16.mxu0 0
    %2763 = vmatmul.mubr.bf16.gmra.mrb[0].mxu0 %v2725
    %v2764 = vpop.f32.mrb[0].mxu0
    %v2765 = vadd.f32 0.0, %v2764
    %v2766 = vpop.f32.mrb[0].mxu0
    %v2767 = vpop.f32.mrb[0].mxu0
    %v2768 = vadd.f32 0.0, %v2767
    %v2769 = vpop.f32.mrb[0].mxu0
    %2770 = vdwg.mxu0
    %v2771 = vadd.f32 %v2714, %v2765
    %v2772 = vadd.f32 %v2717, %v2768
    %v2773 = vpack.c.bf16 %v2613, %v2565
    %v2774 = vpack.c.b16 %v1669, %v1669
    %2775 = vrot.lane.b32.xlu0 %v2774, 32
    %v2776 = vpop.permute.xlu0 %2775
    %v2778 = vsel %vm329, %v2773, 0
    %v2781 = vsel %vm820, %v2776, 0
    %2783 = vmatprep.subr.bf16.mxu0 0
    %2784 = vmatpush1.bf16.msra.mxu0 %v2781
    %2785 = vmatprep.subr.bf16.mxu0 0
    %2786 = vmatpush1.bf16.msra.mxu0 0
    %2787 = vmatprep.subr.bf16.mxu0 0
    %2788 = vmatpush1.bf16.msra.mxu0 0
    %2789 = vmatprep.subr.bf16.mxu0 0
    %2790 = vmatpush1.bf16.msra.mxu0 0
    %2791 = vmatprep.subr.bf16.mxu0 0
    %2792 = vmatpush1.bf16.msra.mxu0 0
    %2793 = vmatprep.subr.bf16.mxu0 0
    %2794 = vmatpush1.bf16.msra.mxu0 0
    %2795 = vmatprep.subr.bf16.mxu0 0
    %2796 = vmatpush1.bf16.msra.mxu0 0
    %2797 = vmatprep.subr.bf16.mxu0 0
    %2798 = vmatpush1.bf16.msra.mxu0 0
    %2799 = vmatprep.subr.bf16.mxu0 0
    %2800 = vmatpush1.bf16.msra.mxu0 0
    %2801 = vmatprep.subr.bf16.mxu0 0
    %2802 = vmatpush1.bf16.msra.mxu0 0
    %2803 = vmatprep.subr.bf16.mxu0 0
    %2804 = vmatpush1.bf16.msra.mxu0 0
    %2805 = vmatprep.subr.bf16.mxu0 0
    %2806 = vmatpush1.bf16.msra.mxu0 0
    %2807 = vmatprep.subr.bf16.mxu0 0
    %2808 = vmatpush1.bf16.msra.mxu0 0
    %2809 = vmatprep.subr.bf16.mxu0 0
    %2810 = vmatpush1.bf16.msra.mxu0 0
    %2811 = vmatprep.subr.bf16.mxu0 0
    %2812 = vmatpush1.bf16.msra.mxu0 0
    %2813 = vmatprep.subr.bf16.mxu0 0
    %2814 = vmatpush1.bf16.msra.mxu0 0
    %2815 = vmatprep.mubr.bf16.mxu0 0
    %2816 = vmatmul.mubr.bf16.gmra.mrb[0].mxu0 %v2778
    %v2817 = vpop.f32.mrb[0].mxu0
    %v2818 = vadd.f32 0.0, %v2817
    %v2819 = vpop.f32.mrb[0].mxu0
    %v2820 = vpop.f32.mrb[0].mxu0
    %v2821 = vadd.f32 0.0, %v2820
    %v2822 = vpop.f32.mrb[0].mxu0
    %2823 = vdwg.mxu0
    %v2824 = vadd.f32 %v2771, %v2818
    %v2825 = vadd.f32 %v2772, %v2821
    %v2826 = vlaneseq
    %v2827 = vshrl.u32 %v2826, 7
    %v2828 = vsub.s32 0, %v2827
    %v2829 = vrot.slane %v32, %v2828
    %v2830 = vadd.f32 %v2824, %v2829
    %v2831 = vadd.f32 %v2825, %v2829
    %v2832 = vadd.f32 %v1641, %v2830
    %v2833 = vadd.f32 %v1642, %v2831
    %v2834 = vsel %vm149, %v2832, 0.0
    %2835 = vadd.xlane.f32.xlu0 %v2834
    %v2836 = vpop.xlane.xlu0 %2835
    %v2837 = vsel %vm149, %v2833, 0.0
    %2838 = vadd.xlane.f32.xlu0 %v2837
    %v2839 = vpop.xlane.xlu0 %2838
    %v2840 = vmul.f32 %v2836, %v156
    %v2841 = vmul.f32 %v2839, %v156
    %v2842 = vsub.f32 %v2832, %v2840
    %v2843 = vsub.f32 %v2833, %v2841
    %v2844 = vmul.f32 %v2842, %v2842
    %v2845 = vmul.f32 %v2843, %v2843
    %v2846 = vsel %vm149, %v2844, 0.0
    %2847 = vadd.xlane.f32.xlu0 %v2846
    %v2848 = vpop.xlane.xlu0 %2847
    %v2849 = vsel %vm149, %v2845, 0.0
    %2850 = vadd.xlane.f32.xlu0 %v2849
    %v2851 = vpop.xlane.xlu0 %2850
    %v2852 = vmul.f32 %v2848, %v156
    %v2853 = vmul.f32 %v2851, %v156
    %v2854 = vadd.f32 %v2852, 1e-12
    %v2855 = vadd.f32 %v2853, 1e-12
    %v2856 = vrsqrt.pop %v2854
    %v2857 = vrsqrt.pop %v2855
    %v2858 = vmul.f32 %v2842, %v2856
    %v2859 = vmul.f32 %v2843, %v2857
    %v2860 = vlaneseq
    %v2861 = vshrl.u32 %v2860, 7
    %v2862 = vsub.s32 1, %v2861
    %v2863 = vrot.slane %v32, %v2862
    %v2864 = vmul.f32 %v2858, %v2863
    %v2865 = vmul.f32 %v2859, %v2863
    %v2866 = vlaneseq
    %v2867 = vshrl.u32 %v2866, 7
    %v2868 = vsub.s32 2, %v2867
    %v2869 = vrot.slane %v32, %v2868
    %v2870 = vadd.f32 %v2864, %v2869
    %v2871 = vadd.f32 %v2865, %v2869
    %v2872 = vpack.c.bf16 %v2871, %v2870
    %v2873 = vlaneseq
    %v2874 = vshrl.u32 %v2873, 7
    %v2875 = vsub.s32 3, %v2874
    %v2876 = vrot.slane %v33, %v2875
    %v2877 = vunpack.c.h.b16 %v1644
    %v2878 = vunpack.c.h.b16 %v1645
    %v2879 = vunpack.c.h.b16 %v1646
    %v2880 = vunpack.c.h.b16 %v1647
    %v2881 = vpack.c.b16 %v2878, %v2877
    %v2882 = vpack.c.b16 %v2880, %v2879
    %v2886 = vsel %vm149, %v2872, 0
    %2888 = vmatprep.subr.bf16.mxu0 0
    %2889 = vmatpush1.bf16.msra.mxu0 %v2881
    %2890 = vmatprep.subr.bf16.mxu0 0
    %2891 = vmatpush1.bf16.msra.mxu0 %v2882
    %2892 = vmatprep.subr.bf16.mxu0 0
    %2893 = vmatpush1.bf16.msra.mxu0 0
    %2894 = vmatprep.subr.bf16.mxu0 0
    %2895 = vmatpush1.bf16.msra.mxu0 0
    %2896 = vmatprep.subr.bf16.mxu0 0
    %2897 = vmatpush1.bf16.msra.mxu0 0
    %2898 = vmatprep.subr.bf16.mxu0 0
    %2899 = vmatpush1.bf16.msra.mxu0 0
    %2900 = vmatprep.subr.bf16.mxu0 0
    %2901 = vmatpush1.bf16.msra.mxu0 0
    %2902 = vmatprep.subr.bf16.mxu0 0
    %2903 = vmatpush1.bf16.msra.mxu0 0
    %2904 = vmatprep.subr.bf16.mxu0 0
    %2905 = vmatpush1.bf16.msra.mxu0 0
    %2906 = vmatprep.subr.bf16.mxu0 0
    %2907 = vmatpush1.bf16.msra.mxu0 0
    %2908 = vmatprep.subr.bf16.mxu0 0
    %2909 = vmatpush1.bf16.msra.mxu0 0
    %2910 = vmatprep.subr.bf16.mxu0 0
    %2911 = vmatpush1.bf16.msra.mxu0 0
    %2912 = vmatprep.subr.bf16.mxu0 0
    %2913 = vmatpush1.bf16.msra.mxu0 0
    %2914 = vmatprep.subr.bf16.mxu0 0
    %2915 = vmatpush1.bf16.msra.mxu0 0
    %2916 = vmatprep.subr.bf16.mxu0 0
    %2917 = vmatpush1.bf16.msra.mxu0 0
    %2918 = vmatprep.subr.bf16.mxu0 0
    %2919 = vmatpush1.bf16.msra.mxu0 0
    %2920 = vmatprep.mubr.bf16.mxu0 0
    %2921 = vmatmul.mubr.bf16.gmra.mrb[0].mxu0 %v2886
    %v2922 = vpop.f32.mrb[0].mxu0
    %v2923 = vadd.f32 %v2876, %v2922
    %v2924 = vpop.f32.mrb[0].mxu0
    %v2925 = vpop.f32.mrb[0].mxu0
    %v2926 = vadd.f32 %v2876, %v2925
    %v2927 = vpop.f32.mrb[0].mxu0
    %2928 = vdwg.mxu0
    %v2929 = vmul.f32 %v2923, %v2923
    %v2930 = vmul.f32 %v2926, %v2926
    %v2931 = vmul.f32 %v2923, %v2929
    %v2932 = vmul.f32 %v2926, %v2930
    %v2933 = vmul.f32 %v2931, 0.044715
    %v2934 = vmul.f32 %v2932, 0.044715
    %v2935 = vadd.f32 %v2923, %v2933
    %v2936 = vadd.f32 %v2926, %v2934
    %v2937 = vmul.f32 %v2935, 0.7978846
    %v2938 = vmul.f32 %v2936, 0.7978846
    %v2939 = vtanh.pop %v2937
    %v2940 = vtanh.pop %v2938
    %v2941 = vadd.f32 %v2939, 1.0
    %v2942 = vadd.f32 %v2940, 1.0
    %v2943 = vmul.f32 %v2941, 0.5
    %v2944 = vmul.f32 %v2942, 0.5
    %v2945 = vmul.f32 %v2923, %v2943
    %v2946 = vmul.f32 %v2926, %v2944
    %v2947 = vpack.c.bf16 %v2946, %v2945
    %v2948 = vlaneseq
    %v2949 = vshrl.u32 %v2948, 7
    %v2950 = vsub.s32 3, %v2949
    %v2951 = vrot.slane %v32, %v2950
    %v2960 = vunpack.c.l.b16 %v1649
    %v2961 = vunpack.c.l.b16 %v1650
    %v2962 = vunpack.c.l.b16 %v1651
    %v2963 = vunpack.c.l.b16 %v1652
    %v2964 = vunpack.c.l.b16 %v1653
    %v2965 = vunpack.c.l.b16 %v1654
    %v2966 = vunpack.c.l.b16 %v1655
    %v2967 = vunpack.c.l.b16 %v1656
    %v2968 = vpack.c.b16 %v2961, %v2960
    %v2969 = vpack.c.b16 %v2963, %v2962
    %v2970 = vpack.c.b16 %v2965, %v2964
    %v2971 = vpack.c.b16 %v2967, %v2966
    %v2977 = vsel %vm1558, %v2947, 0
    %2979 = vmatprep.subr.bf16.mxu0 0
    %2980 = vmatpush1.bf16.msra.mxu0 %v2968
    %2981 = vmatprep.subr.bf16.mxu0 0
    %2982 = vmatpush1.bf16.msra.mxu0 %v2969
    %2983 = vmatprep.subr.bf16.mxu0 0
    %2984 = vmatpush1.bf16.msra.mxu0 %v2970
    %2985 = vmatprep.subr.bf16.mxu0 0
    %2986 = vmatpush1.bf16.msra.mxu0 %v2971
    %2987 = vmatprep.subr.bf16.mxu0 0
    %2988 = vmatpush1.bf16.msra.mxu0 0
    %2989 = vmatprep.subr.bf16.mxu0 0
    %2990 = vmatpush1.bf16.msra.mxu0 0
    %2991 = vmatprep.subr.bf16.mxu0 0
    %2992 = vmatpush1.bf16.msra.mxu0 0
    %2993 = vmatprep.subr.bf16.mxu0 0
    %2994 = vmatpush1.bf16.msra.mxu0 0
    %2995 = vmatprep.subr.bf16.mxu0 0
    %2996 = vmatpush1.bf16.msra.mxu0 0
    %2997 = vmatprep.subr.bf16.mxu0 0
    %2998 = vmatpush1.bf16.msra.mxu0 0
    %2999 = vmatprep.subr.bf16.mxu0 0
    %3000 = vmatpush1.bf16.msra.mxu0 0
    %3001 = vmatprep.subr.bf16.mxu0 0
    %3002 = vmatpush1.bf16.msra.mxu0 0
    %3003 = vmatprep.subr.bf16.mxu0 0
    %3004 = vmatpush1.bf16.msra.mxu0 0
    %3005 = vmatprep.subr.bf16.mxu0 0
    %3006 = vmatpush1.bf16.msra.mxu0 0
    %3007 = vmatprep.subr.bf16.mxu0 0
    %3008 = vmatpush1.bf16.msra.mxu0 0
    %3009 = vmatprep.subr.bf16.mxu0 0
    %3010 = vmatpush1.bf16.msra.mxu0 0
    %3011 = vmatprep.mubr.bf16.mxu0 0
    %3012 = vmatmul.mubr.bf16.gmra.mrb[0].mxu0 %v2977
    %v3013 = vpop.f32.mrb[0].mxu0
    %v3014 = vadd.f32 %v2951, %v3013
    %v3015 = vpop.f32.mrb[0].mxu0
    %v3016 = vpop.f32.mrb[0].mxu0
    %v3017 = vadd.f32 %v2951, %v3016
    %v3018 = vpop.f32.mrb[0].mxu0
    %3019 = vdwg.mxu0
    %v3020 = vadd.f32 %v2870, %v3014
    %v3021 = vadd.f32 %v2871, %v3017
    %v3022 = vsel %vm149, %v3020, 0.0
    %3023 = vadd.xlane.f32.xlu0 %v3022
    %v3024 = vpop.xlane.xlu0 %3023
    %v3025 = vsel %vm149, %v3021, 0.0
    %3026 = vadd.xlane.f32.xlu0 %v3025
    %v3027 = vpop.xlane.xlu0 %3026
    %v3028 = vmul.f32 %v3024, %v156
    %v3029 = vmul.f32 %v3027, %v156
    %v3030 = vsub.f32 %v3020, %v3028
    %v3031 = vsub.f32 %v3021, %v3029
    %v3032 = vmul.f32 %v3030, %v3030
    %v3033 = vmul.f32 %v3031, %v3031
    %v3034 = vsel %vm149, %v3032, 0.0
    %3035 = vadd.xlane.f32.xlu0 %v3034
    %v3036 = vpop.xlane.xlu0 %3035
    %v3037 = vsel %vm149, %v3033, 0.0
    %3038 = vadd.xlane.f32.xlu0 %v3037
    %v3039 = vpop.xlane.xlu0 %3038
    %v3040 = vmul.f32 %v3036, %v156
    %v3041 = vmul.f32 %v3039, %v156
    %v3042 = vadd.f32 %v3040, 1e-12
    %v3043 = vadd.f32 %v3041, 1e-12
    %v3044 = vrsqrt.pop %v3042
    %v3045 = vrsqrt.pop %v3043
    %v3046 = vmul.f32 %v3030, %v3044
    %v3047 = vmul.f32 %v3031, %v3045
    %v3048 = vlaneseq
    %v3049 = vshrl.u32 %v3048, 7
    %v3050 = vsub.s32 4, %v3049
    %v3051 = vrot.slane %v32, %v3050
    %v3052 = vmul.f32 %v3046, %v3051
    %v3053 = vmul.f32 %v3047, %v3051
    %v3054 = vlaneseq
    %v3055 = vshrl.u32 %v3054, 7
    %v3056 = vsub.s32 5, %v3055
    %v3057 = vrot.slane %v32, %v3056
    %v3058 = vadd.f32 %v3052, %v3057
    %v3059 = vadd.f32 %v3053, %v3057
    %v3060 = vld [vmem:[%s7] sm:$0xff]
    %v3061 = vld [vmem:[%s7 + $0x8] sm:$0xff]
    %v3062 = vld [vmem:[%s7 + $0x10] sm:$0xff]
    %v3063 = vld [vmem:[%s7 + $0x18] sm:$0xff]
    %v3064 = vld [vmem:[%s7 + $0x20] sm:$0x1]
    %v3065 = vlaneseq
    %v3066 = vshrl.u32 %v3065, 7
    %v3067 = vsub.s32 0, %v3066
    %v3068 = vrot.slane %v3064, %v3067
    %v3071 = vrot.slane %v3059, 7
    %vm3072 = vcmask 1041409
    %v3073 = vsel %vm3072, %v3071, %v3058
    %v3074 = vsel %vm149, %v3073, 0
    %3076 = vmatprep.subr.mxu0 0.0
    %3077 = vmatpush1.msra.mxu0 %v3060
    %3078 = vmatprep.subr.mxu0 0.0
    %3079 = vmatpush1.msra.mxu0 %v3061
    %3080 = vmatprep.subr.mxu0 0.0
    %3081 = vmatpush1.msra.mxu0 %v3062
    %3082 = vmatprep.subr.mxu0 0.0
    %3083 = vmatpush1.msra.mxu0 %v3063
    %3084 = vmatprep.subr.mxu0 0.0
    %3085 = vmatpush1.msra.mxu0 0.0
    %3086 = vmatprep.subr.mxu0 0.0
    %3087 = vmatpush1.msra.mxu0 0.0
    %3088 = vmatprep.subr.mxu0 0.0
    %3089 = vmatpush1.msra.mxu0 0.0
    %3090 = vmatprep.subr.mxu0 0.0
    %3091 = vmatpush1.msra.mxu0 0.0
    %3092 = vmatprep.subr.mxu0 0.0
    %3093 = vmatpush1.msra.mxu0 0.0
    %3094 = vmatprep.subr.mxu0 0.0
    %3095 = vmatpush1.msra.mxu0 0.0
    %3096 = vmatprep.subr.mxu0 0.0
    %3097 = vmatpush1.msra.mxu0 0.0
    %3098 = vmatprep.subr.mxu0 0.0
    %3099 = vmatpush1.msra.mxu0 0.0
    %3100 = vmatprep.subr.mxu0 0.0
    %3101 = vmatpush1.msra.mxu0 0.0
    %3102 = vmatprep.subr.mxu0 0.0
    %3103 = vmatpush1.msra.mxu0 0.0
    %3104 = vmatprep.subr.mxu0 0.0
    %3105 = vmatpush1.msra.mxu0 0.0
    %3106 = vmatprep.subr.mxu0 0.0
    %3107 = vmatpush1.msra.mxu0 0.0
    %3108 = vmatprep.subr.mxu0 0.0
    %3109 = vmatpush1.msra.mxu0 0.0
    %3110 = vmatprep.subr.mxu0 0.0
    %3111 = vmatpush1.msra.mxu0 0.0
    %3112 = vmatprep.subr.mxu0 0.0
    %3113 = vmatpush1.msra.mxu0 0.0
    %3114 = vmatprep.subr.mxu0 0.0
    %3115 = vmatpush1.msra.mxu0 0.0
    %3116 = vmatprep.subr.mxu0 0.0
    %3117 = vmatpush1.msra.mxu0 0.0
    %3118 = vmatprep.subr.mxu0 0.0
    %3119 = vmatpush1.msra.mxu0 0.0
    %3120 = vmatprep.subr.mxu0 0.0
    %3121 = vmatpush1.msra.mxu0 0.0
    %3122 = vmatprep.subr.mxu0 0.0
    %3123 = vmatpush1.msra.mxu0 0.0
    %3124 = vmatprep.subr.mxu0 0.0
    %3125 = vmatpush1.msra.mxu0 0.0
    %3126 = vmatprep.subr.mxu0 0.0
    %3127 = vmatpush1.msra.mxu0 0.0
    %3128 = vmatprep.subr.mxu0 0.0
    %3129 = vmatpush1.msra.mxu0 0.0
    %3130 = vmatprep.subr.mxu0 0.0
    %3131 = vmatpush1.msra.mxu0 0.0
    %3132 = vmatprep.subr.mxu0 0.0
    %3133 = vmatpush1.msra.mxu0 0.0
    %3134 = vmatprep.subr.mxu0 0.0
    %3135 = vmatpush1.msra.mxu0 0.0
    %3136 = vmatprep.subr.mxu0 0.0
    %3137 = vmatpush1.msra.mxu0 0.0
    %3138 = vmatprep.subr.mxu0 0.0
    %3139 = vmatpush1.msra.mxu0 0.0
    %3140 = vmatprep.mubr.f32.mxu0 0.0
    %3141 = vmatmul.mubr.f32.gmra.mrb[0].mxu0 %v3074
    %v3142 = vpop.f32.mrb[0].mxu0
    %v3143 = vadd.f32 %v3068, %v3142
    %v3144 = vpop.f32.mrb[0].mxu0
    %3145 = vdwg.mxu0
    %3146 = vst [vmem:[#allocation2] sm:$0x3] %v3143
    // Predicated region
    $region34: #{bert_for_multilabel_forward.1} parent=1 // pred_check
      _
    $region35: #{bert_for_multilabel_forward.1} parent=1 // pred_check_branch
      %3148 = sbr.rel (0) target = $region37
    $region36: #{bert_for_multilabel_forward.1} parent=1 // pred_region
      %s3150 = ssub.s32 32, 32
      %3151 = vsyncadd [#allocation3], %s3150
      %s3153 = sshll.u32 [#allocation2], 4
      %s3154 = int_to_ptr.vmem [resolvable:$true] %s3153
      %3156 = dma.vmem_to_hbm [thread:$0]  %s3154, 32, %s8, [#allocation3]
    $region37: #{bert_for_multilabel_forward.1} parent=1 // pred_fallthru
      _
    // Predicated region
    $region38: #{bert_for_multilabel_forward.1} parent=1 // pred_check
      _
    $region39: #{bert_for_multilabel_forward.1} parent=1 // pred_check_branch
      %3158 = sbr.rel (0) target = $region41
    $region40: #{bert_for_multilabel_forward.1} parent=1 // pred_region
      %3159 = dma.done [#allocation3], 32
    $region41: #{bert_for_multilabel_forward.1} parent=1 // pred_fallthru
      _
    %3160 = vsyncpa [#allocation3], 1

</llo_original>
